<compile_context>
chip_gen: v7x
topology: tpu7x:2x2x1
jax: 0.10.0
libtpu: 0.0.40
codegen_flags: <defaults>
</compile_context>

<pallas_src>
import functools

import numpy as np
import jax
import jax.numpy as jnp
from jax.experimental import pallas as pl
from jax.experimental.pallas import tpu as pltpu

_NEG_INF = -1e30


def _shear_rows(x, base_shift):
    """out[i, j] = x[i, (j - i - base_shift) mod K].

    Per-row circular shift with a row-linear amount (the Transformer-XL
    rel_shift "shear"): one constant roll plus a binary decomposition of the
    row index, using only static jnp.roll (slice+concat) and selects so it
    lowers both under Mosaic and in interpret mode.
    """
    q, k = x.shape
    c = base_shift % k
    out = jnp.roll(x, c, axis=1) if c else x
    if q > 1:
        row = jax.lax.broadcasted_iota(jnp.int32, (q, 1), 0)
        for b in range((q - 1).bit_length()):
            rolled = jnp.roll(out, 1 << b, axis=1)
            out = jnp.where(((row >> b) & 1) == 1, rolled, out)
    return out


def _rel_mha_kernel(w_ref, wqkv_ref, wo_ref, rwb_ref, remb_ref, rbias_ref,
                    mbias_ref, gamma_ref, beta_ref, out_ref, acc_ref,
                    *, scale, n_head, d_head, base_shift, ln_eps,
                    compute_dtype):
    h = pl.program_id(1)

    @pl.when(h == 0)
    def _init():
        acc_ref[...] = jnp.zeros_like(acc_ref)

    w_b = w_ref[0]                                        # [Q, D] float32
    w_c = w_b.astype(compute_dtype)

    # Fused per-head q/k/v projection: one [Q, D] x [D, 3*dh] MXU matmul.
    qkv = jnp.dot(w_c, wqkv_ref[0], preferred_element_type=jnp.float32)
    q = qkv[:, 0 * d_head:1 * d_head]                     # [Q, dh] f32
    k = qkv[:, 1 * d_head:2 * d_head]
    v = qkv[:, 2 * d_head:3 * d_head]

    # AC = (q + r_w_bias) @ k^T
    rw_q = (q + rwb_ref[0]).astype(compute_dtype)
    ac = jax.lax.dot_general(rw_q, k.astype(compute_dtype),
                             (((1,), (1,)), ((), ())),
                             preferred_element_type=jnp.float32)        # [Q,K]

    # BD = rel_shift(q @ r_emb^T + r_bias): one MXU matmul + in-kernel shear.
    x = jax.lax.dot_general(q.astype(compute_dtype), remb_ref[0],
                            (((1,), (1,)), ((), ())),
                            preferred_element_type=jnp.float32)         # [Q,K]
    x = x + rbias_ref[0]
    sheared = _shear_rows(x, base_shift)      # branch 1: x[i, j - i - base]
    nxt = jnp.roll(sheared, -1, axis=0)       # branch 2: same, from row i+1
    qn, kn = x.shape
    rowi = jax.lax.broadcasted_iota(jnp.int32, (qn, kn), 0)
    coli = jax.lax.broadcasted_iota(jnp.int32, (qn, kn), 1)
    diff = coli - rowi
    bd = jnp.where(diff > base_shift, nxt,
                   jnp.where(diff == base_shift, 0.0, sheared))

    # Masked softmax over the key axis (torch dim=1), additive finite mask bias.
    score = (ac + bd) * scale + mbias_ref[...]
    m = jnp.max(score, axis=1, keepdims=True)
    e = jnp.exp(score - m)
    denom = jnp.sum(e, axis=1, keepdims=True)
    prob = e * (1.0 / denom)                  # [Q,1] reciprocal, broadcast mul
    # TODO(synk): dropatt / dropout are identity here (eval mode, p=0).

    attn_vec = jnp.dot(prob.astype(compute_dtype), v.astype(compute_dtype),
                       preferred_element_type=jnp.float32)               # [Q,dh]
    acc_ref[...] += jnp.dot(attn_vec.astype(compute_dtype), wo_ref[0],
                            preferred_element_type=jnp.float32)          # [Q,D]

    @pl.when(h == n_head - 1)
    def _finalize():
        xo = acc_ref[...] + w_b               # residual (post-lnorm variant)
        mu = jnp.mean(xo, axis=-1, keepdims=True)
        var = jnp.mean((xo - mu) * (xo - mu), axis=-1, keepdims=True)
        y = (xo - mu) * jax.lax.rsqrt(var + ln_eps)
        out_ref[0] = (y * gamma_ref[...] + beta_ref[...]).astype(out_ref.dtype)


def rel_learnable_mha_forward(w, r_emb, r_w_bias, r_bias, qkv_weight, o_weight,
                              ln_gamma, ln_beta, *, n_head, d_head,
                              attn_mask=None, ln_eps=1e-5,
                              compute_dtype=jnp.bfloat16):
    """Forward of RelLearnableMultiHeadAttn (pre_lnorm=False, mems=None).

    w:[qlen,bsz,d_model]  r_emb:[L,n_head,d_head]  r_w_bias:[n_head,d_head]
    r_bias:[L,n_head]  qkv_weight:[3*n_head*d_head,d_model]
    o_weight:[d_model,n_head*d_head]  attn_mask: None or [qlen,klen] (nonzero = masked)
    """
    # TODO(synk): mems / pre_lnorm=True / 3-D attn_mask / dropout not implemented.
    qlen, bsz, d_model = w.shape
    klen = qlen                                  # mems=None => klen == qlen
    scale = 1.0 / (d_head ** 0.5)
    nd = n_head * d_head

    # Pad / slice the learnable relative tables to klen (same as torch module).
    if klen > r_emb.shape[0]:
        pad_e = jnp.broadcast_to(r_emb[0:1], (klen - r_emb.shape[0],) + r_emb.shape[1:])
        r_emb = jnp.concatenate([pad_e, r_emb], axis=0)
        pad_b = jnp.broadcast_to(r_bias[0:1], (klen - r_bias.shape[0],) + r_bias.shape[1:])
        r_bias = jnp.concatenate([pad_b, r_bias], axis=0)
    else:
        r_emb = r_emb[-klen:]
        r_bias = r_bias[-klen:]

    # torch Linear: y = x @ W^T.  Fused per-head [D, 3*dh] projection (q|k|v)
    # and per-head [dh, D] output projection, cast to the compute dtype.
    wq = qkv_weight[0 * nd:1 * nd].reshape(n_head, d_head, d_model)
    wk = qkv_weight[1 * nd:2 * nd].reshape(n_head, d_head, d_model)
    wv = qkv_weight[2 * nd:3 * nd].reshape(n_head, d_head, d_model)
    wqkv = jnp.transpose(jnp.concatenate([wq, wk, wv], axis=1), (0, 2, 1))
    wqkv = wqkv.astype(compute_dtype)                          # [n, D, 3*dh]
    wo = o_weight.reshape(d_model, n_head, d_head).transpose(1, 2, 0)
    wo = wo.astype(compute_dtype)                              # [n, dh, D]

    remb = jnp.transpose(r_emb, (1, 0, 2)).astype(compute_dtype)          # [n, K, dh]
    rbias = jnp.transpose(r_bias, (1, 0))[:, None, :].astype(jnp.float32)  # [n, 1, K]
    rwb = r_w_bias.reshape(n_head, 1, d_head).astype(jnp.float32)

    if attn_mask is None:
        mbias = jnp.zeros((qlen, klen), jnp.float32)
    else:
        mbias = jnp.where(attn_mask.astype(bool), _NEG_INF, 0.0).astype(jnp.float32)

    gamma = ln_gamma.reshape(1, d_model).astype(jnp.float32)
    beta = ln_beta.reshape(1, d_model).astype(jnp.float32)
    wb = jnp.transpose(w, (1, 0, 2))                            # [B, Q, D]

    kern = functools.partial(
        _rel_mha_kernel, scale=scale, n_head=n_head, d_head=d_head,
        base_shift=klen - qlen + 1, ln_eps=ln_eps, compute_dtype=compute_dtype)

    out_b = pl.pallas_call(
        kern,
        out_shape=jax.ShapeDtypeStruct((bsz, qlen, d_model), w.dtype),
        grid_spec=pltpu.PrefetchScalarGridSpec(
            num_scalar_prefetch=0,
            grid=(bsz, n_head),
            in_specs=[
                pl.BlockSpec((1, qlen, d_model), lambda b, h: (b, 0, 0)),        # w
                pl.BlockSpec((1, d_model, 3 * d_head), lambda b, h: (h, 0, 0)),  # Wqkv
                pl.BlockSpec((1, d_head, d_model), lambda b, h: (h, 0, 0)),      # Wo
                pl.BlockSpec((1, 1, d_head), lambda b, h: (h, 0, 0)),            # r_w_bias
                pl.BlockSpec((1, klen, d_head), lambda b, h: (h, 0, 0)),         # r_emb
                pl.BlockSpec((1, 1, klen), lambda b, h: (h, 0, 0)),              # r_bias
                pl.BlockSpec((qlen, klen), lambda b, h: (0, 0)),                 # mask bias
                pl.BlockSpec((1, d_model), lambda b, h: (0, 0)),                 # ln gamma
                pl.BlockSpec((1, d_model), lambda b, h: (0, 0)),                 # ln beta
            ],
            out_specs=pl.BlockSpec((1, qlen, d_model), lambda b, h: (b, 0, 0)),
            scratch_shapes=[pltpu.VMEM((qlen, d_model), jnp.float32)],
        ),
        compiler_params=pltpu.CompilerParams(
            dimension_semantics=("parallel", "arbitrary")),
    )(wb, wqkv, wo, rwb, remb, rbias, mbias, gamma, beta)

    return jnp.transpose(out_b, (1, 0, 2))          # back to [qlen, bsz, d_model]


def _reference_forward(w, r_emb, r_w_bias, r_bias, qkv_weight, o_weight,
                       ln_gamma, ln_beta, *, n_head, d_head, attn_mask=None,
                       ln_eps=1e-5):
    """Plain-JAX f32 transcription of the torch forward (pre_lnorm=False, mems=None)."""
    qlen, bsz, d_model = w.shape
    klen = qlen
    scale = 1.0 / (d_head ** 0.5)
    nd = n_head * d_head

    w_heads = jnp.einsum('qbd,ed->qbe', w, qkv_weight)
    w_head_q = w_heads[..., :nd].reshape(qlen, bsz, n_head, d_head)
    w_head_k = w_heads[..., nd:2 * nd].reshape(qlen, bsz, n_head, d_head)
    w_head_v = w_heads[..., 2 * nd:].reshape(qlen, bsz, n_head, d_head)

    r_emb_u = r_emb[-klen:]
    r_bias_u = r_bias[-klen:]

    rw_head_q = w_head_q + r_w_bias[None]
    AC = jnp.einsum('ibnd,jbnd->ijbn', rw_head_q, w_head_k)
    B_ = jnp.einsum('ibnd,jnd->ijbn', w_head_q, r_emb_u)
    D_ = r_bias_u[None, :, None, :]

    x = B_ + D_                                          # [Q, K, B, N]
    zero_pad = jnp.zeros((qlen, 1) + x.shape[2:], x.dtype)
    xp = jnp.concatenate([zero_pad, x], axis=1)
    xp = xp.reshape((klen + 1, qlen) + x.shape[2:])
    BD = xp[1:].reshape(x.shape)

    score = (AC + BD) * scale
    if attn_mask is not None:
        # mask[i, j] masks score[i, j, :, :] (the 3-D-mask semantics of the module)
        score = jnp.where(attn_mask[:, :, None, None].astype(bool), -jnp.inf, score)
    prob = jax.nn.softmax(score, axis=1)
    vec = jnp.einsum('ijbn,jbnd->ibnd', prob, w_head_v).reshape(qlen, bsz, nd)
    attn_out = jnp.einsum('qbe,de->qbd', vec, o_weight)

    x2 = w + attn_out
    mu = jnp.mean(x2, axis=-1, keepdims=True)
    var = jnp.mean((x2 - mu) ** 2, axis=-1, keepdims=True)
    return (x2 - mu) / jnp.sqrt(var + ln_eps) * ln_gamma + ln_beta


if __name__ == "__main__":
    # TPU-friendly small config: lane-dense d_model (multiple of 128).
    n_head, d_model, d_head = 4, 128, 32
    qlen, bsz = 128, 2
    klen = qlen

    key = jax.random.PRNGKey(0)
    ks = jax.random.split(key, 8)
    w = jax.random.normal(ks[0], (qlen, bsz, d_model), jnp.float32)
    qkv_weight = 0.1 * jax.random.normal(ks[1], (3 * n_head * d_head, d_model), jnp.float32)
    o_weight = 0.1 * jax.random.normal(ks[2], (d_model, n_head * d_head), jnp.float32)
    r_emb = 0.1 * jax.random.normal(ks[3], (klen, n_head, d_head), jnp.float32)
    r_w_bias = 0.1 * jax.random.normal(ks[4], (n_head, d_head), jnp.float32)
    r_bias = 0.1 * jax.random.normal(ks[5], (klen, n_head), jnp.float32)
    ln_gamma = 1.0 + 0.1 * jax.random.normal(ks[6], (d_model,), jnp.float32)
    ln_beta = 0.1 * jax.random.normal(ks[7], (d_model,), jnp.float32)
    attn_mask = jnp.triu(jnp.ones((qlen, klen), jnp.float32), k=1)   # causal mask

    out = rel_learnable_mha_forward(
        w, r_emb, r_w_bias, r_bias, qkv_weight, o_weight, ln_gamma, ln_beta,
        n_head=n_head, d_head=d_head, attn_mask=attn_mask)
    out = jax.block_until_ready(out)

    ref = _reference_forward(
        w, r_emb, r_w_bias, r_bias, qkv_weight, o_weight, ln_gamma, ln_beta,
        n_head=n_head, d_head=d_head, attn_mask=attn_mask)

    out_np = np.asarray(out)
    ref_np = np.asarray(ref)
    # Kernel uses bfloat16 MXU inputs with f32 accumulation; reference is pure
    # f32, so tolerances are set for mixed precision.
    err = np.abs(out_np - ref_np)
    assert float(err.mean()) < 3e-2, f"mean abs err too large: {err.mean()}"
    np.testing.assert_allclose(out_np, ref_np, rtol=1e-1, atol=1e-1)
    print("KERNEL_OK")
</pallas_src>

<mosaic_0001>
module attributes {stable_mosaic.version = 11 : i64} {
  func.func @_rel_mha_kernel(%arg0: i32, %arg1: i32, %arg2: memref<1x128x128xf32, #tpu.memory_space<vmem>>, %arg3: memref<1x128x96xbf16, #tpu.memory_space<vmem>>, %arg4: memref<1x32x128xbf16, #tpu.memory_space<vmem>>, %arg5: memref<1x1x32xf32, #tpu.memory_space<vmem>>, %arg6: memref<1x128x32xbf16, #tpu.memory_space<vmem>>, %arg7: memref<1x1x128xf32, #tpu.memory_space<vmem>>, %arg8: memref<128x128xf32, #tpu.memory_space<vmem>>, %arg9: memref<1x128xf32, #tpu.memory_space<vmem>>, %arg10: memref<1x128xf32, #tpu.memory_space<vmem>>, %arg11: memref<1x128x128xf32, #tpu.memory_space<vmem>>, %arg12: memref<128x128xf32, #tpu.memory_space<vmem>>) attributes {dimension_semantics = [#tpu.dimension_semantics<parallel>, #tpu.dimension_semantics<arbitrary>], iteration_bounds = array<i64: 2, 4>, scalar_prefetch = 0 : i64, scratch_operands = 1 : i64, tpu.core_type = #tpu.core_type<tc>, window_params = [{transform_indices = @transform_0, window_bounds = array<i64: 1, 128, 128>}, {transform_indices = @transform_1, window_bounds = array<i64: 1, 128, 96>}, {transform_indices = @transform_2, window_bounds = array<i64: 1, 32, 128>}, {transform_indices = @transform_3, window_bounds = array<i64: 1, 1, 32>}, {transform_indices = @transform_4, window_bounds = array<i64: 1, 128, 32>}, {transform_indices = @transform_5, window_bounds = array<i64: 1, 1, 128>}, {pipeline_mode = #tpu.pipeline_mode<synchronous>, transform_indices = @transform_6, window_bounds = array<i64: 128, 128>}, {pipeline_mode = #tpu.pipeline_mode<synchronous>, transform_indices = @transform_7, window_bounds = array<i64: 1, 128>}, {pipeline_mode = #tpu.pipeline_mode<synchronous>, transform_indices = @transform_8, window_bounds = array<i64: 1, 128>}, {transform_indices = @transform_9, window_bounds = array<i64: 1, 128, 128>}]} {
    %c0_i32 = arith.constant 0 : i32
    %0 = arith.cmpi eq, %arg1, %c0_i32 : i32
    %1 = arith.extui %0 : i1 to i32
    %c0_i32_0 = arith.constant 0 : i32
    %2 = arith.cmpi ne, %1, %c0_i32_0 : i32
    scf.if %2 {
      %cst_52 = arith.constant 0.000000e+00 : f32
      %157 = vector.broadcast %cst_52 : f32 to vector<128x128xf32>
      %c0_53 = arith.constant 0 : index
      %c0_54 = arith.constant 0 : index
      %158 = vector.load %arg12[%c0_53, %c0_54] : memref<128x128xf32, #tpu.memory_space<vmem>>, vector<128x128xf32>
      tpu.vector_store %arg12[%c0_53, %c0_54], %157 {strides = array<i32>} : memref<128x128xf32, #tpu.memory_space<vmem>>, vector<128x128xf32>,
    } else {
    }
    %c0 = arith.constant 0 : index
    %c0_1 = arith.constant 0 : index
    %c0_2 = arith.constant 0 : index
    %3 = vector.load %arg2[%c0, %c0_1, %c0_2] : memref<1x128x128xf32, #tpu.memory_space<vmem>>, vector<1x128x128xf32>
    %4 = vector.shape_cast %3 : vector<1x128x128xf32> to vector<128x128xf32>
    %5 = arith.truncf %4 : vector<128x128xf32> to vector<128x128xbf16>
    %c0_3 = arith.constant 0 : index
    %c0_4 = arith.constant 0 : index
    %c0_5 = arith.constant 0 : index
    %6 = vector.load %arg3[%c0_3, %c0_4, %c0_5] : memref<1x128x96xbf16, #tpu.memory_space<vmem>>, vector<1x128x96xbf16>
    %7 = vector.shape_cast %6 : vector<1x128x96xbf16> to vector<128x96xbf16>
    %cst = arith.constant dense<0.000000e+00> : vector<128x96xf32>
    %8 = tpu.matmul %5, %7, %cst {dimension_numbers = #tpu.dot_dimension_numbers<[1], [0], [0], [1], [0, 0, 1, 1], [], []>} : vector<128x128xbf16>, vector<128x96xbf16>, vector<128x96xf32> -> vector<128x96xf32>
    %9 = vector.extract_strided_slice %8 {offsets = [0, 0], sizes = [128, 32], strides = [1, 1]} : vector<128x96xf32> to vector<128x32xf32>
    %10 = vector.extract_strided_slice %8 {offsets = [0, 32], sizes = [128, 32], strides = [1, 1]} : vector<128x96xf32> to vector<128x32xf32>
    %11 = vector.extract_strided_slice %8 {offsets = [0, 64], sizes = [128, 32], strides = [1, 1]} : vector<128x96xf32> to vector<128x32xf32>
    %c0_6 = arith.constant 0 : index
    %c0_7 = arith.constant 0 : index
    %c0_8 = arith.constant 0 : index
    %12 = vector.load %arg5[%c0_6, %c0_7, %c0_8] : memref<1x1x32xf32, #tpu.memory_space<vmem>>, vector<1x1x32xf32>
    %13 = vector.shape_cast %12 : vector<1x1x32xf32> to vector<1x32xf32>
    %14 = vector.broadcast %13 : vector<1x32xf32> to vector<128x32xf32>
    %15 = arith.addf %9, %14 : vector<128x32xf32>
    %16 = arith.truncf %15 : vector<128x32xf32> to vector<128x32xbf16>
    %17 = arith.truncf %10 : vector<128x32xf32> to vector<128x32xbf16>
    %cst_9 = arith.constant dense<0.000000e+00> : vector<128x128xf32>
    %18 = tpu.matmul %16, %17, %cst_9 {dimension_numbers = #tpu.dot_dimension_numbers<[1], [1], [0], [0], [0, 0, 1, 0], [], []>} : vector<128x32xbf16>, vector<128x32xbf16>, vector<128x128xf32> -> vector<128x128xf32>
    %19 = arith.truncf %9 : vector<128x32xf32> to vector<128x32xbf16>
    %c0_10 = arith.constant 0 : index
    %c0_11 = arith.constant 0 : index
    %c0_12 = arith.constant 0 : index
    %20 = vector.load %arg6[%c0_10, %c0_11, %c0_12] : memref<1x128x32xbf16, #tpu.memory_space<vmem>>, vector<1x128x32xbf16>
    %21 = vector.shape_cast %20 : vector<1x128x32xbf16> to vector<128x32xbf16>
    %cst_13 = arith.constant dense<0.000000e+00> : vector<128x128xf32>
    %22 = tpu.matmul %19, %21, %cst_13 {dimension_numbers = #tpu.dot_dimension_numbers<[1], [1], [0], [0], [0, 0, 1, 0], [], []>} : vector<128x32xbf16>, vector<128x32xbf16>, vector<128x128xf32> -> vector<128x128xf32>
    %c0_14 = arith.constant 0 : index
    %c0_15 = arith.constant 0 : index
    %c0_16 = arith.constant 0 : index
    %23 = vector.load %arg7[%c0_14, %c0_15, %c0_16] : memref<1x1x128xf32, #tpu.memory_space<vmem>>, vector<1x1x128xf32>
    %24 = vector.shape_cast %23 : vector<1x1x128xf32> to vector<1x128xf32>
    %25 = vector.broadcast %24 : vector<1x128xf32> to vector<128x128xf32>
    %26 = arith.addf %22, %25 : vector<128x128xf32>
    %27 = vector.extract_strided_slice %26 {offsets = [0, 127], sizes = [128, 1], strides = [1, 1]} : vector<128x128xf32> to vector<128x1xf32>
    %28 = vector.extract_strided_slice %26 {offsets = [0, 0], sizes = [128, 127], strides = [1, 1]} : vector<128x128xf32> to vector<128x127xf32>
    %29 = tpu.concatenate %27, %28 in 1 : vector<128x1xf32>, vector<128x127xf32> -> vector<128x128xf32>
    %30 = tpu.iota {dimensions = array<i32: 0>} : vector<128x1xi32>
    %31 = vector.extract_strided_slice %29 {offsets = [0, 127], sizes = [128, 1], strides = [1, 1]} : vector<128x128xf32> to vector<128x1xf32>
    %32 = vector.extract_strided_slice %29 {offsets = [0, 0], sizes = [128, 127], strides = [1, 1]} : vector<128x128xf32> to vector<128x127xf32>
    %33 = tpu.concatenate %31, %32 in 1 : vector<128x1xf32>, vector<128x127xf32> -> vector<128x128xf32>
    %c0_i32_17 = arith.constant 0 : i32
    %34 = vector.broadcast %c0_i32_17 : i32 to vector<128x1xi32>
    %35 = arith.shrsi %30, %34 : vector<128x1xi32>
    %c1_i32 = arith.constant 1 : i32
    %36 = vector.broadcast %c1_i32 : i32 to vector<128x1xi32>
    %37 = arith.andi %35, %36 : vector<128x1xi32>
    %c1_i32_18 = arith.constant 1 : i32
    %38 = vector.broadcast %c1_i32_18 : i32 to vector<128x1xi32>
    %39 = arith.cmpi eq, %37, %38 : vector<128x1xi32>
    %40 = vector.shape_cast %39 : vector<128x1xi1> to vector<128x1xi1>
    %41 = vector.broadcast %40 : vector<128x1xi1> to vector<128x128xi1>
    %42 = arith.select %41, %33, %29 : vector<128x128xi1>, vector<128x128xf32>
    %43 = vector.extract_strided_slice %42 {offsets = [0, 126], sizes = [128, 2], strides = [1, 1]} : vector<128x128xf32> to vector<128x2xf32>
    %44 = vector.extract_strided_slice %42 {offsets = [0, 0], sizes = [128, 126], strides = [1, 1]} : vector<128x128xf32> to vector<128x126xf32>
    %45 = tpu.concatenate %43, %44 in 1 : vector<128x2xf32>, vector<128x126xf32> -> vector<128x128xf32>
    %c1_i32_19 = arith.constant 1 : i32
    %46 = vector.broadcast %c1_i32_19 : i32 to vector<128x1xi32>
    %47 = arith.shrsi %30, %46 : vector<128x1xi32>
    %c1_i32_20 = arith.constant 1 : i32
    %48 = vector.broadcast %c1_i32_20 : i32 to vector<128x1xi32>
    %49 = arith.andi %47, %48 : vector<128x1xi32>
    %c1_i32_21 = arith.constant 1 : i32
    %50 = vector.broadcast %c1_i32_21 : i32 to vector<128x1xi32>
    %51 = arith.cmpi eq, %49, %50 : vector<128x1xi32>
    %52 = vector.shape_cast %51 : vector<128x1xi1> to vector<128x1xi1>
    %53 = vector.broadcast %52 : vector<128x1xi1> to vector<128x128xi1>
    %54 = arith.select %53, %45, %42 : vector<128x128xi1>, vector<128x128xf32>
    %55 = vector.extract_strided_slice %54 {offsets = [0, 124], sizes = [128, 4], strides = [1, 1]} : vector<128x128xf32> to vector<128x4xf32>
    %56 = vector.extract_strided_slice %54 {offsets = [0, 0], sizes = [128, 124], strides = [1, 1]} : vector<128x128xf32> to vector<128x124xf32>
    %57 = tpu.concatenate %55, %56 in 1 : vector<128x4xf32>, vector<128x124xf32> -> vector<128x128xf32>
    %c2_i32 = arith.constant 2 : i32
    %58 = vector.broadcast %c2_i32 : i32 to vector<128x1xi32>
    %59 = arith.shrsi %30, %58 : vector<128x1xi32>
    %c1_i32_22 = arith.constant 1 : i32
    %60 = vector.broadcast %c1_i32_22 : i32 to vector<128x1xi32>
    %61 = arith.andi %59, %60 : vector<128x1xi32>
    %c1_i32_23 = arith.constant 1 : i32
    %62 = vector.broadcast %c1_i32_23 : i32 to vector<128x1xi32>
    %63 = arith.cmpi eq, %61, %62 : vector<128x1xi32>
    %64 = vector.shape_cast %63 : vector<128x1xi1> to vector<128x1xi1>
    %65 = vector.broadcast %64 : vector<128x1xi1> to vector<128x128xi1>
    %66 = arith.select %65, %57, %54 : vector<128x128xi1>, vector<128x128xf32>
    %67 = vector.extract_strided_slice %66 {offsets = [0, 120], sizes = [128, 8], strides = [1, 1]} : vector<128x128xf32> to vector<128x8xf32>
    %68 = vector.extract_strided_slice %66 {offsets = [0, 0], sizes = [128, 120], strides = [1, 1]} : vector<128x128xf32> to vector<128x120xf32>
    %69 = tpu.concatenate %67, %68 in 1 : vector<128x8xf32>, vector<128x120xf32> -> vector<128x128xf32>
    %c3_i32 = arith.constant 3 : i32
    %70 = vector.broadcast %c3_i32 : i32 to vector<128x1xi32>
    %71 = arith.shrsi %30, %70 : vector<128x1xi32>
    %c1_i32_24 = arith.constant 1 : i32
    %72 = vector.broadcast %c1_i32_24 : i32 to vector<128x1xi32>
    %73 = arith.andi %71, %72 : vector<128x1xi32>
    %c1_i32_25 = arith.constant 1 : i32
    %74 = vector.broadcast %c1_i32_25 : i32 to vector<128x1xi32>
    %75 = arith.cmpi eq, %73, %74 : vector<128x1xi32>
    %76 = vector.shape_cast %75 : vector<128x1xi1> to vector<128x1xi1>
    %77 = vector.broadcast %76 : vector<128x1xi1> to vector<128x128xi1>
    %78 = arith.select %77, %69, %66 : vector<128x128xi1>, vector<128x128xf32>
    %79 = vector.extract_strided_slice %78 {offsets = [0, 112], sizes = [128, 16], strides = [1, 1]} : vector<128x128xf32> to vector<128x16xf32>
    %80 = vector.extract_strided_slice %78 {offsets = [0, 0], sizes = [128, 112], strides = [1, 1]} : vector<128x128xf32> to vector<128x112xf32>
    %81 = tpu.concatenate %79, %80 in 1 : vector<128x16xf32>, vector<128x112xf32> -> vector<128x128xf32>
    %c4_i32 = arith.constant 4 : i32
    %82 = vector.broadcast %c4_i32 : i32 to vector<128x1xi32>
    %83 = arith.shrsi %30, %82 : vector<128x1xi32>
    %c1_i32_26 = arith.constant 1 : i32
    %84 = vector.broadcast %c1_i32_26 : i32 to vector<128x1xi32>
    %85 = arith.andi %83, %84 : vector<128x1xi32>
    %c1_i32_27 = arith.constant 1 : i32
    %86 = vector.broadcast %c1_i32_27 : i32 to vector<128x1xi32>
    %87 = arith.cmpi eq, %85, %86 : vector<128x1xi32>
    %88 = vector.shape_cast %87 : vector<128x1xi1> to vector<128x1xi1>
    %89 = vector.broadcast %88 : vector<128x1xi1> to vector<128x128xi1>
    %90 = arith.select %89, %81, %78 : vector<128x128xi1>, vector<128x128xf32>
    %91 = vector.extract_strided_slice %90 {offsets = [0, 96], sizes = [128, 32], strides = [1, 1]} : vector<128x128xf32> to vector<128x32xf32>
    %92 = vector.extract_strided_slice %90 {offsets = [0, 0], sizes = [128, 96], strides = [1, 1]} : vector<128x128xf32> to vector<128x96xf32>
    %93 = tpu.concatenate %91, %92 in 1 : vector<128x32xf32>, vector<128x96xf32> -> vector<128x128xf32>
    %c5_i32 = arith.constant 5 : i32
    %94 = vector.broadcast %c5_i32 : i32 to vector<128x1xi32>
    %95 = arith.shrsi %30, %94 : vector<128x1xi32>
    %c1_i32_28 = arith.constant 1 : i32
    %96 = vector.broadcast %c1_i32_28 : i32 to vector<128x1xi32>
    %97 = arith.andi %95, %96 : vector<128x1xi32>
    %c1_i32_29 = arith.constant 1 : i32
    %98 = vector.broadcast %c1_i32_29 : i32 to vector<128x1xi32>
    %99 = arith.cmpi eq, %97, %98 : vector<128x1xi32>
    %100 = vector.shape_cast %99 : vector<128x1xi1> to vector<128x1xi1>
    %101 = vector.broadcast %100 : vector<128x1xi1> to vector<128x128xi1>
    %102 = arith.select %101, %93, %90 : vector<128x128xi1>, vector<128x128xf32>
    %103 = vector.extract_strided_slice %102 {offsets = [0, 64], sizes = [128, 64], strides = [1, 1]} : vector<128x128xf32> to vector<128x64xf32>
    %104 = vector.extract_strided_slice %102 {offsets = [0, 0], sizes = [128, 64], strides = [1, 1]} : vector<128x128xf32> to vector<128x64xf32>
    %105 = tpu.concatenate %103, %104 in 1 : vector<128x64xf32>, vector<128x64xf32> -> vector<128x128xf32>
    %c6_i32 = arith.constant 6 : i32
    %106 = vector.broadcast %c6_i32 : i32 to vector<128x1xi32>
    %107 = arith.shrsi %30, %106 : vector<128x1xi32>
    %c1_i32_30 = arith.constant 1 : i32
    %108 = vector.broadcast %c1_i32_30 : i32 to vector<128x1xi32>
    %109 = arith.andi %107, %108 : vector<128x1xi32>
    %c1_i32_31 = arith.constant 1 : i32
    %110 = vector.broadcast %c1_i32_31 : i32 to vector<128x1xi32>
    %111 = arith.cmpi eq, %109, %110 : vector<128x1xi32>
    %112 = vector.shape_cast %111 : vector<128x1xi1> to vector<128x1xi1>
    %113 = vector.broadcast %112 : vector<128x1xi1> to vector<128x128xi1>
    %114 = arith.select %113, %105, %102 : vector<128x128xi1>, vector<128x128xf32>
    %115 = vector.extract_strided_slice %114 {offsets = [1, 0], sizes = [127, 128], strides = [1, 1]} : vector<128x128xf32> to vector<127x128xf32>
    %116 = vector.extract_strided_slice %114 {offsets = [0, 0], sizes = [1, 128], strides = [1, 1]} : vector<128x128xf32> to vector<1x128xf32>
    %117 = tpu.concatenate %115, %116 in 0 : vector<127x128xf32>, vector<1x128xf32> -> vector<128x128xf32>
    %118 = tpu.iota {dimensions = array<i32: 0>} : vector<128x128xi32>
    %119 = tpu.iota {dimensions = array<i32: 1>} : vector<128x128xi32>
    %120 = arith.subi %119, %118 : vector<128x128xi32>
    %c1_i32_32 = arith.constant 1 : i32
    %121 = vector.broadcast %c1_i32_32 : i32 to vector<128x128xi32>
    %122 = arith.cmpi sgt, %120, %121 : vector<128x128xi32>
    %c1_i32_33 = arith.constant 1 : i32
    %123 = vector.broadcast %c1_i32_33 : i32 to vector<128x128xi32>
    %124 = arith.cmpi eq, %120, %123 : vector<128x128xi32>
    %cst_34 = arith.constant 0.000000e+00 : f32
    %125 = vector.broadcast %cst_34 : f32 to vector<128x128xf32>
    %126 = arith.select %124, %125, %114 : vector<128x128xi1>, vector<128x128xf32>
    %127 = arith.select %122, %117, %126 : vector<128x128xi1>, vector<128x128xf32>
    %128 = arith.addf %18, %127 : vector<128x128xf32>
    %cst_35 = arith.constant 0.176776692 : f32
    %129 = vector.broadcast %cst_35 : f32 to vector<128x128xf32>
    %130 = arith.mulf %128, %129 : vector<128x128xf32>
    %c0_36 = arith.constant 0 : index
    %c0_37 = arith.constant 0 : index
    %131 = vector.load %arg8[%c0_36, %c0_37] : memref<128x128xf32, #tpu.memory_space<vmem>>, vector<128x128xf32>
    %132 = arith.addf %130, %131 : vector<128x128xf32>
    %cst_38 = arith.constant dense<0xFF800000> : vector<128xf32>
    %133 = vector.multi_reduction <maximumf>, %132, %cst_38 [1] : vector<128x128xf32> to vector<128xf32>
    %134 = vector.shape_cast %133 : vector<128xf32> to vector<128x1xf32>
    %135 = vector.broadcast %134 : vector<128x1xf32> to vector<128x128xf32>
    %136 = arith.subf %132, %135 : vector<128x128xf32>
    %137 = math.exp %136 : vector<128x128xf32>
    %cst_39 = arith.constant dense<0.000000e+00> : vector<128xf32>
    %138 = vector.multi_reduction <add>, %137, %cst_39 [1] : vector<128x128xf32> to vector<128xf32>
    %139 = vector.shape_cast %138 : vector<128xf32> to vector<128x1xf32>
    %cst_40 = arith.constant 1.000000e+00 : f32
    %140 = vector.broadcast %cst_40 : f32 to vector<128x1xf32>
    %141 = arith.divf %140, %139 : vector<128x1xf32>
    %142 = vector.broadcast %141 : vector<128x1xf32> to vector<128x128xf32>
    %143 = arith.mulf %137, %142 : vector<128x128xf32>
    %144 = arith.truncf %143 : vector<128x128xf32> to vector<128x128xbf16>
    %145 = arith.truncf %11 : vector<128x32xf32> to vector<128x32xbf16>
    %cst_41 = arith.constant dense<0.000000e+00> : vector<128x32xf32>
    %146 = tpu.matmul %144, %145, %cst_41 {dimension_numbers = #tpu.dot_dimension_numbers<[1], [0], [0], [1], [0, 0, 1, 1], [], []>} : vector<128x128xbf16>, vector<128x32xbf16>, vector<128x32xf32> -> vector<128x32xf32>
    %c0_42 = arith.constant 0 : index
    %c0_43 = arith.constant 0 : index
    %147 = vector.load %arg12[%c0_42, %c0_43] : memref<128x128xf32, #tpu.memory_space<vmem>>, vector<128x128xf32>
    %148 = arith.truncf %146 : vector<128x32xf32> to vector<128x32xbf16>
    %c0_44 = arith.constant 0 : index
    %c0_45 = arith.constant 0 : index
    %c0_46 = arith.constant 0 : index
    %149 = vector.load %arg4[%c0_44, %c0_45, %c0_46] : memref<1x32x128xbf16, #tpu.memory_space<vmem>>, vector<1x32x128xbf16>
    %150 = vector.shape_cast %149 : vector<1x32x128xbf16> to vector<32x128xbf16>
    %cst_47 = arith.constant dense<0.000000e+00> : vector<128x128xf32>
    %151 = tpu.matmul %148, %150, %cst_47 {dimension_numbers = #tpu.dot_dimension_numbers<[1], [0], [0], [1], [0, 0, 1, 1], [], []>} : vector<128x32xbf16>, vector<32x128xbf16>, vector<128x128xf32> -> vector<128x128xf32>
    %152 = arith.addf %147, %151 : vector<128x128xf32>
    %c0_48 = arith.constant 0 : index
    %c0_49 = arith.constant 0 : index
    %153 = vector.load %arg12[%c0_48, %c0_49] : memref<128x128xf32, #tpu.memory_space<vmem>>, vector<128x128xf32>
    tpu.vector_store %arg12[%c0_48, %c0_49], %152 {strides = array<i32>} : memref<128x128xf32, #tpu.memory_space<vmem>>, vector<128x128xf32>,
    %c3_i32_50 = arith.constant 3 : i32
    %154 = arith.cmpi eq, %arg1, %c3_i32_50 : i32
    %155 = arith.extui %154 : i1 to i32
    %c0_i32_51 = arith.constant 0 : i32
    %156 = arith.cmpi ne, %155, %c0_i32_51 : i32
    scf.if %156 {
      %c0_52 = arith.constant 0 : index
      %c0_53 = arith.constant 0 : index
      %157 = vector.load %arg12[%c0_52, %c0_53] : memref<128x128xf32, #tpu.memory_space<vmem>>, vector<128x128xf32>
      %158 = arith.addf %157, %4 : vector<128x128xf32>
      %cst_54 = arith.constant dense<0.000000e+00> : vector<128xf32>
      %159 = vector.multi_reduction <add>, %158, %cst_54 [1] : vector<128x128xf32> to vector<128xf32>
      %160 = vector.shape_cast %159 : vector<128xf32> to vector<128x1xf32>
      %cst_55 = arith.constant 1.280000e+02 : f32
      %161 = vector.broadcast %cst_55 : f32 to vector<128x1xf32>
      %162 = arith.divf %160, %161 : vector<128x1xf32>
      %163 = vector.broadcast %162 : vector<128x1xf32> to vector<128x128xf32>
      %164 = arith.subf %158, %163 : vector<128x128xf32>
      %165 = vector.broadcast %162 : vector<128x1xf32> to vector<128x128xf32>
      %166 = arith.subf %158, %165 : vector<128x128xf32>
      %167 = arith.mulf %164, %166 : vector<128x128xf32>
      %cst_56 = arith.constant dense<0.000000e+00> : vector<128xf32>
      %168 = vector.multi_reduction <add>, %167, %cst_56 [1] : vector<128x128xf32> to vector<128xf32>
      %169 = vector.shape_cast %168 : vector<128xf32> to vector<128x1xf32>
      %cst_57 = arith.constant 1.280000e+02 : f32
      %170 = vector.broadcast %cst_57 : f32 to vector<128x1xf32>
      %171 = arith.divf %169, %170 : vector<128x1xf32>
      %172 = vector.broadcast %162 : vector<128x1xf32> to vector<128x128xf32>
      %173 = arith.subf %158, %172 : vector<128x128xf32>
      %cst_58 = arith.constant 9.99999974E-6 : f32
      %174 = vector.broadcast %cst_58 : f32 to vector<128x1xf32>
      %175 = arith.addf %171, %174 : vector<128x1xf32>
      %176 = math.rsqrt %175 : vector<128x1xf32>
      %177 = vector.broadcast %176 : vector<128x1xf32> to vector<128x128xf32>
      %178 = arith.mulf %173, %177 : vector<128x128xf32>
      %c0_59 = arith.constant 0 : index
      %c0_60 = arith.constant 0 : index
      %179 = vector.load %arg9[%c0_59, %c0_60] : memref<1x128xf32, #tpu.memory_space<vmem>>, vector<1x128xf32>
      %180 = vector.broadcast %179 : vector<1x128xf32> to vector<128x128xf32>
      %181 = arith.mulf %178, %180 : vector<128x128xf32>
      %c0_61 = arith.constant 0 : index
      %c0_62 = arith.constant 0 : index
      %182 = vector.load %arg10[%c0_61, %c0_62] : memref<1x128xf32, #tpu.memory_space<vmem>>, vector<1x128xf32>
      %183 = vector.broadcast %182 : vector<1x128xf32> to vector<128x128xf32>
      %184 = arith.addf %181, %183 : vector<128x128xf32>
      %c0_63 = arith.constant 0 : index
      %c0_64 = arith.constant 0 : index
      %c0_65 = arith.constant 0 : index
      %185 = vector.load %arg11[%c0_63, %c0_64, %c0_65] : memref<1x128x128xf32, #tpu.memory_space<vmem>>, vector<1x128x128xf32>
      %186 = vector.shape_cast %185 : vector<1x128x128xf32> to vector<128x128xf32>
      %187 = vector.shape_cast %184 : vector<128x128xf32> to vector<1x128x128xf32>
      tpu.vector_store %arg11[%c0_63, %c0_64, %c0_65], %187 {strides = array<i32>} : memref<1x128x128xf32, #tpu.memory_space<vmem>>, vector<1x128x128xf32>,
    } else {
    }
    return
  }
  func.func @transform_0(%arg0: i32, %arg1: i32) -> (i32, i32, i32) {
    %c0_i32 = arith.constant 0 : i32
    %c0_i32_0 = arith.constant 0 : i32
    %c0_i32_1 = arith.constant 0 : i32
    return %arg0, %c0_i32, %c0_i32_0 : i32, i32, i32
  }
  func.func @transform_1(%arg0: i32, %arg1: i32) -> (i32, i32, i32) {
    %c0_i32 = arith.constant 0 : i32
    %c0_i32_0 = arith.constant 0 : i32
    %c0_i32_1 = arith.constant 0 : i32
    return %arg1, %c0_i32, %c0_i32_0 : i32, i32, i32
  }
  func.func @transform_2(%arg0: i32, %arg1: i32) -> (i32, i32, i32) {
    %c0_i32 = arith.constant 0 : i32
    %c0_i32_0 = arith.constant 0 : i32
    %c0_i32_1 = arith.constant 0 : i32
    return %arg1, %c0_i32, %c0_i32_0 : i32, i32, i32
  }
  func.func @transform_3(%arg0: i32, %arg1: i32) -> (i32, i32, i32) {
    %c0_i32 = arith.constant 0 : i32
    %c0_i32_0 = arith.constant 0 : i32
    %c0_i32_1 = arith.constant 0 : i32
    return %arg1, %c0_i32, %c0_i32_0 : i32, i32, i32
  }
  func.func @transform_4(%arg0: i32, %arg1: i32) -> (i32, i32, i32) {
    %c0_i32 = arith.constant 0 : i32
    %c0_i32_0 = arith.constant 0 : i32
    %c0_i32_1 = arith.constant 0 : i32
    return %arg1, %c0_i32, %c0_i32_0 : i32, i32, i32
  }
  func.func @transform_5(%arg0: i32, %arg1: i32) -> (i32, i32, i32) {
    %c0_i32 = arith.constant 0 : i32
    %c0_i32_0 = arith.constant 0 : i32
    %c0_i32_1 = arith.constant 0 : i32
    return %arg1, %c0_i32, %c0_i32_0 : i32, i32, i32
  }
  func.func @transform_6(%arg0: i32, %arg1: i32) -> (i32, i32) {
    %c0_i32 = arith.constant 0 : i32
    %c0_i32_0 = arith.constant 0 : i32
    %c0_i32_1 = arith.constant 0 : i32
    return %c0_i32, %c0_i32_0 : i32, i32
  }
  func.func @transform_7(%arg0: i32, %arg1: i32) -> (i32, i32) {
    %c0_i32 = arith.constant 0 : i32
    %c0_i32_0 = arith.constant 0 : i32
    %c0_i32_1 = arith.constant 0 : i32
    return %c0_i32, %c0_i32_0 : i32, i32
  }
  func.func @transform_8(%arg0: i32, %arg1: i32) -> (i32, i32) {
    %c0_i32 = arith.constant 0 : i32
    %c0_i32_0 = arith.constant 0 : i32
    %c0_i32_1 = arith.constant 0 : i32
    return %c0_i32, %c0_i32_0 : i32, i32
  }
  func.func @transform_9(%arg0: i32, %arg1: i32) -> (i32, i32, i32) {
    %c0_i32 = arith.constant 0 : i32
    %c0_i32_0 = arith.constant 0 : i32
    %c0_i32_1 = arith.constant 0 : i32
    return %arg0, %c0_i32, %c0_i32_0 : i32, i32, i32
  }
}

</mosaic_0001>

<llo_original>
// kernel: tpu_custom_call.1
$region0: #{tpu_custom_call.1}
  #allocation0 [shape = 'u32[]', space=smem, size = 0x4, offset = 0x4, fixed_abs, tag = 'smem constant byte address 0x4 - core index']
  #allocation1 [shape = 'u32[144,128]{1,0:T(1,128)}', space=vmem, size = 0x12000, scoped, tag = 'internal scratch']
  #allocation2 [shape = 'f32[128,128]{1,0:T(8,128)}', space=vmem, size = 0x10000, scoped, tag = 'scratch operand']
  %s0 = inlined_call_operand.vmem [shape: f32[2,128,128], index: 0, kind: input, shape index: {}]
  %s1 = inlined_call_operand.vmem [shape: bf16[4,128,96], index: 1, kind: input, shape index: {}]
  %s2 = inlined_call_operand.vmem [shape: bf16[4,32,128], index: 2, kind: input, shape index: {}]
  %s3 = inlined_call_operand.vmem [shape: f32[4,1,32], index: 3, kind: input, shape index: {}]
  %s4 = inlined_call_operand.vmem [shape: bf16[4,128,32], index: 4, kind: input, shape index: {}]
  %s5 = inlined_call_operand.vmem [shape: f32[4,1,128], index: 5, kind: input, shape index: {}]
  %s6 = inlined_call_operand.vmem [shape: f32[128,128], index: 6, kind: input, shape index: {}]
  %s7 = inlined_call_operand.vmem [shape: f32[1,128], index: 7, kind: input, shape index: {}]
  %s8 = inlined_call_operand.vmem [shape: f32[1,128], index: 8, kind: input, shape index: {}]
  %s9 = inlined_call_operand.hbm [shape: f32[2,128,128], index: 9, kind: output, shape index: {}]
  %s10 = sld [smem:[#allocation0]]
  $region77: #{tpu_custom_call.1} parent=0
    _
  %s12 = ssub.s32 1, %s10
  %s13 = scalar_select 0, %s12, %s10
  $region1: #{tpu_custom_call.1} parent=0
    #allocation3 [shape = 'u8[131072]{0}', space=vmem, size = 0x20000, scoped, tag = 'output window, operand 0']
    #allocation4 [shape = 's32[2]{0}', space=sflag, size = 0x8, scoped, tag = 'scoped memory for tpu_custom_call.1']
    %14 = vsyncpa [#allocation4], 0
    %s15 = scalar_lea.sflag [#allocation4], 1
    %16 = vsyncpa %s15, 0
    loop: start=0, step=1, limit=10
    $region2: #{tpu_custom_call.1} parent=1 // loop_pre_header
      _
    $region3: #{tpu_custom_call.1} parent=1 // loop_header
      %s18 = sphi 0, %s22
      %p19 = scmp.ge.s32.totalorder %s18, 10
      %s25 = sphi 0, %s37
      %s26 = sphi 0, %s33
      %s27 = sphi 0, %s25
      %s28 = sphi 0, %s26
      %s29 = sphi 0, %s27
      %s30 = sphi 0, %s28
      %s40 = sphi 0, %s42
      %s43 = sphi 0, %s40
      %s44 = sphi 0, %s43
      %s60 = sphi 0, %s44
      %s66 = sphi 0, %s68
      %s69 = sphi 0, %s66
      %s70 = sphi 0, %s69
      %s86 = sphi 0, %s70
      %s92 = sphi 0, %s94
      %s95 = sphi 0, %s92
      %s96 = sphi 0, %s95
      %s112 = sphi 0, %s96
      %s118 = sphi 0, %s120
      %s121 = sphi 0, %s118
      %s122 = sphi 0, %s121
      %s138 = sphi 0, %s122
      %s144 = sphi 0, %s146
      %s147 = sphi 0, %s144
      %s148 = sphi 0, %s147
      %s164 = sphi 0, %s148
      %s170 = sphi 0, %s172
      %s173 = sphi 0, %s170
      %s174 = sphi 0, %s173
      %s190 = sphi 0, %s174
      %s194 = sphi 0, %s194
      %s196 = sphi 0, %s194
      %s197 = sphi 0, %s196
      %s211 = sphi 0, %s197
      %s215 = sphi 0, %s215
      %s217 = sphi 0, %s215
      %s218 = sphi 0, %s217
      %s232 = sphi 0, %s218
      %s236 = sphi 0, %s236
      %s238 = sphi 0, %s236
      %s239 = sphi 0, %s238
      %s253 = sphi 0, %s239
      %s259 = sphi 0, %s261
      %s262 = sphi 0, %s259
      %s263 = sphi 0, %s262
      %s279 = sphi 0, %s263
    $region4: #{tpu_custom_call.1} parent=1 // loop_header_branch
      %21 = sbr.rel (%p19) target = $region8
    $region5: #{tpu_custom_call.1} parent=1 // loop_body
      %s23 = ssub.s32 %s18, 1
      %s24 = ssub.s32 %s18, 2
      %s31 = sadd.s32 1, %s26
      %p32 = scmp.ge.s32.totalorder %s31, 4
      %s33 = scalar_select %p32, 0, %s31
      %s34 = sadd.s32 1, %s25
      %s35 = scalar_select %p32, %s34, %s25
      %p36 = scmp.ge.s32.totalorder %s35, 2
      %s37 = scalar_select %p36, 0, %s35
      %s38 = ssub.s32 %s25, %s37
      %p39 = scmp.eq.s32.totalorder %s38, 0
      %s41 = sadd.s32 %s40, 1
      %s42 = scalar_select %p39, %s40, %s41
      %p45 = pneg %p39
      %p46 = scmp.eq.s32.totalorder %s18, 7
      %p47 = por %p45, %p46
      %p48 = scmp.ne.s32.totalorder %s40, %s43
      %p49 = scmp.eq.s32.totalorder %s18, 0
      %p50 = por %p48, %p49
      %p51 = scmp.ne.s32.totalorder %s40, %s43
      %p52 = scmp.eq.s32.totalorder %s23, 7
      %p53 = por %p51, %p52
      %p54 = scmp.ne.s32.totalorder %s43, %s44
      %p55 = scmp.eq.s32.totalorder %s23, 0
      %p56 = por %p54, %p55
      %p57 = scmp.ne.s32.totalorder %s43, %s44
      %p58 = scmp.eq.s32.totalorder %s24, 7
      %p59 = por %p57, %p58
      %p61 = scmp.ne.s32.totalorder %s44, %s60
      %p62 = scmp.eq.s32.totalorder %s24, 0
      %p63 = por %p61, %p62
      %s64 = ssub.s32 %s26, %s33
      %p65 = scmp.eq.s32.totalorder %s64, 0
      %s67 = sadd.s32 %s66, 1
      %s68 = scalar_select %p65, %s66, %s67
      %p71 = pneg %p65
      %p72 = scmp.eq.s32.totalorder %s18, 7
      %p73 = por %p71, %p72
      %p74 = scmp.ne.s32.totalorder %s66, %s69
      %p75 = scmp.eq.s32.totalorder %s18, 0
      %p76 = por %p74, %p75
      %p77 = scmp.ne.s32.totalorder %s66, %s69
      %p78 = scmp.eq.s32.totalorder %s23, 7
      %p79 = por %p77, %p78
      %p80 = scmp.ne.s32.totalorder %s69, %s70
      %p81 = scmp.eq.s32.totalorder %s23, 0
      %p82 = por %p80, %p81
      %p83 = scmp.ne.s32.totalorder %s69, %s70
      %p84 = scmp.eq.s32.totalorder %s24, 7
      %p85 = por %p83, %p84
      %p87 = scmp.ne.s32.totalorder %s70, %s86
      %p88 = scmp.eq.s32.totalorder %s24, 0
      %p89 = por %p87, %p88
      %s90 = ssub.s32 %s26, %s33
      %p91 = scmp.eq.s32.totalorder %s90, 0
      %s93 = sadd.s32 %s92, 1
      %s94 = scalar_select %p91, %s92, %s93
      %p97 = pneg %p91
      %p98 = scmp.eq.s32.totalorder %s18, 7
      %p99 = por %p97, %p98
      %p100 = scmp.ne.s32.totalorder %s92, %s95
      %p101 = scmp.eq.s32.totalorder %s18, 0
      %p102 = por %p100, %p101
      %p103 = scmp.ne.s32.totalorder %s92, %s95
      %p104 = scmp.eq.s32.totalorder %s23, 7
      %p105 = por %p103, %p104
      %p106 = scmp.ne.s32.totalorder %s95, %s96
      %p107 = scmp.eq.s32.totalorder %s23, 0
      %p108 = por %p106, %p107
      %p109 = scmp.ne.s32.totalorder %s95, %s96
      %p110 = scmp.eq.s32.totalorder %s24, 7
      %p111 = por %p109, %p110
      %p113 = scmp.ne.s32.totalorder %s96, %s112
      %p114 = scmp.eq.s32.totalorder %s24, 0
      %p115 = por %p113, %p114
      %s116 = ssub.s32 %s26, %s33
      %p117 = scmp.eq.s32.totalorder %s116, 0
      %s119 = sadd.s32 %s118, 1
      %s120 = scalar_select %p117, %s118, %s119
      %p123 = pneg %p117
      %p124 = scmp.eq.s32.totalorder %s18, 7
      %p125 = por %p123, %p124
      %p126 = scmp.ne.s32.totalorder %s118, %s121
      %p127 = scmp.eq.s32.totalorder %s18, 0
      %p128 = por %p126, %p127
      %p129 = scmp.ne.s32.totalorder %s118, %s121
      %p130 = scmp.eq.s32.totalorder %s23, 7
      %p131 = por %p129, %p130
      %p132 = scmp.ne.s32.totalorder %s121, %s122
      %p133 = scmp.eq.s32.totalorder %s23, 0
      %p134 = por %p132, %p133
      %p135 = scmp.ne.s32.totalorder %s121, %s122
      %p136 = scmp.eq.s32.totalorder %s24, 7
      %p137 = por %p135, %p136
      %p139 = scmp.ne.s32.totalorder %s122, %s138
      %p140 = scmp.eq.s32.totalorder %s24, 0
      %p141 = por %p139, %p140
      %s142 = ssub.s32 %s26, %s33
      %p143 = scmp.eq.s32.totalorder %s142, 0
      %s145 = sadd.s32 %s144, 1
      %s146 = scalar_select %p143, %s144, %s145
      %p149 = pneg %p143
      %p150 = scmp.eq.s32.totalorder %s18, 7
      %p151 = por %p149, %p150
      %p152 = scmp.ne.s32.totalorder %s144, %s147
      %p153 = scmp.eq.s32.totalorder %s18, 0
      %p154 = por %p152, %p153
      %p155 = scmp.ne.s32.totalorder %s144, %s147
      %p156 = scmp.eq.s32.totalorder %s23, 7
      %p157 = por %p155, %p156
      %p158 = scmp.ne.s32.totalorder %s147, %s148
      %p159 = scmp.eq.s32.totalorder %s23, 0
      %p160 = por %p158, %p159
      %p161 = scmp.ne.s32.totalorder %s147, %s148
      %p162 = scmp.eq.s32.totalorder %s24, 7
      %p163 = por %p161, %p162
      %p165 = scmp.ne.s32.totalorder %s148, %s164
      %p166 = scmp.eq.s32.totalorder %s24, 0
      %p167 = por %p165, %p166
      %s168 = ssub.s32 %s26, %s33
      %p169 = scmp.eq.s32.totalorder %s168, 0
      %s171 = sadd.s32 %s170, 1
      %s172 = scalar_select %p169, %s170, %s171
      %p175 = pneg %p169
      %p176 = scmp.eq.s32.totalorder %s18, 7
      %p177 = por %p175, %p176
      %p178 = scmp.ne.s32.totalorder %s170, %s173
      %p179 = scmp.eq.s32.totalorder %s18, 0
      %p180 = por %p178, %p179
      %p181 = scmp.ne.s32.totalorder %s170, %s173
      %p182 = scmp.eq.s32.totalorder %s23, 7
      %p183 = por %p181, %p182
      %p184 = scmp.ne.s32.totalorder %s173, %s174
      %p185 = scmp.eq.s32.totalorder %s23, 0
      %p186 = por %p184, %p185
      %p187 = scmp.ne.s32.totalorder %s173, %s174
      %p188 = scmp.eq.s32.totalorder %s24, 7
      %p189 = por %p187, %p188
      %p191 = scmp.ne.s32.totalorder %s174, %s190
      %p192 = scmp.eq.s32.totalorder %s24, 0
      %p193 = por %p191, %p192
      %s195 = sadd.s32 %s194, 1
      %p198 = scmp.eq.s32.totalorder %s18, 7
      %p199 = scmp.ne.s32.totalorder %s194, %s196
      %p200 = scmp.eq.s32.totalorder %s18, 0
      %p201 = por %p199, %p200
      %p202 = scmp.ne.s32.totalorder %s194, %s196
      %p203 = scmp.eq.s32.totalorder %s23, 7
      %p204 = por %p202, %p203
      %p205 = scmp.ne.s32.totalorder %s196, %s197
      %p206 = scmp.eq.s32.totalorder %s23, 0
      %p207 = por %p205, %p206
      %p208 = scmp.ne.s32.totalorder %s196, %s197
      %p209 = scmp.eq.s32.totalorder %s24, 7
      %p210 = por %p208, %p209
      %p212 = scmp.ne.s32.totalorder %s197, %s211
      %p213 = scmp.eq.s32.totalorder %s24, 0
      %p214 = por %p212, %p213
      %s216 = sadd.s32 %s215, 1
      %p219 = scmp.eq.s32.totalorder %s18, 7
      %p220 = scmp.ne.s32.totalorder %s215, %s217
      %p221 = scmp.eq.s32.totalorder %s18, 0
      %p222 = por %p220, %p221
      %p223 = scmp.ne.s32.totalorder %s215, %s217
      %p224 = scmp.eq.s32.totalorder %s23, 7
      %p225 = por %p223, %p224
      %p226 = scmp.ne.s32.totalorder %s217, %s218
      %p227 = scmp.eq.s32.totalorder %s23, 0
      %p228 = por %p226, %p227
      %p229 = scmp.ne.s32.totalorder %s217, %s218
      %p230 = scmp.eq.s32.totalorder %s24, 7
      %p231 = por %p229, %p230
      %p233 = scmp.ne.s32.totalorder %s218, %s232
      %p234 = scmp.eq.s32.totalorder %s24, 0
      %p235 = por %p233, %p234
      %s237 = sadd.s32 %s236, 1
      %p240 = scmp.eq.s32.totalorder %s18, 7
      %p241 = scmp.ne.s32.totalorder %s236, %s238
      %p242 = scmp.eq.s32.totalorder %s18, 0
      %p243 = por %p241, %p242
      %p244 = scmp.ne.s32.totalorder %s236, %s238
      %p245 = scmp.eq.s32.totalorder %s23, 7
      %p246 = por %p244, %p245
      %p247 = scmp.ne.s32.totalorder %s238, %s239
      %p248 = scmp.eq.s32.totalorder %s23, 0
      %p249 = por %p247, %p248
      %p250 = scmp.ne.s32.totalorder %s238, %s239
      %p251 = scmp.eq.s32.totalorder %s24, 7
      %p252 = por %p250, %p251
      %p254 = scmp.ne.s32.totalorder %s239, %s253
      %p255 = scmp.eq.s32.totalorder %s24, 0
      %p256 = por %p254, %p255
      %s257 = ssub.s32 %s25, %s37
      %p258 = scmp.eq.s32.totalorder %s257, 0
      %s260 = sadd.s32 %s259, 1
      %s261 = scalar_select %p258, %s259, %s260
      %p264 = pneg %p258
      %p265 = scmp.eq.s32.totalorder %s18, 7
      %p266 = por %p264, %p265
      %p267 = scmp.ne.s32.totalorder %s259, %s262
      %p268 = scmp.eq.s32.totalorder %s18, 0
      %p269 = por %p267, %p268
      %p270 = scmp.ne.s32.totalorder %s259, %s262
      %p271 = scmp.eq.s32.totalorder %s23, 7
      %p272 = por %p270, %p271
      %p273 = scmp.ne.s32.totalorder %s262, %s263
      %p274 = scmp.eq.s32.totalorder %s23, 0
      %p275 = por %p273, %p274
      %p276 = scmp.ne.s32.totalorder %s262, %s263
      %p277 = scmp.eq.s32.totalorder %s24, 7
      %p278 = por %p276, %p277
      %p280 = scmp.ne.s32.totalorder %s263, %s279
      %p281 = scmp.eq.s32.totalorder %s24, 0
      %p282 = por %p280, %p281
      %p283 = scmp.le.s32.totalorder 1, %s18
      %p284 = scmp.lt.s32.totalorder %s18, 9
      %p285 = pnand %p283, %p284
      %p286 = pneg %p285
      // Predicated region
      $region9: #{tpu_custom_call.1} parent=5 // pred_check
        _
      $region10: #{tpu_custom_call.1} parent=5 // pred_check_branch
        %288 = sbr.rel (%p285) target = $region12
      $region11: #{tpu_custom_call.1} parent=5 // pred_region
        %s289 = ssub.s32 %s18, 1
        // Predicated region
        $region13: #{tpu_custom_call.1} parent=11 // pred_check
          %p290 = pneg %p207
        $region14: #{tpu_custom_call.1} parent=11 // pred_check_branch
          %292 = sbr.rel (%p290) target = $region16
        $region15: #{tpu_custom_call.1} parent=11 // pred_region
          _
        $region16: #{tpu_custom_call.1} parent=11 // pred_fallthru
          _
        // Predicated region
        $region17: #{tpu_custom_call.1} parent=11 // pred_check
          %p293 = pneg %p228
        $region18: #{tpu_custom_call.1} parent=11 // pred_check_branch
          %295 = sbr.rel (%p293) target = $region20
        $region19: #{tpu_custom_call.1} parent=11 // pred_region
          _
        $region20: #{tpu_custom_call.1} parent=11 // pred_fallthru
          _
        // Predicated region
        $region21: #{tpu_custom_call.1} parent=11 // pred_check
          %p296 = pneg %p249
        $region22: #{tpu_custom_call.1} parent=11 // pred_check_branch
          %298 = sbr.rel (%p296) target = $region24
        $region23: #{tpu_custom_call.1} parent=11 // pred_region
          _
        $region24: #{tpu_custom_call.1} parent=11 // pred_fallthru
          _
      $region12: #{tpu_custom_call.1} parent=5 // pred_fallthru
        _
      %p299 = scmp.lt.s32.totalorder %s18, 8
      // Predicated region
      $region25: #{tpu_custom_call.1} parent=5 // pred_check
        %p300 = pneg %p299
      $region26: #{tpu_custom_call.1} parent=5 // pred_check_branch
        %302 = sbr.rel (%p300) target = $region28
      $region27: #{tpu_custom_call.1} parent=5 // pred_region
        // Predicated region
        $region29: #{tpu_custom_call.1} parent=27 // pred_check
          %p303 = pneg %p50
        $region30: #{tpu_custom_call.1} parent=27 // pred_check_branch
          %305 = sbr.rel (%p303) target = $region32
        $region31: #{tpu_custom_call.1} parent=27 // pred_region
          %p306 = scmp.lt.s32.totalorder %s25, 1
          %s307 = scalar_select %p306, %s25, 1
          %s308 = smul.addr %s307, 16
          %s309 = smul.addr %s308, 8
          %s310 = scalar_lea.vmem %s0, %s309
        $region32: #{tpu_custom_call.1} parent=27 // pred_fallthru
          _
        // Predicated region
        $region33: #{tpu_custom_call.1} parent=27 // pred_check
          %p311 = pneg %p76
        $region34: #{tpu_custom_call.1} parent=27 // pred_check_branch
          %313 = sbr.rel (%p311) target = $region36
        $region35: #{tpu_custom_call.1} parent=27 // pred_region
          %p314 = scmp.lt.s32.totalorder %s26, 3
          %s315 = scalar_select %p314, %s26, 3
          %s316 = smul.addr %s315, 16
          %s317 = smul.addr %s316, 4
          %s318 = scalar_lea.vmem %s1, %s317
        $region36: #{tpu_custom_call.1} parent=27 // pred_fallthru
          _
        // Predicated region
        $region37: #{tpu_custom_call.1} parent=27 // pred_check
          %p319 = pneg %p102
        $region38: #{tpu_custom_call.1} parent=27 // pred_check_branch
          %321 = sbr.rel (%p319) target = $region40
        $region39: #{tpu_custom_call.1} parent=27 // pred_region
          %p322 = scmp.lt.s32.totalorder %s26, 3
          %s323 = scalar_select %p322, %s26, 3
          %s324 = smul.addr %s323, 4
          %s325 = smul.addr %s324, 4
          %s326 = scalar_lea.vmem %s2, %s325
        $region40: #{tpu_custom_call.1} parent=27 // pred_fallthru
          _
        // Predicated region
        $region41: #{tpu_custom_call.1} parent=27 // pred_check
          %p327 = pneg %p128
        $region42: #{tpu_custom_call.1} parent=27 // pred_check_branch
          %329 = sbr.rel (%p327) target = $region44
        $region43: #{tpu_custom_call.1} parent=27 // pred_region
          %p330 = scmp.lt.s32.totalorder %s26, 3
          %s331 = scalar_select %p330, %s26, 3
          %s332 = scalar_lea.vmem %s3, %s331
        $region44: #{tpu_custom_call.1} parent=27 // pred_fallthru
          _
        // Predicated region
        $region45: #{tpu_custom_call.1} parent=27 // pred_check
          %p333 = pneg %p154
        $region46: #{tpu_custom_call.1} parent=27 // pred_check_branch
          %335 = sbr.rel (%p333) target = $region48
        $region47: #{tpu_custom_call.1} parent=27 // pred_region
          %p336 = scmp.lt.s32.totalorder %s26, 3
          %s337 = scalar_select %p336, %s26, 3
          %s338 = smul.addr %s337, 16
          %s339 = smul.addr %s338, 4
          %s340 = scalar_lea.vmem %s4, %s339
        $region48: #{tpu_custom_call.1} parent=27 // pred_fallthru
          _
        // Predicated region
        $region49: #{tpu_custom_call.1} parent=27 // pred_check
          %p341 = pneg %p180
        $region50: #{tpu_custom_call.1} parent=27 // pred_check_branch
          %343 = sbr.rel (%p341) target = $region52
        $region51: #{tpu_custom_call.1} parent=27 // pred_region
          %p344 = scmp.lt.s32.totalorder %s26, 3
          %s345 = scalar_select %p344, %s26, 3
          %s346 = scalar_lea.vmem %s5, %s345
        $region52: #{tpu_custom_call.1} parent=27 // pred_fallthru
          _
      $region28: #{tpu_custom_call.1} parent=5 // pred_fallthru
        _
      %p347 = scmp.le.s32.totalorder 1, %s18
      %p348 = scmp.lt.s32.totalorder %s18, 9
      %p349 = pnand %p347, %p348
      %p350 = pneg %p349
      // Predicated region
      $region53: #{tpu_custom_call.1} parent=5 // pred_check
        _
      $region54: #{tpu_custom_call.1} parent=5 // pred_check_branch
        %352 = sbr.rel (%p349) target = $region56
      $region55: #{tpu_custom_call.1} parent=5 // pred_region
        %s353 = ssub.s32 %s18, 1
        %p354 = scmp.lt.s32.totalorder %s27, 1
        %s355 = scalar_select %p354, %s27, 1
        %s356 = smul.addr %s355, 16
        %s357 = smul.addr %s356, 8
        %s358 = scalar_lea.vmem %s0, %s357
        %p359 = pneg %p56
        %p360 = pneg %p53
        %p361 = scmp.lt.s32.totalorder %s28, 3
        %s362 = scalar_select %p361, %s28, 3
        %s363 = smul.addr %s362, 16
        %s364 = smul.addr %s363, 4
        %s365 = scalar_lea.vmem %s1, %s364
        %p366 = pneg %p82
        %p367 = pneg %p79
        %p368 = scmp.lt.s32.totalorder %s28, 3
        %s369 = scalar_select %p368, %s28, 3
        %s370 = smul.addr %s369, 4
        %s371 = smul.addr %s370, 4
        %s372 = scalar_lea.vmem %s2, %s371
        %p373 = pneg %p108
        %p374 = pneg %p105
        %p375 = scmp.lt.s32.totalorder %s28, 3
        %s376 = scalar_select %p375, %s28, 3
        %s377 = scalar_lea.vmem %s3, %s376
        %p378 = pneg %p134
        %p379 = pneg %p131
        %p380 = scmp.lt.s32.totalorder %s28, 3
        %s381 = scalar_select %p380, %s28, 3
        %s382 = smul.addr %s381, 16
        %s383 = smul.addr %s382, 4
        %s384 = scalar_lea.vmem %s4, %s383
        %p385 = pneg %p160
        %p386 = pneg %p157
        %p387 = scmp.lt.s32.totalorder %s28, 3
        %s388 = scalar_select %p387, %s28, 3
        %s389 = scalar_lea.vmem %s5, %s388
        %p390 = pneg %p186
        %p391 = pneg %p183
        %p392 = pneg %p207
        %p393 = pneg %p204
        %p394 = pneg %p228
        %p395 = pneg %p225
        %p396 = pneg %p249
        %p397 = pneg %p246
        %p398 = pneg %p275
        %p399 = pneg %p272
        %s400 = sand.u32 %s262, 1
        %s401 = scalar_lea.sflag [#allocation4], %s400
        %s402 = sand.u32 %s262, 1
        %s403 = smul.addr %s402, 128
        %s404 = scalar_lea.vmem [#allocation3], %s403
        %p405 = scmp.lt.s32.totalorder %s27, 1
        %s406 = scalar_select %p405, %s27, 1
        %s407 = smul.addr %s406, 16
        %s408 = smul.addr %s407, 8
        %s409 = scalar_lea.vmem %s0, %s408
        %p410 = scmp.lt.s32.totalorder %s28, 3
        %s411 = scalar_select %p410, %s28, 3
        %s412 = smul.addr %s411, 16
        %s413 = smul.addr %s412, 4
        %s414 = scalar_lea.vmem %s1, %s413
        %p415 = scmp.lt.s32.totalorder %s28, 3
        %s416 = scalar_select %p415, %s28, 3
        %s417 = smul.addr %s416, 4
        %s418 = smul.addr %s417, 4
        %s419 = scalar_lea.vmem %s2, %s418
        %p420 = scmp.lt.s32.totalorder %s28, 3
        %s421 = scalar_select %p420, %s28, 3
        %s422 = scalar_lea.vmem %s3, %s421
        %p423 = scmp.lt.s32.totalorder %s28, 3
        %s424 = scalar_select %p423, %s28, 3
        %s425 = smul.addr %s424, 16
        %s426 = smul.addr %s425, 4
        %s427 = scalar_lea.vmem %s4, %s426
        %p428 = scmp.lt.s32.totalorder %s28, 3
        %s429 = scalar_select %p428, %s28, 3
        %s430 = scalar_lea.vmem %s5, %s429
        %p432 = scmp.eq.s32.totalorder %s28, 0
        // Predicated region
        $region57: #{tpu_custom_call.1} parent=55 // pred_check
          %p433 = pneg %p432
        $region58: #{tpu_custom_call.1} parent=55 // pred_check_branch
          %435 = sbr.rel (%p433) target = $region60
        $region59: #{tpu_custom_call.1} parent=55 // pred_region
          %436 = vst [vmem:[#allocation2] sm:$0xff] 0.0
          %437 = vst [vmem:[#allocation2 + $0x8] sm:$0xff] 0.0
          %438 = vst [vmem:[#allocation2 + $0x10] sm:$0xff] 0.0
          %439 = vst [vmem:[#allocation2 + $0x18] sm:$0xff] 0.0
          %440 = vst [vmem:[#allocation2 + $0x20] sm:$0xff] 0.0
          %441 = vst [vmem:[#allocation2 + $0x28] sm:$0xff] 0.0
          %442 = vst [vmem:[#allocation2 + $0x30] sm:$0xff] 0.0
          %443 = vst [vmem:[#allocation2 + $0x38] sm:$0xff] 0.0
          %444 = vst [vmem:[#allocation2 + $0x40] sm:$0xff] 0.0
          %445 = vst [vmem:[#allocation2 + $0x48] sm:$0xff] 0.0
          %446 = vst [vmem:[#allocation2 + $0x50] sm:$0xff] 0.0
          %447 = vst [vmem:[#allocation2 + $0x58] sm:$0xff] 0.0
          %448 = vst [vmem:[#allocation2 + $0x60] sm:$0xff] 0.0
          %449 = vst [vmem:[#allocation2 + $0x68] sm:$0xff] 0.0
          %450 = vst [vmem:[#allocation2 + $0x70] sm:$0xff] 0.0
          %451 = vst [vmem:[#allocation2 + $0x78] sm:$0xff] 0.0
        $region60: #{tpu_custom_call.1} parent=55 // pred_fallthru
          _
        %v452 = vld [vmem:[%s409] sm:$0xff]
        %v453 = vld [vmem:[%s409 + $0x8] sm:$0xff]
        %v454 = vld [vmem:[%s409 + $0x10] sm:$0xff]
        %v455 = vld [vmem:[%s409 + $0x18] sm:$0xff]
        %v456 = vld [vmem:[%s409 + $0x20] sm:$0xff]
        %v457 = vld [vmem:[%s409 + $0x28] sm:$0xff]
        %v458 = vld [vmem:[%s409 + $0x30] sm:$0xff]
        %v459 = vld [vmem:[%s409 + $0x38] sm:$0xff]
        %v460 = vld [vmem:[%s409 + $0x40] sm:$0xff]
        %v461 = vld [vmem:[%s409 + $0x48] sm:$0xff]
        %v462 = vld [vmem:[%s409 + $0x50] sm:$0xff]
        %v463 = vld [vmem:[%s409 + $0x58] sm:$0xff]
        %v464 = vld [vmem:[%s409 + $0x60] sm:$0xff]
        %v465 = vld [vmem:[%s409 + $0x68] sm:$0xff]
        %v466 = vld [vmem:[%s409 + $0x70] sm:$0xff]
        %v467 = vld [vmem:[%s409 + $0x78] sm:$0xff]
        %v468 = vpack.c.bf16 %v453, %v452
        %v469 = vpack.c.bf16 %v455, %v454
        %v470 = vpack.c.bf16 %v457, %v456
        %v471 = vpack.c.bf16 %v459, %v458
        %v472 = vpack.c.bf16 %v461, %v460
        %v473 = vpack.c.bf16 %v463, %v462
        %v474 = vpack.c.bf16 %v465, %v464
        %v475 = vpack.c.bf16 %v467, %v466
        %v476 = vld [vmem:[%s414] sm:$0xf]
        %v477 = vld [vmem:[%s414 + $0x4] sm:$0xf]
        %v478 = vld [vmem:[%s414 + $0x8] sm:$0xf]
        %v479 = vld [vmem:[%s414 + $0xc] sm:$0xf]
        %v480 = vld [vmem:[%s414 + $0x10] sm:$0xf]
        %v481 = vld [vmem:[%s414 + $0x14] sm:$0xf]
        %v482 = vld [vmem:[%s414 + $0x18] sm:$0xf]
        %v483 = vld [vmem:[%s414 + $0x1c] sm:$0xf]
        %v484 = vld [vmem:[%s414 + $0x20] sm:$0xf]
        %v485 = vld [vmem:[%s414 + $0x24] sm:$0xf]
        %v486 = vld [vmem:[%s414 + $0x28] sm:$0xf]
        %v487 = vld [vmem:[%s414 + $0x2c] sm:$0xf]
        %v488 = vld [vmem:[%s414 + $0x30] sm:$0xf]
        %v489 = vld [vmem:[%s414 + $0x34] sm:$0xf]
        %v490 = vld [vmem:[%s414 + $0x38] sm:$0xf]
        %v491 = vld [vmem:[%s414 + $0x3c] sm:$0xf]
        %v508 = vunpack.c.l.b16 %v476
        %v509 = vunpack.c.l.b16 %v477
        %v510 = vunpack.c.l.b16 %v478
        %v511 = vunpack.c.l.b16 %v479
        %v512 = vunpack.c.l.b16 %v480
        %v513 = vunpack.c.l.b16 %v481
        %v514 = vunpack.c.l.b16 %v482
        %v515 = vunpack.c.l.b16 %v483
        %v516 = vunpack.c.l.b16 %v484
        %v517 = vunpack.c.l.b16 %v485
        %v518 = vunpack.c.l.b16 %v486
        %v519 = vunpack.c.l.b16 %v487
        %v520 = vunpack.c.l.b16 %v488
        %v521 = vunpack.c.l.b16 %v489
        %v522 = vunpack.c.l.b16 %v490
        %v523 = vunpack.c.l.b16 %v491
        %v524 = vpack.c.b16 %v509, %v508
        %v525 = vpack.c.b16 %v511, %v510
        %v526 = vpack.c.b16 %v513, %v512
        %v527 = vpack.c.b16 %v515, %v514
        %v528 = vpack.c.b16 %v517, %v516
        %v529 = vpack.c.b16 %v519, %v518
        %v530 = vpack.c.b16 %v521, %v520
        %v531 = vpack.c.b16 %v523, %v522
        %540 = vmatprep.subr.bf16.mxu0 0
        %541 = vmatpush1.bf16.msra.mxu0 %v524
        %542 = vmatprep.subr.bf16.mxu0 0
        %543 = vmatpush1.bf16.msra.mxu0 %v525
        %544 = vmatprep.subr.bf16.mxu0 0
        %545 = vmatpush1.bf16.msra.mxu0 %v526
        %546 = vmatprep.subr.bf16.mxu0 0
        %547 = vmatpush1.bf16.msra.mxu0 %v527
        %548 = vmatprep.subr.bf16.mxu0 0
        %549 = vmatpush1.bf16.msra.mxu0 %v528
        %550 = vmatprep.subr.bf16.mxu0 0
        %551 = vmatpush1.bf16.msra.mxu0 %v529
        %552 = vmatprep.subr.bf16.mxu0 0
        %553 = vmatpush1.bf16.msra.mxu0 %v530
        %554 = vmatprep.subr.bf16.mxu0 0
        %555 = vmatpush1.bf16.msra.mxu0 %v531
        %556 = vmatprep.subr.bf16.mxu0 0
        %557 = vmatpush1.bf16.msra.mxu0 0
        %558 = vmatprep.subr.bf16.mxu0 0
        %559 = vmatpush1.bf16.msra.mxu0 0
        %560 = vmatprep.subr.bf16.mxu0 0
        %561 = vmatpush1.bf16.msra.mxu0 0
        %562 = vmatprep.subr.bf16.mxu0 0
        %563 = vmatpush1.bf16.msra.mxu0 0
        %564 = vmatprep.subr.bf16.mxu0 0
        %565 = vmatpush1.bf16.msra.mxu0 0
        %566 = vmatprep.subr.bf16.mxu0 0
        %567 = vmatpush1.bf16.msra.mxu0 0
        %568 = vmatprep.subr.bf16.mxu0 0
        %569 = vmatpush1.bf16.msra.mxu0 0
        %570 = vmatprep.subr.bf16.mxu0 0
        %571 = vmatpush1.bf16.msra.mxu0 0
        %572 = vmatprep.mubr.bf16.mxu0 0
        %573 = vmatmul.mubr.bf16.gmra.mrb[0].mxu0 %v468
        %v574 = vpop.f32.mrb[0].mxu0
        %v575 = vadd.f32 0.0, %v574
        %v576 = vpop.f32.mrb[0].mxu0
        %v577 = vpop.f32.mrb[0].mxu0
        %v578 = vadd.f32 0.0, %v577
        %v579 = vpop.f32.mrb[0].mxu0
        %580 = vmatprep.mubr.bf16.mxu0 0
        %581 = vmatmul.mubr.bf16.gmra.mrb[0].mxu0 %v469
        %v582 = vpop.f32.mrb[0].mxu0
        %v583 = vadd.f32 0.0, %v582
        %v584 = vpop.f32.mrb[0].mxu0
        %v585 = vpop.f32.mrb[0].mxu0
        %v586 = vadd.f32 0.0, %v585
        %v587 = vpop.f32.mrb[0].mxu0
        %588 = vmatprep.mubr.bf16.mxu0 0
        %589 = vmatmul.mubr.bf16.gmra.mrb[0].mxu0 %v470
        %v590 = vpop.f32.mrb[0].mxu0
        %v591 = vadd.f32 0.0, %v590
        %v592 = vpop.f32.mrb[0].mxu0
        %v593 = vpop.f32.mrb[0].mxu0
        %v594 = vadd.f32 0.0, %v593
        %v595 = vpop.f32.mrb[0].mxu0
        %596 = vmatprep.mubr.bf16.mxu0 0
        %597 = vmatmul.mubr.bf16.gmra.mrb[0].mxu0 %v471
        %v598 = vpop.f32.mrb[0].mxu0
        %v599 = vadd.f32 0.0, %v598
        %v600 = vpop.f32.mrb[0].mxu0
        %v601 = vpop.f32.mrb[0].mxu0
        %v602 = vadd.f32 0.0, %v601
        %v603 = vpop.f32.mrb[0].mxu0
        %604 = vmatprep.mubr.bf16.mxu0 0
        %605 = vmatmul.mubr.bf16.gmra.mrb[0].mxu0 %v472
        %v606 = vpop.f32.mrb[0].mxu0
        %v607 = vadd.f32 0.0, %v606
        %v608 = vpop.f32.mrb[0].mxu0
        %v609 = vpop.f32.mrb[0].mxu0
        %v610 = vadd.f32 0.0, %v609
        %v611 = vpop.f32.mrb[0].mxu0
        %612 = vmatprep.mubr.bf16.mxu0 0
        %613 = vmatmul.mubr.bf16.gmra.mrb[0].mxu0 %v473
        %v614 = vpop.f32.mrb[0].mxu0
        %v615 = vadd.f32 0.0, %v614
        %v616 = vpop.f32.mrb[0].mxu0
        %v617 = vpop.f32.mrb[0].mxu0
        %v618 = vadd.f32 0.0, %v617
        %v619 = vpop.f32.mrb[0].mxu0
        %620 = vmatprep.mubr.bf16.mxu0 0
        %621 = vmatmul.mubr.bf16.gmra.mrb[0].mxu0 %v474
        %v622 = vpop.f32.mrb[0].mxu0
        %v623 = vadd.f32 0.0, %v622
        %v624 = vpop.f32.mrb[0].mxu0
        %v625 = vpop.f32.mrb[0].mxu0
        %v626 = vadd.f32 0.0, %v625
        %v627 = vpop.f32.mrb[0].mxu0
        %628 = vmatprep.mubr.bf16.mxu0 0
        %629 = vmatmul.mubr.bf16.gmra.mrb[0].mxu0 %v475
        %v630 = vpop.f32.mrb[0].mxu0
        %v631 = vadd.f32 0.0, %v630
        %v632 = vpop.f32.mrb[0].mxu0
        %v633 = vpop.f32.mrb[0].mxu0
        %v634 = vadd.f32 0.0, %v633
        %v635 = vpop.f32.mrb[0].mxu0
        %636 = vdwg.mxu0
        %v637 = vld [vmem:[%s422] sm:$0x1]
        %v639 = vlaneseq
        %v640 = vshrl.u32 %v639, 7
        %v641 = vsub.s32 0, %v640
        %v642 = vrot.slane %v637, %v641
        %v644 = vadd.f32 %v575, %v642
        %v645 = vadd.f32 %v578, %v642
        %v646 = vadd.f32 %v583, %v642
        %v647 = vadd.f32 %v586, %v642
        %v648 = vadd.f32 %v591, %v642
        %v649 = vadd.f32 %v594, %v642
        %v650 = vadd.f32 %v599, %v642
        %v651 = vadd.f32 %v602, %v642
        %v652 = vadd.f32 %v607, %v642
        %v653 = vadd.f32 %v610, %v642
        %v654 = vadd.f32 %v615, %v642
        %v655 = vadd.f32 %v618, %v642
        %v656 = vadd.f32 %v623, %v642
        %v657 = vadd.f32 %v626, %v642
        %v658 = vadd.f32 %v631, %v642
        %v659 = vadd.f32 %v634, %v642
        %v660 = vpack.c.bf16 %v645, %v644
        %v661 = vpack.c.bf16 %v647, %v646
        %v662 = vpack.c.bf16 %v649, %v648
        %v663 = vpack.c.bf16 %v651, %v650
        %v664 = vpack.c.bf16 %v653, %v652
        %v665 = vpack.c.bf16 %v655, %v654
        %v666 = vpack.c.bf16 %v657, %v656
        %v667 = vpack.c.bf16 %v659, %v658
        %v668 = vpack.c.bf16 %v578, %v575
        %v669 = vpack.c.bf16 %v586, %v583
        %v670 = vpack.c.bf16 %v594, %v591
        %v671 = vpack.c.bf16 %v602, %v599
        %v672 = vpack.c.bf16 %v610, %v607
        %v673 = vpack.c.bf16 %v618, %v615
        %v674 = vpack.c.bf16 %v626, %v623
        %v675 = vpack.c.bf16 %v634, %v631
        %v676 = vld [vmem:[%s427] sm:$0xf]
        %v677 = vld [vmem:[%s427 + $0x4] sm:$0xf]
        %v678 = vld [vmem:[%s427 + $0x8] sm:$0xf]
        %v679 = vld [vmem:[%s427 + $0xc] sm:$0xf]
        %v680 = vld [vmem:[%s427 + $0x10] sm:$0xf]
        %v681 = vld [vmem:[%s427 + $0x14] sm:$0xf]
        %v682 = vld [vmem:[%s427 + $0x18] sm:$0xf]
        %v683 = vld [vmem:[%s427 + $0x1c] sm:$0xf]
        %v684 = vld [vmem:[%s427 + $0x20] sm:$0xf]
        %v685 = vld [vmem:[%s427 + $0x24] sm:$0xf]
        %v686 = vld [vmem:[%s427 + $0x28] sm:$0xf]
        %v687 = vld [vmem:[%s427 + $0x2c] sm:$0xf]
        %v688 = vld [vmem:[%s427 + $0x30] sm:$0xf]
        %v689 = vld [vmem:[%s427 + $0x34] sm:$0xf]
        %v690 = vld [vmem:[%s427 + $0x38] sm:$0xf]
        %v691 = vld [vmem:[%s427 + $0x3c] sm:$0xf]
        %v692 = vld [vmem:[%s430] sm:$0x1]
        %v694 = vlaneseq
        %v695 = vshrl.u32 %v694, 7
        %v696 = vsub.s32 0, %v695
        %v697 = vrot.slane %v692, %v696
        %v715 = vunpack.c.l.b16 %v676
        %v716 = vunpack.c.l.b16 %v677
        %v717 = vunpack.c.l.b16 %v678
        %v718 = vunpack.c.l.b16 %v679
        %v719 = vunpack.c.l.b16 %v680
        %v720 = vunpack.c.l.b16 %v681
        %v721 = vunpack.c.l.b16 %v682
        %v722 = vunpack.c.l.b16 %v683
        %v723 = vunpack.c.l.b16 %v684
        %v724 = vunpack.c.l.b16 %v685
        %v725 = vunpack.c.l.b16 %v686
        %v726 = vunpack.c.l.b16 %v687
        %v727 = vunpack.c.l.b16 %v688
        %v728 = vunpack.c.l.b16 %v689
        %v729 = vunpack.c.l.b16 %v690
        %v730 = vunpack.c.l.b16 %v691
        %v731 = vpack.c.b16 %v716, %v715
        %v732 = vpack.c.b16 %v718, %v717
        %v733 = vpack.c.b16 %v720, %v719
        %v734 = vpack.c.b16 %v722, %v721
        %v735 = vpack.c.b16 %v724, %v723
        %v736 = vpack.c.b16 %v726, %v725
        %v737 = vpack.c.b16 %v728, %v727
        %v738 = vpack.c.b16 %v730, %v729
        %vm739 = vcmask 261120
        %v741 = vsel %vm739, %v668, 0
        %v744 = vsel %vm739, %v669, 0
        %v747 = vsel %vm739, %v670, 0
        %v750 = vsel %vm739, %v671, 0
        %v753 = vsel %vm739, %v672, 0
        %v756 = vsel %vm739, %v673, 0
        %v759 = vsel %vm739, %v674, 0
        %v762 = vsel %vm739, %v675, 0
        %v765 = vsel %vm739, %v731, 0
        %v768 = vsel %vm739, %v732, 0
        %v771 = vsel %vm739, %v733, 0
        %v774 = vsel %vm739, %v734, 0
        %v777 = vsel %vm739, %v735, 0
        %v780 = vsel %vm739, %v736, 0
        %v783 = vsel %vm739, %v737, 0
        %v786 = vsel %vm739, %v738, 0
        %788 = vmatprep.subr.bf16.mxu0 0
        %789 = vmatpush1.bf16.xpose.msra.mxu0 %v765
        %790 = vmatprep.subr.bf16.mxu0 0
        %791 = vmatpush1.bf16.xpose.msra.mxu0 %v768
        %792 = vmatprep.subr.bf16.mxu0 0
        %793 = vmatpush1.bf16.xpose.msra.mxu0 %v771
        %794 = vmatprep.subr.bf16.mxu0 0
        %795 = vmatpush1.bf16.xpose.msra.mxu0 %v774
        %796 = vmatprep.subr.bf16.mxu0 0
        %797 = vmatpush1.bf16.xpose.msra.mxu0 %v777
        %798 = vmatprep.subr.bf16.mxu0 0
        %799 = vmatpush1.bf16.xpose.msra.mxu0 %v780
        %800 = vmatprep.subr.bf16.mxu0 0
        %801 = vmatpush1.bf16.xpose.msra.mxu0 %v783
        %802 = vmatprep.subr.bf16.mxu0 0
        %803 = vmatpush1.bf16.xpose.msra.mxu0 %v786
        %804 = vmatprep.subr.bf16.mxu0 0
        %805 = vmatpush1.bf16.xpose.msra.mxu0 0
        %806 = vmatprep.subr.bf16.mxu0 0
        %807 = vmatpush1.bf16.xpose.msra.mxu0 0
        %808 = vmatprep.subr.bf16.mxu0 0
        %809 = vmatpush1.bf16.xpose.msra.mxu0 0
        %810 = vmatprep.subr.bf16.mxu0 0
        %811 = vmatpush1.bf16.xpose.msra.mxu0 0
        %812 = vmatprep.subr.bf16.mxu0 0
        %813 = vmatpush1.bf16.xpose.msra.mxu0 0
        %814 = vmatprep.subr.bf16.mxu0 0
        %815 = vmatpush1.bf16.xpose.msra.mxu0 0
        %816 = vmatprep.subr.bf16.mxu0 0
        %817 = vmatpush1.bf16.xpose.msra.mxu0 0
        %818 = vmatprep.subr.bf16.mxu0 0
        %819 = vmatpush1.bf16.xpose.msra.mxu0 0
        %820 = vmatprep.mubr.bf16.mxu0 0
        %821 = vmatmul.mubr.bf16.gmra.mrb[0].mxu0 %v741
        %v822 = vpop.f32.mrb[0].mxu0
        %v823 = vadd.f32 %v697, %v822
        %v824 = vpop.f32.mrb[0].mxu0
        %v825 = vpop.f32.mrb[0].mxu0
        %v826 = vadd.f32 %v697, %v825
        %v827 = vpop.f32.mrb[0].mxu0
        %828 = vmatprep.mubr.bf16.mxu0 0
        %829 = vmatmul.mubr.bf16.gmra.mrb[0].mxu0 %v744
        %v830 = vpop.f32.mrb[0].mxu0
        %v831 = vadd.f32 %v697, %v830
        %v832 = vpop.f32.mrb[0].mxu0
        %v833 = vpop.f32.mrb[0].mxu0
        %v834 = vadd.f32 %v697, %v833
        %v835 = vpop.f32.mrb[0].mxu0
        %836 = vmatprep.mubr.bf16.mxu0 0
        %837 = vmatmul.mubr.bf16.gmra.mrb[0].mxu0 %v747
        %v838 = vpop.f32.mrb[0].mxu0
        %v839 = vadd.f32 %v697, %v838
        %v840 = vpop.f32.mrb[0].mxu0
        %v841 = vpop.f32.mrb[0].mxu0
        %v842 = vadd.f32 %v697, %v841
        %v843 = vpop.f32.mrb[0].mxu0
        %844 = vmatprep.mubr.bf16.mxu0 0
        %845 = vmatmul.mubr.bf16.gmra.mrb[0].mxu0 %v750
        %v846 = vpop.f32.mrb[0].mxu0
        %v847 = vadd.f32 %v697, %v846
        %v848 = vpop.f32.mrb[0].mxu0
        %v849 = vpop.f32.mrb[0].mxu0
        %v850 = vadd.f32 %v697, %v849
        %v851 = vpop.f32.mrb[0].mxu0
        %852 = vmatprep.mubr.bf16.mxu0 0
        %853 = vmatmul.mubr.bf16.gmra.mrb[0].mxu0 %v753
        %v854 = vpop.f32.mrb[0].mxu0
        %v855 = vadd.f32 %v697, %v854
        %v856 = vpop.f32.mrb[0].mxu0
        %v857 = vpop.f32.mrb[0].mxu0
        %v858 = vadd.f32 %v697, %v857
        %v859 = vpop.f32.mrb[0].mxu0
        %860 = vmatprep.mubr.bf16.mxu0 0
        %861 = vmatmul.mubr.bf16.gmra.mrb[0].mxu0 %v756
        %v862 = vpop.f32.mrb[0].mxu0
        %v863 = vadd.f32 %v697, %v862
        %v864 = vpop.f32.mrb[0].mxu0
        %v865 = vpop.f32.mrb[0].mxu0
        %v866 = vadd.f32 %v697, %v865
        %v867 = vpop.f32.mrb[0].mxu0
        %868 = vmatprep.mubr.bf16.mxu0 0
        %869 = vmatmul.mubr.bf16.gmra.mrb[0].mxu0 %v759
        %v870 = vpop.f32.mrb[0].mxu0
        %v871 = vadd.f32 %v697, %v870
        %v872 = vpop.f32.mrb[0].mxu0
        %v873 = vpop.f32.mrb[0].mxu0
        %v874 = vadd.f32 %v697, %v873
        %v875 = vpop.f32.mrb[0].mxu0
        %876 = vmatprep.mubr.bf16.mxu0 0
        %877 = vmatmul.mubr.bf16.gmra.mrb[0].mxu0 %v762
        %v878 = vpop.f32.mrb[0].mxu0
        %v879 = vadd.f32 %v697, %v878
        %v880 = vpop.f32.mrb[0].mxu0
        %v881 = vpop.f32.mrb[0].mxu0
        %v882 = vadd.f32 %v697, %v881
        %v883 = vpop.f32.mrb[0].mxu0
        %884 = vdwg.mxu0
        %901 = vrot.lane.b32.xlu0 %v823, 1
        %v902 = vpop.permute.xlu0 %901
        %903 = vrot.lane.b32.xlu0 %v826, 1
        %v904 = vpop.permute.xlu0 %903
        %905 = vrot.lane.b32.xlu0 %v831, 1
        %v906 = vpop.permute.xlu0 %905
        %907 = vrot.lane.b32.xlu0 %v834, 1
        %v908 = vpop.permute.xlu0 %907
        %909 = vrot.lane.b32.xlu0 %v839, 1
        %v910 = vpop.permute.xlu0 %909
        %911 = vrot.lane.b32.xlu0 %v842, 1
        %v912 = vpop.permute.xlu0 %911
        %913 = vrot.lane.b32.xlu0 %v847, 1
        %v914 = vpop.permute.xlu0 %913
        %915 = vrot.lane.b32.xlu0 %v850, 1
        %v916 = vpop.permute.xlu0 %915
        %917 = vrot.lane.b32.xlu0 %v855, 1
        %v918 = vpop.permute.xlu0 %917
        %919 = vrot.lane.b32.xlu0 %v858, 1
        %v920 = vpop.permute.xlu0 %919
        %921 = vrot.lane.b32.xlu0 %v863, 1
        %v922 = vpop.permute.xlu0 %921
        %923 = vrot.lane.b32.xlu0 %v866, 1
        %v924 = vpop.permute.xlu0 %923
        %925 = vrot.lane.b32.xlu0 %v871, 1
        %v926 = vpop.permute.xlu0 %925
        %927 = vrot.lane.b32.xlu0 %v874, 1
        %v928 = vpop.permute.xlu0 %927
        %929 = vrot.lane.b32.xlu0 %v879, 1
        %v930 = vpop.permute.xlu0 %929
        %931 = vrot.lane.b32.xlu0 %v882, 1
        %v932 = vpop.permute.xlu0 %931
        %v949 = vlaneseq
        %v950 = vshrl.u32 %v949, 7
        %v951 = vadd.s32 %v950, 8
        %v952 = vadd.s32 %v950, 16
        %v953 = vadd.s32 %v950, 24
        %v954 = vadd.s32 %v950, 32
        %v955 = vadd.s32 %v950, 40
        %v956 = vadd.s32 %v950, 48
        %v957 = vadd.s32 %v950, 56
        %v958 = vadd.s32 %v950, 64
        %v959 = vadd.s32 %v950, 72
        %v960 = vadd.s32 %v950, 80
        %v961 = vadd.s32 %v950, 88
        %v962 = vadd.s32 %v950, 96
        %v963 = vadd.s32 %v950, 104
        %v964 = vadd.s32 %v950, 112
        %v965 = vadd.s32 %v950, 120
        %982 = vrot.lane.b32.xlu0 %v902, 1
        %v983 = vpop.permute.xlu0 %982
        %984 = vrot.lane.b32.xlu0 %v904, 1
        %v985 = vpop.permute.xlu0 %984
        %986 = vrot.lane.b32.xlu0 %v906, 1
        %v987 = vpop.permute.xlu0 %986
        %988 = vrot.lane.b32.xlu0 %v908, 1
        %v989 = vpop.permute.xlu0 %988
        %990 = vrot.lane.b32.xlu0 %v910, 1
        %v991 = vpop.permute.xlu0 %990
        %992 = vrot.lane.b32.xlu0 %v912, 1
        %v993 = vpop.permute.xlu0 %992
        %994 = vrot.lane.b32.xlu0 %v914, 1
        %v995 = vpop.permute.xlu0 %994
        %996 = vrot.lane.b32.xlu0 %v916, 1
        %v997 = vpop.permute.xlu0 %996
        %998 = vrot.lane.b32.xlu0 %v918, 1
        %v999 = vpop.permute.xlu0 %998
        %1000 = vrot.lane.b32.xlu0 %v920, 1
        %v1001 = vpop.permute.xlu0 %1000
        %1002 = vrot.lane.b32.xlu0 %v922, 1
        %v1003 = vpop.permute.xlu0 %1002
        %1004 = vrot.lane.b32.xlu0 %v924, 1
        %v1005 = vpop.permute.xlu0 %1004
        %1006 = vrot.lane.b32.xlu0 %v926, 1
        %v1007 = vpop.permute.xlu0 %1006
        %1008 = vrot.lane.b32.xlu0 %v928, 1
        %v1009 = vpop.permute.xlu0 %1008
        %1010 = vrot.lane.b32.xlu0 %v930, 1
        %v1011 = vpop.permute.xlu0 %1010
        %1012 = vrot.lane.b32.xlu0 %v932, 1
        %v1013 = vpop.permute.xlu0 %1012
        %v1030 = vand.u32 %v950, 1
        %v1031 = vand.u32 %v951, 1
        %v1032 = vand.u32 %v952, 1
        %v1033 = vand.u32 %v953, 1
        %v1034 = vand.u32 %v954, 1
        %v1035 = vand.u32 %v955, 1
        %v1036 = vand.u32 %v956, 1
        %v1037 = vand.u32 %v957, 1
        %v1038 = vand.u32 %v958, 1
        %v1039 = vand.u32 %v959, 1
        %v1040 = vand.u32 %v960, 1
        %v1041 = vand.u32 %v961, 1
        %v1042 = vand.u32 %v962, 1
        %v1043 = vand.u32 %v963, 1
        %v1044 = vand.u32 %v964, 1
        %v1045 = vand.u32 %v965, 1
        %vm1046 = vcmp.eq.s32.totalorder %v1030, 1
        %vm1047 = vcmp.eq.s32.totalorder %v1031, 1
        %vm1048 = vcmp.eq.s32.totalorder %v1032, 1
        %vm1049 = vcmp.eq.s32.totalorder %v1033, 1
        %vm1050 = vcmp.eq.s32.totalorder %v1034, 1
        %vm1051 = vcmp.eq.s32.totalorder %v1035, 1
        %vm1052 = vcmp.eq.s32.totalorder %v1036, 1
        %vm1053 = vcmp.eq.s32.totalorder %v1037, 1
        %vm1054 = vcmp.eq.s32.totalorder %v1038, 1
        %vm1055 = vcmp.eq.s32.totalorder %v1039, 1
        %vm1056 = vcmp.eq.s32.totalorder %v1040, 1
        %vm1057 = vcmp.eq.s32.totalorder %v1041, 1
        %vm1058 = vcmp.eq.s32.totalorder %v1042, 1
        %vm1059 = vcmp.eq.s32.totalorder %v1043, 1
        %vm1060 = vcmp.eq.s32.totalorder %v1044, 1
        %vm1061 = vcmp.eq.s32.totalorder %v1045, 1
        %v1062 = vsel %vm1046, 1, 0
        %v1063 = vsel %vm1047, 1, 0
        %v1064 = vsel %vm1048, 1, 0
        %v1065 = vsel %vm1049, 1, 0
        %v1066 = vsel %vm1050, 1, 0
        %v1067 = vsel %vm1051, 1, 0
        %v1068 = vsel %vm1052, 1, 0
        %v1069 = vsel %vm1053, 1, 0
        %v1070 = vsel %vm1054, 1, 0
        %v1071 = vsel %vm1055, 1, 0
        %v1072 = vsel %vm1056, 1, 0
        %v1073 = vsel %vm1057, 1, 0
        %v1074 = vsel %vm1058, 1, 0
        %v1075 = vsel %vm1059, 1, 0
        %v1076 = vsel %vm1060, 1, 0
        %v1077 = vsel %vm1061, 1, 0
        %vm1078 = vcmp.eq.s32.totalorder %v1062, 1
        %vm1079 = vcmp.eq.s32.totalorder %v1063, 1
        %vm1080 = vcmp.eq.s32.totalorder %v1064, 1
        %vm1081 = vcmp.eq.s32.totalorder %v1065, 1
        %vm1082 = vcmp.eq.s32.totalorder %v1066, 1
        %vm1083 = vcmp.eq.s32.totalorder %v1067, 1
        %vm1084 = vcmp.eq.s32.totalorder %v1068, 1
        %vm1085 = vcmp.eq.s32.totalorder %v1069, 1
        %vm1086 = vcmp.eq.s32.totalorder %v1070, 1
        %vm1087 = vcmp.eq.s32.totalorder %v1071, 1
        %vm1088 = vcmp.eq.s32.totalorder %v1072, 1
        %vm1089 = vcmp.eq.s32.totalorder %v1073, 1
        %vm1090 = vcmp.eq.s32.totalorder %v1074, 1
        %vm1091 = vcmp.eq.s32.totalorder %v1075, 1
        %vm1092 = vcmp.eq.s32.totalorder %v1076, 1
        %vm1093 = vcmp.eq.s32.totalorder %v1077, 1
        %v1094 = vsel %vm1078, %v983, %v902
        %v1095 = vsel %vm1079, %v985, %v904
        %v1096 = vsel %vm1080, %v987, %v906
        %v1097 = vsel %vm1081, %v989, %v908
        %v1098 = vsel %vm1082, %v991, %v910
        %v1099 = vsel %vm1083, %v993, %v912
        %v1100 = vsel %vm1084, %v995, %v914
        %v1101 = vsel %vm1085, %v997, %v916
        %v1102 = vsel %vm1086, %v999, %v918
        %v1103 = vsel %vm1087, %v1001, %v920
        %v1104 = vsel %vm1088, %v1003, %v922
        %v1105 = vsel %vm1089, %v1005, %v924
        %v1106 = vsel %vm1090, %v1007, %v926
        %v1107 = vsel %vm1091, %v1009, %v928
        %v1108 = vsel %vm1092, %v1011, %v930
        %v1109 = vsel %vm1093, %v1013, %v932
        %1126 = vrot.lane.b32.xlu0 %v1094, 2
        %v1127 = vpop.permute.xlu0 %1126
        %1128 = vrot.lane.b32.xlu0 %v1095, 2
        %v1129 = vpop.permute.xlu0 %1128
        %1130 = vrot.lane.b32.xlu0 %v1096, 2
        %v1131 = vpop.permute.xlu0 %1130
        %1132 = vrot.lane.b32.xlu0 %v1097, 2
        %v1133 = vpop.permute.xlu0 %1132
        %1134 = vrot.lane.b32.xlu0 %v1098, 2
        %v1135 = vpop.permute.xlu0 %1134
        %1136 = vrot.lane.b32.xlu0 %v1099, 2
        %v1137 = vpop.permute.xlu0 %1136
        %1138 = vrot.lane.b32.xlu0 %v1100, 2
        %v1139 = vpop.permute.xlu0 %1138
        %1140 = vrot.lane.b32.xlu0 %v1101, 2
        %v1141 = vpop.permute.xlu0 %1140
        %1142 = vrot.lane.b32.xlu0 %v1102, 2
        %v1143 = vpop.permute.xlu0 %1142
        %1144 = vrot.lane.b32.xlu0 %v1103, 2
        %v1145 = vpop.permute.xlu0 %1144
        %1146 = vrot.lane.b32.xlu0 %v1104, 2
        %v1147 = vpop.permute.xlu0 %1146
        %1148 = vrot.lane.b32.xlu0 %v1105, 2
        %v1149 = vpop.permute.xlu0 %1148
        %1150 = vrot.lane.b32.xlu0 %v1106, 2
        %v1151 = vpop.permute.xlu0 %1150
        %1152 = vrot.lane.b32.xlu0 %v1107, 2
        %v1153 = vpop.permute.xlu0 %1152
        %1154 = vrot.lane.b32.xlu0 %v1108, 2
        %v1155 = vpop.permute.xlu0 %1154
        %1156 = vrot.lane.b32.xlu0 %v1109, 2
        %v1157 = vpop.permute.xlu0 %1156
        %v1174 = vshra.s32 %v950, 1
        %v1175 = vshra.s32 %v951, 1
        %v1176 = vshra.s32 %v952, 1
        %v1177 = vshra.s32 %v953, 1
        %v1178 = vshra.s32 %v954, 1
        %v1179 = vshra.s32 %v955, 1
        %v1180 = vshra.s32 %v956, 1
        %v1181 = vshra.s32 %v957, 1
        %v1182 = vshra.s32 %v958, 1
        %v1183 = vshra.s32 %v959, 1
        %v1184 = vshra.s32 %v960, 1
        %v1185 = vshra.s32 %v961, 1
        %v1186 = vshra.s32 %v962, 1
        %v1187 = vshra.s32 %v963, 1
        %v1188 = vshra.s32 %v964, 1
        %v1189 = vshra.s32 %v965, 1
        %v1190 = vand.u32 %v1174, 1
        %v1191 = vand.u32 %v1175, 1
        %v1192 = vand.u32 %v1176, 1
        %v1193 = vand.u32 %v1177, 1
        %v1194 = vand.u32 %v1178, 1
        %v1195 = vand.u32 %v1179, 1
        %v1196 = vand.u32 %v1180, 1
        %v1197 = vand.u32 %v1181, 1
        %v1198 = vand.u32 %v1182, 1
        %v1199 = vand.u32 %v1183, 1
        %v1200 = vand.u32 %v1184, 1
        %v1201 = vand.u32 %v1185, 1
        %v1202 = vand.u32 %v1186, 1
        %v1203 = vand.u32 %v1187, 1
        %v1204 = vand.u32 %v1188, 1
        %v1205 = vand.u32 %v1189, 1
        %vm1206 = vcmp.eq.s32.totalorder %v1190, 1
        %vm1207 = vcmp.eq.s32.totalorder %v1191, 1
        %vm1208 = vcmp.eq.s32.totalorder %v1192, 1
        %vm1209 = vcmp.eq.s32.totalorder %v1193, 1
        %vm1210 = vcmp.eq.s32.totalorder %v1194, 1
        %vm1211 = vcmp.eq.s32.totalorder %v1195, 1
        %vm1212 = vcmp.eq.s32.totalorder %v1196, 1
        %vm1213 = vcmp.eq.s32.totalorder %v1197, 1
        %vm1214 = vcmp.eq.s32.totalorder %v1198, 1
        %vm1215 = vcmp.eq.s32.totalorder %v1199, 1
        %vm1216 = vcmp.eq.s32.totalorder %v1200, 1
        %vm1217 = vcmp.eq.s32.totalorder %v1201, 1
        %vm1218 = vcmp.eq.s32.totalorder %v1202, 1
        %vm1219 = vcmp.eq.s32.totalorder %v1203, 1
        %vm1220 = vcmp.eq.s32.totalorder %v1204, 1
        %vm1221 = vcmp.eq.s32.totalorder %v1205, 1
        %v1222 = vsel %vm1206, 1, 0
        %v1223 = vsel %vm1207, 1, 0
        %v1224 = vsel %vm1208, 1, 0
        %v1225 = vsel %vm1209, 1, 0
        %v1226 = vsel %vm1210, 1, 0
        %v1227 = vsel %vm1211, 1, 0
        %v1228 = vsel %vm1212, 1, 0
        %v1229 = vsel %vm1213, 1, 0
        %v1230 = vsel %vm1214, 1, 0
        %v1231 = vsel %vm1215, 1, 0
        %v1232 = vsel %vm1216, 1, 0
        %v1233 = vsel %vm1217, 1, 0
        %v1234 = vsel %vm1218, 1, 0
        %v1235 = vsel %vm1219, 1, 0
        %v1236 = vsel %vm1220, 1, 0
        %v1237 = vsel %vm1221, 1, 0
        %vm1238 = vcmp.eq.s32.totalorder %v1222, 1
        %vm1239 = vcmp.eq.s32.totalorder %v1223, 1
        %vm1240 = vcmp.eq.s32.totalorder %v1224, 1
        %vm1241 = vcmp.eq.s32.totalorder %v1225, 1
        %vm1242 = vcmp.eq.s32.totalorder %v1226, 1
        %vm1243 = vcmp.eq.s32.totalorder %v1227, 1
        %vm1244 = vcmp.eq.s32.totalorder %v1228, 1
        %vm1245 = vcmp.eq.s32.totalorder %v1229, 1
        %vm1246 = vcmp.eq.s32.totalorder %v1230, 1
        %vm1247 = vcmp.eq.s32.totalorder %v1231, 1
        %vm1248 = vcmp.eq.s32.totalorder %v1232, 1
        %vm1249 = vcmp.eq.s32.totalorder %v1233, 1
        %vm1250 = vcmp.eq.s32.totalorder %v1234, 1
        %vm1251 = vcmp.eq.s32.totalorder %v1235, 1
        %vm1252 = vcmp.eq.s32.totalorder %v1236, 1
        %vm1253 = vcmp.eq.s32.totalorder %v1237, 1
        %v1254 = vsel %vm1238, %v1127, %v1094
        %v1255 = vsel %vm1239, %v1129, %v1095
        %v1256 = vsel %vm1240, %v1131, %v1096
        %v1257 = vsel %vm1241, %v1133, %v1097
        %v1258 = vsel %vm1242, %v1135, %v1098
        %v1259 = vsel %vm1243, %v1137, %v1099
        %v1260 = vsel %vm1244, %v1139, %v1100
        %v1261 = vsel %vm1245, %v1141, %v1101
        %v1262 = vsel %vm1246, %v1143, %v1102
        %v1263 = vsel %vm1247, %v1145, %v1103
        %v1264 = vsel %vm1248, %v1147, %v1104
        %v1265 = vsel %vm1249, %v1149, %v1105
        %v1266 = vsel %vm1250, %v1151, %v1106
        %v1267 = vsel %vm1251, %v1153, %v1107
        %v1268 = vsel %vm1252, %v1155, %v1108
        %v1269 = vsel %vm1253, %v1157, %v1109
        %1286 = vrot.lane.b32.xlu0 %v1254, 4
        %v1287 = vpop.permute.xlu0 %1286
        %1288 = vrot.lane.b32.xlu0 %v1255, 4
        %v1289 = vpop.permute.xlu0 %1288
        %1290 = vrot.lane.b32.xlu0 %v1256, 4
        %v1291 = vpop.permute.xlu0 %1290
        %1292 = vrot.lane.b32.xlu0 %v1257, 4
        %v1293 = vpop.permute.xlu0 %1292
        %1294 = vrot.lane.b32.xlu0 %v1258, 4
        %v1295 = vpop.permute.xlu0 %1294
        %1296 = vrot.lane.b32.xlu0 %v1259, 4
        %v1297 = vpop.permute.xlu0 %1296
        %1298 = vrot.lane.b32.xlu0 %v1260, 4
        %v1299 = vpop.permute.xlu0 %1298
        %1300 = vrot.lane.b32.xlu0 %v1261, 4
        %v1301 = vpop.permute.xlu0 %1300
        %1302 = vrot.lane.b32.xlu0 %v1262, 4
        %v1303 = vpop.permute.xlu0 %1302
        %1304 = vrot.lane.b32.xlu0 %v1263, 4
        %v1305 = vpop.permute.xlu0 %1304
        %1306 = vrot.lane.b32.xlu0 %v1264, 4
        %v1307 = vpop.permute.xlu0 %1306
        %1308 = vrot.lane.b32.xlu0 %v1265, 4
        %v1309 = vpop.permute.xlu0 %1308
        %1310 = vrot.lane.b32.xlu0 %v1266, 4
        %v1311 = vpop.permute.xlu0 %1310
        %1312 = vrot.lane.b32.xlu0 %v1267, 4
        %v1313 = vpop.permute.xlu0 %1312
        %1314 = vrot.lane.b32.xlu0 %v1268, 4
        %v1315 = vpop.permute.xlu0 %1314
        %1316 = vrot.lane.b32.xlu0 %v1269, 4
        %v1317 = vpop.permute.xlu0 %1316
        %v1334 = vshra.s32 %v950, 2
        %v1335 = vshra.s32 %v951, 2
        %v1336 = vshra.s32 %v952, 2
        %v1337 = vshra.s32 %v953, 2
        %v1338 = vshra.s32 %v954, 2
        %v1339 = vshra.s32 %v955, 2
        %v1340 = vshra.s32 %v956, 2
        %v1341 = vshra.s32 %v957, 2
        %v1342 = vshra.s32 %v958, 2
        %v1343 = vshra.s32 %v959, 2
        %v1344 = vshra.s32 %v960, 2
        %v1345 = vshra.s32 %v961, 2
        %v1346 = vshra.s32 %v962, 2
        %v1347 = vshra.s32 %v963, 2
        %v1348 = vshra.s32 %v964, 2
        %v1349 = vshra.s32 %v965, 2
        %v1350 = vand.u32 %v1334, 1
        %v1351 = vand.u32 %v1335, 1
        %v1352 = vand.u32 %v1336, 1
        %v1353 = vand.u32 %v1337, 1
        %v1354 = vand.u32 %v1338, 1
        %v1355 = vand.u32 %v1339, 1
        %v1356 = vand.u32 %v1340, 1
        %v1357 = vand.u32 %v1341, 1
        %v1358 = vand.u32 %v1342, 1
        %v1359 = vand.u32 %v1343, 1
        %v1360 = vand.u32 %v1344, 1
        %v1361 = vand.u32 %v1345, 1
        %v1362 = vand.u32 %v1346, 1
        %v1363 = vand.u32 %v1347, 1
        %v1364 = vand.u32 %v1348, 1
        %v1365 = vand.u32 %v1349, 1
        %vm1366 = vcmp.eq.s32.totalorder %v1350, 1
        %vm1367 = vcmp.eq.s32.totalorder %v1351, 1
        %vm1368 = vcmp.eq.s32.totalorder %v1352, 1
        %vm1369 = vcmp.eq.s32.totalorder %v1353, 1
        %vm1370 = vcmp.eq.s32.totalorder %v1354, 1
        %vm1371 = vcmp.eq.s32.totalorder %v1355, 1
        %vm1372 = vcmp.eq.s32.totalorder %v1356, 1
        %vm1373 = vcmp.eq.s32.totalorder %v1357, 1
        %vm1374 = vcmp.eq.s32.totalorder %v1358, 1
        %vm1375 = vcmp.eq.s32.totalorder %v1359, 1
        %vm1376 = vcmp.eq.s32.totalorder %v1360, 1
        %vm1377 = vcmp.eq.s32.totalorder %v1361, 1
        %vm1378 = vcmp.eq.s32.totalorder %v1362, 1
        %vm1379 = vcmp.eq.s32.totalorder %v1363, 1
        %vm1380 = vcmp.eq.s32.totalorder %v1364, 1
        %vm1381 = vcmp.eq.s32.totalorder %v1365, 1
        %v1382 = vsel %vm1366, 1, 0
        %v1383 = vsel %vm1367, 1, 0
        %v1384 = vsel %vm1368, 1, 0
        %v1385 = vsel %vm1369, 1, 0
        %v1386 = vsel %vm1370, 1, 0
        %v1387 = vsel %vm1371, 1, 0
        %v1388 = vsel %vm1372, 1, 0
        %v1389 = vsel %vm1373, 1, 0
        %v1390 = vsel %vm1374, 1, 0
        %v1391 = vsel %vm1375, 1, 0
        %v1392 = vsel %vm1376, 1, 0
        %v1393 = vsel %vm1377, 1, 0
        %v1394 = vsel %vm1378, 1, 0
        %v1395 = vsel %vm1379, 1, 0
        %v1396 = vsel %vm1380, 1, 0
        %v1397 = vsel %vm1381, 1, 0
        %vm1398 = vcmp.eq.s32.totalorder %v1382, 1
        %vm1399 = vcmp.eq.s32.totalorder %v1383, 1
        %vm1400 = vcmp.eq.s32.totalorder %v1384, 1
        %vm1401 = vcmp.eq.s32.totalorder %v1385, 1
        %vm1402 = vcmp.eq.s32.totalorder %v1386, 1
        %vm1403 = vcmp.eq.s32.totalorder %v1387, 1
        %vm1404 = vcmp.eq.s32.totalorder %v1388, 1
        %vm1405 = vcmp.eq.s32.totalorder %v1389, 1
        %vm1406 = vcmp.eq.s32.totalorder %v1390, 1
        %vm1407 = vcmp.eq.s32.totalorder %v1391, 1
        %vm1408 = vcmp.eq.s32.totalorder %v1392, 1
        %vm1409 = vcmp.eq.s32.totalorder %v1393, 1
        %vm1410 = vcmp.eq.s32.totalorder %v1394, 1
        %vm1411 = vcmp.eq.s32.totalorder %v1395, 1
        %vm1412 = vcmp.eq.s32.totalorder %v1396, 1
        %vm1413 = vcmp.eq.s32.totalorder %v1397, 1
        %v1414 = vsel %vm1398, %v1287, %v1254
        %v1415 = vsel %vm1399, %v1289, %v1255
        %v1416 = vsel %vm1400, %v1291, %v1256
        %v1417 = vsel %vm1401, %v1293, %v1257
        %v1418 = vsel %vm1402, %v1295, %v1258
        %v1419 = vsel %vm1403, %v1297, %v1259
        %v1420 = vsel %vm1404, %v1299, %v1260
        %v1421 = vsel %vm1405, %v1301, %v1261
        %v1422 = vsel %vm1406, %v1303, %v1262
        %v1423 = vsel %vm1407, %v1305, %v1263
        %v1424 = vsel %vm1408, %v1307, %v1264
        %v1425 = vsel %vm1409, %v1309, %v1265
        %v1426 = vsel %vm1410, %v1311, %v1266
        %v1427 = vsel %vm1411, %v1313, %v1267
        %v1428 = vsel %vm1412, %v1315, %v1268
        %v1429 = vsel %vm1413, %v1317, %v1269
        %1446 = vrot.lane.b32.xlu0 %v1414, 8
        %v1447 = vpop.permute.xlu0 %1446
        %1448 = vrot.lane.b32.xlu0 %v1415, 8
        %v1449 = vpop.permute.xlu0 %1448
        %1450 = vrot.lane.b32.xlu0 %v1416, 8
        %v1451 = vpop.permute.xlu0 %1450
        %1452 = vrot.lane.b32.xlu0 %v1417, 8
        %v1453 = vpop.permute.xlu0 %1452
        %1454 = vrot.lane.b32.xlu0 %v1418, 8
        %v1455 = vpop.permute.xlu0 %1454
        %1456 = vrot.lane.b32.xlu0 %v1419, 8
        %v1457 = vpop.permute.xlu0 %1456
        %1458 = vrot.lane.b32.xlu0 %v1420, 8
        %v1459 = vpop.permute.xlu0 %1458
        %1460 = vrot.lane.b32.xlu0 %v1421, 8
        %v1461 = vpop.permute.xlu0 %1460
        %1462 = vrot.lane.b32.xlu0 %v1422, 8
        %v1463 = vpop.permute.xlu0 %1462
        %1464 = vrot.lane.b32.xlu0 %v1423, 8
        %v1465 = vpop.permute.xlu0 %1464
        %1466 = vrot.lane.b32.xlu0 %v1424, 8
        %v1467 = vpop.permute.xlu0 %1466
        %1468 = vrot.lane.b32.xlu0 %v1425, 8
        %v1469 = vpop.permute.xlu0 %1468
        %1470 = vrot.lane.b32.xlu0 %v1426, 8
        %v1471 = vpop.permute.xlu0 %1470
        %1472 = vrot.lane.b32.xlu0 %v1427, 8
        %v1473 = vpop.permute.xlu0 %1472
        %1474 = vrot.lane.b32.xlu0 %v1428, 8
        %v1475 = vpop.permute.xlu0 %1474
        %1476 = vrot.lane.b32.xlu0 %v1429, 8
        %v1477 = vpop.permute.xlu0 %1476
        %v1494 = vshra.s32 %v950, 3
        %v1495 = vshra.s32 %v951, 3
        %v1496 = vshra.s32 %v952, 3
        %v1497 = vshra.s32 %v953, 3
        %v1498 = vshra.s32 %v954, 3
        %v1499 = vshra.s32 %v955, 3
        %v1500 = vshra.s32 %v956, 3
        %v1501 = vshra.s32 %v957, 3
        %v1502 = vshra.s32 %v958, 3
        %v1503 = vshra.s32 %v959, 3
        %v1504 = vshra.s32 %v960, 3
        %v1505 = vshra.s32 %v961, 3
        %v1506 = vshra.s32 %v962, 3
        %v1507 = vshra.s32 %v963, 3
        %v1508 = vshra.s32 %v964, 3
        %v1509 = vshra.s32 %v965, 3
        %v1510 = vand.u32 %v1494, 1
        %v1511 = vand.u32 %v1495, 1
        %v1512 = vand.u32 %v1496, 1
        %v1513 = vand.u32 %v1497, 1
        %v1514 = vand.u32 %v1498, 1
        %v1515 = vand.u32 %v1499, 1
        %v1516 = vand.u32 %v1500, 1
        %v1517 = vand.u32 %v1501, 1
        %v1518 = vand.u32 %v1502, 1
        %v1519 = vand.u32 %v1503, 1
        %v1520 = vand.u32 %v1504, 1
        %v1521 = vand.u32 %v1505, 1
        %v1522 = vand.u32 %v1506, 1
        %v1523 = vand.u32 %v1507, 1
        %v1524 = vand.u32 %v1508, 1
        %v1525 = vand.u32 %v1509, 1
        %vm1526 = vcmp.eq.s32.totalorder %v1510, 1
        %vm1527 = vcmp.eq.s32.totalorder %v1511, 1
        %vm1528 = vcmp.eq.s32.totalorder %v1512, 1
        %vm1529 = vcmp.eq.s32.totalorder %v1513, 1
        %vm1530 = vcmp.eq.s32.totalorder %v1514, 1
        %vm1531 = vcmp.eq.s32.totalorder %v1515, 1
        %vm1532 = vcmp.eq.s32.totalorder %v1516, 1
        %vm1533 = vcmp.eq.s32.totalorder %v1517, 1
        %vm1534 = vcmp.eq.s32.totalorder %v1518, 1
        %vm1535 = vcmp.eq.s32.totalorder %v1519, 1
        %vm1536 = vcmp.eq.s32.totalorder %v1520, 1
        %vm1537 = vcmp.eq.s32.totalorder %v1521, 1
        %vm1538 = vcmp.eq.s32.totalorder %v1522, 1
        %vm1539 = vcmp.eq.s32.totalorder %v1523, 1
        %vm1540 = vcmp.eq.s32.totalorder %v1524, 1
        %vm1541 = vcmp.eq.s32.totalorder %v1525, 1
        %v1542 = vsel %vm1526, 1, 0
        %v1543 = vsel %vm1527, 1, 0
        %v1544 = vsel %vm1528, 1, 0
        %v1545 = vsel %vm1529, 1, 0
        %v1546 = vsel %vm1530, 1, 0
        %v1547 = vsel %vm1531, 1, 0
        %v1548 = vsel %vm1532, 1, 0
        %v1549 = vsel %vm1533, 1, 0
        %v1550 = vsel %vm1534, 1, 0
        %v1551 = vsel %vm1535, 1, 0
        %v1552 = vsel %vm1536, 1, 0
        %v1553 = vsel %vm1537, 1, 0
        %v1554 = vsel %vm1538, 1, 0
        %v1555 = vsel %vm1539, 1, 0
        %v1556 = vsel %vm1540, 1, 0
        %v1557 = vsel %vm1541, 1, 0
        %vm1558 = vcmp.eq.s32.totalorder %v1542, 1
        %vm1559 = vcmp.eq.s32.totalorder %v1543, 1
        %vm1560 = vcmp.eq.s32.totalorder %v1544, 1
        %vm1561 = vcmp.eq.s32.totalorder %v1545, 1
        %vm1562 = vcmp.eq.s32.totalorder %v1546, 1
        %vm1563 = vcmp.eq.s32.totalorder %v1547, 1
        %vm1564 = vcmp.eq.s32.totalorder %v1548, 1
        %vm1565 = vcmp.eq.s32.totalorder %v1549, 1
        %vm1566 = vcmp.eq.s32.totalorder %v1550, 1
        %vm1567 = vcmp.eq.s32.totalorder %v1551, 1
        %vm1568 = vcmp.eq.s32.totalorder %v1552, 1
        %vm1569 = vcmp.eq.s32.totalorder %v1553, 1
        %vm1570 = vcmp.eq.s32.totalorder %v1554, 1
        %vm1571 = vcmp.eq.s32.totalorder %v1555, 1
        %vm1572 = vcmp.eq.s32.totalorder %v1556, 1
        %vm1573 = vcmp.eq.s32.totalorder %v1557, 1
        %v1574 = vsel %vm1558, %v1447, %v1414
        %v1575 = vsel %vm1559, %v1449, %v1415
        %v1576 = vsel %vm1560, %v1451, %v1416
        %v1577 = vsel %vm1561, %v1453, %v1417
        %v1578 = vsel %vm1562, %v1455, %v1418
        %v1579 = vsel %vm1563, %v1457, %v1419
        %v1580 = vsel %vm1564, %v1459, %v1420
        %v1581 = vsel %vm1565, %v1461, %v1421
        %v1582 = vsel %vm1566, %v1463, %v1422
        %v1583 = vsel %vm1567, %v1465, %v1423
        %v1584 = vsel %vm1568, %v1467, %v1424
        %v1585 = vsel %vm1569, %v1469, %v1425
        %v1586 = vsel %vm1570, %v1471, %v1426
        %v1587 = vsel %vm1571, %v1473, %v1427
        %v1588 = vsel %vm1572, %v1475, %v1428
        %v1589 = vsel %vm1573, %v1477, %v1429
        %1606 = vrot.lane.b32.xlu0 %v1574, 16
        %v1607 = vpop.permute.xlu0 %1606
        %1608 = vrot.lane.b32.xlu0 %v1575, 16
        %v1609 = vpop.permute.xlu0 %1608
        %1610 = vrot.lane.b32.xlu0 %v1576, 16
        %v1611 = vpop.permute.xlu0 %1610
        %1612 = vrot.lane.b32.xlu0 %v1577, 16
        %v1613 = vpop.permute.xlu0 %1612
        %1614 = vrot.lane.b32.xlu0 %v1578, 16
        %v1615 = vpop.permute.xlu0 %1614
        %1616 = vrot.lane.b32.xlu0 %v1579, 16
        %v1617 = vpop.permute.xlu0 %1616
        %1618 = vrot.lane.b32.xlu0 %v1580, 16
        %v1619 = vpop.permute.xlu0 %1618
        %1620 = vrot.lane.b32.xlu0 %v1581, 16
        %v1621 = vpop.permute.xlu0 %1620
        %1622 = vrot.lane.b32.xlu0 %v1582, 16
        %v1623 = vpop.permute.xlu0 %1622
        %1624 = vrot.lane.b32.xlu0 %v1583, 16
        %v1625 = vpop.permute.xlu0 %1624
        %1626 = vrot.lane.b32.xlu0 %v1584, 16
        %v1627 = vpop.permute.xlu0 %1626
        %1628 = vrot.lane.b32.xlu0 %v1585, 16
        %v1629 = vpop.permute.xlu0 %1628
        %1630 = vrot.lane.b32.xlu0 %v1586, 16
        %v1631 = vpop.permute.xlu0 %1630
        %1632 = vrot.lane.b32.xlu0 %v1587, 16
        %v1633 = vpop.permute.xlu0 %1632
        %1634 = vrot.lane.b32.xlu0 %v1588, 16
        %v1635 = vpop.permute.xlu0 %1634
        %1636 = vrot.lane.b32.xlu0 %v1589, 16
        %v1637 = vpop.permute.xlu0 %1636
        %v1654 = vshra.s32 %v950, 4
        %v1655 = vshra.s32 %v951, 4
        %v1656 = vshra.s32 %v952, 4
        %v1657 = vshra.s32 %v953, 4
        %v1658 = vshra.s32 %v954, 4
        %v1659 = vshra.s32 %v955, 4
        %v1660 = vshra.s32 %v956, 4
        %v1661 = vshra.s32 %v957, 4
        %v1662 = vshra.s32 %v958, 4
        %v1663 = vshra.s32 %v959, 4
        %v1664 = vshra.s32 %v960, 4
        %v1665 = vshra.s32 %v961, 4
        %v1666 = vshra.s32 %v962, 4
        %v1667 = vshra.s32 %v963, 4
        %v1668 = vshra.s32 %v964, 4
        %v1669 = vshra.s32 %v965, 4
        %v1670 = vand.u32 %v1654, 1
        %v1671 = vand.u32 %v1655, 1
        %v1672 = vand.u32 %v1656, 1
        %v1673 = vand.u32 %v1657, 1
        %v1674 = vand.u32 %v1658, 1
        %v1675 = vand.u32 %v1659, 1
        %v1676 = vand.u32 %v1660, 1
        %v1677 = vand.u32 %v1661, 1
        %v1678 = vand.u32 %v1662, 1
        %v1679 = vand.u32 %v1663, 1
        %v1680 = vand.u32 %v1664, 1
        %v1681 = vand.u32 %v1665, 1
        %v1682 = vand.u32 %v1666, 1
        %v1683 = vand.u32 %v1667, 1
        %v1684 = vand.u32 %v1668, 1
        %v1685 = vand.u32 %v1669, 1
        %vm1686 = vcmp.eq.s32.totalorder %v1670, 1
        %vm1687 = vcmp.eq.s32.totalorder %v1671, 1
        %vm1688 = vcmp.eq.s32.totalorder %v1672, 1
        %vm1689 = vcmp.eq.s32.totalorder %v1673, 1
        %vm1690 = vcmp.eq.s32.totalorder %v1674, 1
        %vm1691 = vcmp.eq.s32.totalorder %v1675, 1
        %vm1692 = vcmp.eq.s32.totalorder %v1676, 1
        %vm1693 = vcmp.eq.s32.totalorder %v1677, 1
        %vm1694 = vcmp.eq.s32.totalorder %v1678, 1
        %vm1695 = vcmp.eq.s32.totalorder %v1679, 1
        %vm1696 = vcmp.eq.s32.totalorder %v1680, 1
        %vm1697 = vcmp.eq.s32.totalorder %v1681, 1
        %vm1698 = vcmp.eq.s32.totalorder %v1682, 1
        %vm1699 = vcmp.eq.s32.totalorder %v1683, 1
        %vm1700 = vcmp.eq.s32.totalorder %v1684, 1
        %vm1701 = vcmp.eq.s32.totalorder %v1685, 1
        %v1702 = vsel %vm1686, 1, 0
        %v1703 = vsel %vm1687, 1, 0
        %v1704 = vsel %vm1688, 1, 0
        %v1705 = vsel %vm1689, 1, 0
        %v1706 = vsel %vm1690, 1, 0
        %v1707 = vsel %vm1691, 1, 0
        %v1708 = vsel %vm1692, 1, 0
        %v1709 = vsel %vm1693, 1, 0
        %v1710 = vsel %vm1694, 1, 0
        %v1711 = vsel %vm1695, 1, 0
        %v1712 = vsel %vm1696, 1, 0
        %v1713 = vsel %vm1697, 1, 0
        %v1714 = vsel %vm1698, 1, 0
        %v1715 = vsel %vm1699, 1, 0
        %v1716 = vsel %vm1700, 1, 0
        %v1717 = vsel %vm1701, 1, 0
        %vm1718 = vcmp.eq.s32.totalorder %v1702, 1
        %vm1719 = vcmp.eq.s32.totalorder %v1703, 1
        %vm1720 = vcmp.eq.s32.totalorder %v1704, 1
        %vm1721 = vcmp.eq.s32.totalorder %v1705, 1
        %vm1722 = vcmp.eq.s32.totalorder %v1706, 1
        %vm1723 = vcmp.eq.s32.totalorder %v1707, 1
        %vm1724 = vcmp.eq.s32.totalorder %v1708, 1
        %vm1725 = vcmp.eq.s32.totalorder %v1709, 1
        %vm1726 = vcmp.eq.s32.totalorder %v1710, 1
        %vm1727 = vcmp.eq.s32.totalorder %v1711, 1
        %vm1728 = vcmp.eq.s32.totalorder %v1712, 1
        %vm1729 = vcmp.eq.s32.totalorder %v1713, 1
        %vm1730 = vcmp.eq.s32.totalorder %v1714, 1
        %vm1731 = vcmp.eq.s32.totalorder %v1715, 1
        %vm1732 = vcmp.eq.s32.totalorder %v1716, 1
        %vm1733 = vcmp.eq.s32.totalorder %v1717, 1
        %v1734 = vsel %vm1718, %v1607, %v1574
        %v1735 = vsel %vm1719, %v1609, %v1575
        %v1736 = vsel %vm1720, %v1611, %v1576
        %v1737 = vsel %vm1721, %v1613, %v1577
        %v1738 = vsel %vm1722, %v1615, %v1578
        %v1739 = vsel %vm1723, %v1617, %v1579
        %v1740 = vsel %vm1724, %v1619, %v1580
        %v1741 = vsel %vm1725, %v1621, %v1581
        %v1742 = vsel %vm1726, %v1623, %v1582
        %v1743 = vsel %vm1727, %v1625, %v1583
        %v1744 = vsel %vm1728, %v1627, %v1584
        %v1745 = vsel %vm1729, %v1629, %v1585
        %v1746 = vsel %vm1730, %v1631, %v1586
        %v1747 = vsel %vm1731, %v1633, %v1587
        %v1748 = vsel %vm1732, %v1635, %v1588
        %v1749 = vsel %vm1733, %v1637, %v1589
        %1766 = vrot.lane.b32.xlu0 %v1734, 32
        %v1767 = vpop.permute.xlu0 %1766
        %1768 = vrot.lane.b32.xlu0 %v1735, 32
        %v1769 = vpop.permute.xlu0 %1768
        %1770 = vrot.lane.b32.xlu0 %v1736, 32
        %v1771 = vpop.permute.xlu0 %1770
        %1772 = vrot.lane.b32.xlu0 %v1737, 32
        %v1773 = vpop.permute.xlu0 %1772
        %1774 = vrot.lane.b32.xlu0 %v1738, 32
        %v1775 = vpop.permute.xlu0 %1774
        %1776 = vrot.lane.b32.xlu0 %v1739, 32
        %v1777 = vpop.permute.xlu0 %1776
        %1778 = vrot.lane.b32.xlu0 %v1740, 32
        %v1779 = vpop.permute.xlu0 %1778
        %1780 = vrot.lane.b32.xlu0 %v1741, 32
        %v1781 = vpop.permute.xlu0 %1780
        %1782 = vrot.lane.b32.xlu0 %v1742, 32
        %v1783 = vpop.permute.xlu0 %1782
        %1784 = vrot.lane.b32.xlu0 %v1743, 32
        %v1785 = vpop.permute.xlu0 %1784
        %1786 = vrot.lane.b32.xlu0 %v1744, 32
        %v1787 = vpop.permute.xlu0 %1786
        %1788 = vrot.lane.b32.xlu0 %v1745, 32
        %v1789 = vpop.permute.xlu0 %1788
        %1790 = vrot.lane.b32.xlu0 %v1746, 32
        %v1791 = vpop.permute.xlu0 %1790
        %1792 = vrot.lane.b32.xlu0 %v1747, 32
        %v1793 = vpop.permute.xlu0 %1792
        %1794 = vrot.lane.b32.xlu0 %v1748, 32
        %v1795 = vpop.permute.xlu0 %1794
        %1796 = vrot.lane.b32.xlu0 %v1749, 32
        %v1797 = vpop.permute.xlu0 %1796
        %v1814 = vshra.s32 %v950, 5
        %v1815 = vshra.s32 %v951, 5
        %v1816 = vshra.s32 %v952, 5
        %v1817 = vshra.s32 %v953, 5
        %v1818 = vshra.s32 %v954, 5
        %v1819 = vshra.s32 %v955, 5
        %v1820 = vshra.s32 %v956, 5
        %v1821 = vshra.s32 %v957, 5
        %v1822 = vshra.s32 %v958, 5
        %v1823 = vshra.s32 %v959, 5
        %v1824 = vshra.s32 %v960, 5
        %v1825 = vshra.s32 %v961, 5
        %v1826 = vshra.s32 %v962, 5
        %v1827 = vshra.s32 %v963, 5
        %v1828 = vshra.s32 %v964, 5
        %v1829 = vshra.s32 %v965, 5
        %v1830 = vand.u32 %v1814, 1
        %v1831 = vand.u32 %v1815, 1
        %v1832 = vand.u32 %v1816, 1
        %v1833 = vand.u32 %v1817, 1
        %v1834 = vand.u32 %v1818, 1
        %v1835 = vand.u32 %v1819, 1
        %v1836 = vand.u32 %v1820, 1
        %v1837 = vand.u32 %v1821, 1
        %v1838 = vand.u32 %v1822, 1
        %v1839 = vand.u32 %v1823, 1
        %v1840 = vand.u32 %v1824, 1
        %v1841 = vand.u32 %v1825, 1
        %v1842 = vand.u32 %v1826, 1
        %v1843 = vand.u32 %v1827, 1
        %v1844 = vand.u32 %v1828, 1
        %v1845 = vand.u32 %v1829, 1
        %vm1846 = vcmp.eq.s32.totalorder %v1830, 1
        %vm1847 = vcmp.eq.s32.totalorder %v1831, 1
        %vm1848 = vcmp.eq.s32.totalorder %v1832, 1
        %vm1849 = vcmp.eq.s32.totalorder %v1833, 1
        %vm1850 = vcmp.eq.s32.totalorder %v1834, 1
        %vm1851 = vcmp.eq.s32.totalorder %v1835, 1
        %vm1852 = vcmp.eq.s32.totalorder %v1836, 1
        %vm1853 = vcmp.eq.s32.totalorder %v1837, 1
        %vm1854 = vcmp.eq.s32.totalorder %v1838, 1
        %vm1855 = vcmp.eq.s32.totalorder %v1839, 1
        %vm1856 = vcmp.eq.s32.totalorder %v1840, 1
        %vm1857 = vcmp.eq.s32.totalorder %v1841, 1
        %vm1858 = vcmp.eq.s32.totalorder %v1842, 1
        %vm1859 = vcmp.eq.s32.totalorder %v1843, 1
        %vm1860 = vcmp.eq.s32.totalorder %v1844, 1
        %vm1861 = vcmp.eq.s32.totalorder %v1845, 1
        %v1862 = vsel %vm1846, 1, 0
        %v1863 = vsel %vm1847, 1, 0
        %v1864 = vsel %vm1848, 1, 0
        %v1865 = vsel %vm1849, 1, 0
        %v1866 = vsel %vm1850, 1, 0
        %v1867 = vsel %vm1851, 1, 0
        %v1868 = vsel %vm1852, 1, 0
        %v1869 = vsel %vm1853, 1, 0
        %v1870 = vsel %vm1854, 1, 0
        %v1871 = vsel %vm1855, 1, 0
        %v1872 = vsel %vm1856, 1, 0
        %v1873 = vsel %vm1857, 1, 0
        %v1874 = vsel %vm1858, 1, 0
        %v1875 = vsel %vm1859, 1, 0
        %v1876 = vsel %vm1860, 1, 0
        %v1877 = vsel %vm1861, 1, 0
        %vm1878 = vcmp.eq.s32.totalorder %v1862, 1
        %vm1879 = vcmp.eq.s32.totalorder %v1863, 1
        %vm1880 = vcmp.eq.s32.totalorder %v1864, 1
        %vm1881 = vcmp.eq.s32.totalorder %v1865, 1
        %vm1882 = vcmp.eq.s32.totalorder %v1866, 1
        %vm1883 = vcmp.eq.s32.totalorder %v1867, 1
        %vm1884 = vcmp.eq.s32.totalorder %v1868, 1
        %vm1885 = vcmp.eq.s32.totalorder %v1869, 1
        %vm1886 = vcmp.eq.s32.totalorder %v1870, 1
        %vm1887 = vcmp.eq.s32.totalorder %v1871, 1
        %vm1888 = vcmp.eq.s32.totalorder %v1872, 1
        %vm1889 = vcmp.eq.s32.totalorder %v1873, 1
        %vm1890 = vcmp.eq.s32.totalorder %v1874, 1
        %vm1891 = vcmp.eq.s32.totalorder %v1875, 1
        %vm1892 = vcmp.eq.s32.totalorder %v1876, 1
        %vm1893 = vcmp.eq.s32.totalorder %v1877, 1
        %v1894 = vsel %vm1878, %v1767, %v1734
        %v1895 = vsel %vm1879, %v1769, %v1735
        %v1896 = vsel %vm1880, %v1771, %v1736
        %v1897 = vsel %vm1881, %v1773, %v1737
        %v1898 = vsel %vm1882, %v1775, %v1738
        %v1899 = vsel %vm1883, %v1777, %v1739
        %v1900 = vsel %vm1884, %v1779, %v1740
        %v1901 = vsel %vm1885, %v1781, %v1741
        %v1902 = vsel %vm1886, %v1783, %v1742
        %v1903 = vsel %vm1887, %v1785, %v1743
        %v1904 = vsel %vm1888, %v1787, %v1744
        %v1905 = vsel %vm1889, %v1789, %v1745
        %v1906 = vsel %vm1890, %v1791, %v1746
        %v1907 = vsel %vm1891, %v1793, %v1747
        %v1908 = vsel %vm1892, %v1795, %v1748
        %v1909 = vsel %vm1893, %v1797, %v1749
        %1926 = vrot.lane.b32.xlu0 %v1894, 64
        %v1927 = vpop.permute.xlu0 %1926
        %1928 = vrot.lane.b32.xlu0 %v1895, 64
        %v1929 = vpop.permute.xlu0 %1928
        %1930 = vrot.lane.b32.xlu0 %v1896, 64
        %v1931 = vpop.permute.xlu0 %1930
        %1932 = vrot.lane.b32.xlu0 %v1897, 64
        %v1933 = vpop.permute.xlu0 %1932
        %1934 = vrot.lane.b32.xlu0 %v1898, 64
        %v1935 = vpop.permute.xlu0 %1934
        %1936 = vrot.lane.b32.xlu0 %v1899, 64
        %v1937 = vpop.permute.xlu0 %1936
        %1938 = vrot.lane.b32.xlu0 %v1900, 64
        %v1939 = vpop.permute.xlu0 %1938
        %1940 = vrot.lane.b32.xlu0 %v1901, 64
        %v1941 = vpop.permute.xlu0 %1940
        %1942 = vrot.lane.b32.xlu0 %v1902, 64
        %v1943 = vpop.permute.xlu0 %1942
        %1944 = vrot.lane.b32.xlu0 %v1903, 64
        %v1945 = vpop.permute.xlu0 %1944
        %1946 = vrot.lane.b32.xlu0 %v1904, 64
        %v1947 = vpop.permute.xlu0 %1946
        %1948 = vrot.lane.b32.xlu0 %v1905, 64
        %v1949 = vpop.permute.xlu0 %1948
        %1950 = vrot.lane.b32.xlu0 %v1906, 64
        %v1951 = vpop.permute.xlu0 %1950
        %1952 = vrot.lane.b32.xlu0 %v1907, 64
        %v1953 = vpop.permute.xlu0 %1952
        %1954 = vrot.lane.b32.xlu0 %v1908, 64
        %v1955 = vpop.permute.xlu0 %1954
        %1956 = vrot.lane.b32.xlu0 %v1909, 64
        %v1957 = vpop.permute.xlu0 %1956
        %v1974 = vshra.s32 %v950, 6
        %v1975 = vshra.s32 %v951, 6
        %v1976 = vshra.s32 %v952, 6
        %v1977 = vshra.s32 %v953, 6
        %v1978 = vshra.s32 %v954, 6
        %v1979 = vshra.s32 %v955, 6
        %v1980 = vshra.s32 %v956, 6
        %v1981 = vshra.s32 %v957, 6
        %v1982 = vshra.s32 %v958, 6
        %v1983 = vshra.s32 %v959, 6
        %v1984 = vshra.s32 %v960, 6
        %v1985 = vshra.s32 %v961, 6
        %v1986 = vshra.s32 %v962, 6
        %v1987 = vshra.s32 %v963, 6
        %v1988 = vshra.s32 %v964, 6
        %v1989 = vshra.s32 %v965, 6
        %v1990 = vand.u32 %v1974, 1
        %v1991 = vand.u32 %v1975, 1
        %v1992 = vand.u32 %v1976, 1
        %v1993 = vand.u32 %v1977, 1
        %v1994 = vand.u32 %v1978, 1
        %v1995 = vand.u32 %v1979, 1
        %v1996 = vand.u32 %v1980, 1
        %v1997 = vand.u32 %v1981, 1
        %v1998 = vand.u32 %v1982, 1
        %v1999 = vand.u32 %v1983, 1
        %v2000 = vand.u32 %v1984, 1
        %v2001 = vand.u32 %v1985, 1
        %v2002 = vand.u32 %v1986, 1
        %v2003 = vand.u32 %v1987, 1
        %v2004 = vand.u32 %v1988, 1
        %v2005 = vand.u32 %v1989, 1
        %vm2006 = vcmp.eq.s32.totalorder %v1990, 1
        %vm2007 = vcmp.eq.s32.totalorder %v1991, 1
        %vm2008 = vcmp.eq.s32.totalorder %v1992, 1
        %vm2009 = vcmp.eq.s32.totalorder %v1993, 1
        %vm2010 = vcmp.eq.s32.totalorder %v1994, 1
        %vm2011 = vcmp.eq.s32.totalorder %v1995, 1
        %vm2012 = vcmp.eq.s32.totalorder %v1996, 1
        %vm2013 = vcmp.eq.s32.totalorder %v1997, 1
        %vm2014 = vcmp.eq.s32.totalorder %v1998, 1
        %vm2015 = vcmp.eq.s32.totalorder %v1999, 1
        %vm2016 = vcmp.eq.s32.totalorder %v2000, 1
        %vm2017 = vcmp.eq.s32.totalorder %v2001, 1
        %vm2018 = vcmp.eq.s32.totalorder %v2002, 1
        %vm2019 = vcmp.eq.s32.totalorder %v2003, 1
        %vm2020 = vcmp.eq.s32.totalorder %v2004, 1
        %vm2021 = vcmp.eq.s32.totalorder %v2005, 1
        %v2022 = vsel %vm2006, 1, 0
        %v2023 = vsel %vm2007, 1, 0
        %v2024 = vsel %vm2008, 1, 0
        %v2025 = vsel %vm2009, 1, 0
        %v2026 = vsel %vm2010, 1, 0
        %v2027 = vsel %vm2011, 1, 0
        %v2028 = vsel %vm2012, 1, 0
        %v2029 = vsel %vm2013, 1, 0
        %v2030 = vsel %vm2014, 1, 0
        %v2031 = vsel %vm2015, 1, 0
        %v2032 = vsel %vm2016, 1, 0
        %v2033 = vsel %vm2017, 1, 0
        %v2034 = vsel %vm2018, 1, 0
        %v2035 = vsel %vm2019, 1, 0
        %v2036 = vsel %vm2020, 1, 0
        %v2037 = vsel %vm2021, 1, 0
        %vm2038 = vcmp.eq.s32.totalorder %v2022, 1
        %vm2039 = vcmp.eq.s32.totalorder %v2023, 1
        %vm2040 = vcmp.eq.s32.totalorder %v2024, 1
        %vm2041 = vcmp.eq.s32.totalorder %v2025, 1
        %vm2042 = vcmp.eq.s32.totalorder %v2026, 1
        %vm2043 = vcmp.eq.s32.totalorder %v2027, 1
        %vm2044 = vcmp.eq.s32.totalorder %v2028, 1
        %vm2045 = vcmp.eq.s32.totalorder %v2029, 1
        %vm2046 = vcmp.eq.s32.totalorder %v2030, 1
        %vm2047 = vcmp.eq.s32.totalorder %v2031, 1
        %vm2048 = vcmp.eq.s32.totalorder %v2032, 1
        %vm2049 = vcmp.eq.s32.totalorder %v2033, 1
        %vm2050 = vcmp.eq.s32.totalorder %v2034, 1
        %vm2051 = vcmp.eq.s32.totalorder %v2035, 1
        %vm2052 = vcmp.eq.s32.totalorder %v2036, 1
        %vm2053 = vcmp.eq.s32.totalorder %v2037, 1
        %v2054 = vsel %vm2038, %v1927, %v1894
        %v2055 = vsel %vm2039, %v1929, %v1895
        %v2056 = vsel %vm2040, %v1931, %v1896
        %v2057 = vsel %vm2041, %v1933, %v1897
        %v2058 = vsel %vm2042, %v1935, %v1898
        %v2059 = vsel %vm2043, %v1937, %v1899
        %v2060 = vsel %vm2044, %v1939, %v1900
        %v2061 = vsel %vm2045, %v1941, %v1901
        %v2062 = vsel %vm2046, %v1943, %v1902
        %v2063 = vsel %vm2047, %v1945, %v1903
        %v2064 = vsel %vm2048, %v1947, %v1904
        %v2065 = vsel %vm2049, %v1949, %v1905
        %v2066 = vsel %vm2050, %v1951, %v1906
        %v2067 = vsel %vm2051, %v1953, %v1907
        %v2068 = vsel %vm2052, %v1955, %v1908
        %v2069 = vsel %vm2053, %v1957, %v1909
        %vm2086 = vcmask 1046528
        %v2087 = vrot.slane %v2054, 1
        %v2088 = vrot.slane %v2055, 1
        %v2089 = vsel %vm2086, %v2087, %v2088
        %v2090 = vrot.slane %v2056, 1
        %v2091 = vsel %vm2086, %v2088, %v2090
        %v2092 = vrot.slane %v2057, 1
        %v2093 = vsel %vm2086, %v2090, %v2092
        %v2094 = vrot.slane %v2058, 1
        %v2095 = vsel %vm2086, %v2092, %v2094
        %v2096 = vrot.slane %v2059, 1
        %v2097 = vsel %vm2086, %v2094, %v2096
        %v2098 = vrot.slane %v2060, 1
        %v2099 = vsel %vm2086, %v2096, %v2098
        %v2100 = vrot.slane %v2061, 1
        %v2101 = vsel %vm2086, %v2098, %v2100
        %v2102 = vrot.slane %v2062, 1
        %v2103 = vsel %vm2086, %v2100, %v2102
        %v2104 = vrot.slane %v2063, 1
        %v2105 = vsel %vm2086, %v2102, %v2104
        %v2106 = vrot.slane %v2064, 1
        %v2107 = vsel %vm2086, %v2104, %v2106
        %v2108 = vrot.slane %v2065, 1
        %v2109 = vsel %vm2086, %v2106, %v2108
        %v2110 = vrot.slane %v2066, 1
        %v2111 = vsel %vm2086, %v2108, %v2110
        %v2112 = vrot.slane %v2067, 1
        %v2113 = vsel %vm2086, %v2110, %v2112
        %v2114 = vrot.slane %v2068, 1
        %v2115 = vsel %vm2086, %v2112, %v2114
        %v2116 = vrot.slane %v2069, 1
        %v2117 = vsel %vm2086, %v2114, %v2116
        %v2135 = vsel %vm2086, %v2116, %v2087
        %v2136 = vlaneseq
        %v2137 = vand.u32 %v2136, 127
        %v2138 = vsub.s32 %v2137, %v950
        %v2139 = vsub.s32 %v2137, %v951
        %v2140 = vsub.s32 %v2137, %v952
        %v2141 = vsub.s32 %v2137, %v953
        %v2142 = vsub.s32 %v2137, %v954
        %v2143 = vsub.s32 %v2137, %v955
        %v2144 = vsub.s32 %v2137, %v956
        %v2145 = vsub.s32 %v2137, %v957
        %v2146 = vsub.s32 %v2137, %v958
        %v2147 = vsub.s32 %v2137, %v959
        %v2148 = vsub.s32 %v2137, %v960
        %v2149 = vsub.s32 %v2137, %v961
        %v2150 = vsub.s32 %v2137, %v962
        %v2151 = vsub.s32 %v2137, %v963
        %v2152 = vsub.s32 %v2137, %v964
        %v2153 = vsub.s32 %v2137, %v965
        %vm2154 = vcmp.gt.s32.totalorder %v2138, 1
        %vm2155 = vcmp.gt.s32.totalorder %v2139, 1
        %vm2156 = vcmp.gt.s32.totalorder %v2140, 1
        %vm2157 = vcmp.gt.s32.totalorder %v2141, 1
        %vm2158 = vcmp.gt.s32.totalorder %v2142, 1
        %vm2159 = vcmp.gt.s32.totalorder %v2143, 1
        %vm2160 = vcmp.gt.s32.totalorder %v2144, 1
        %vm2161 = vcmp.gt.s32.totalorder %v2145, 1
        %vm2162 = vcmp.gt.s32.totalorder %v2146, 1
        %vm2163 = vcmp.gt.s32.totalorder %v2147, 1
        %vm2164 = vcmp.gt.s32.totalorder %v2148, 1
        %vm2165 = vcmp.gt.s32.totalorder %v2149, 1
        %vm2166 = vcmp.gt.s32.totalorder %v2150, 1
        %vm2167 = vcmp.gt.s32.totalorder %v2151, 1
        %vm2168 = vcmp.gt.s32.totalorder %v2152, 1
        %vm2169 = vcmp.gt.s32.totalorder %v2153, 1
        %vm2170 = vcmp.eq.s32.totalorder %v2138, 1
        %vm2171 = vcmp.eq.s32.totalorder %v2139, 1
        %vm2172 = vcmp.eq.s32.totalorder %v2140, 1
        %vm2173 = vcmp.eq.s32.totalorder %v2141, 1
        %vm2174 = vcmp.eq.s32.totalorder %v2142, 1
        %vm2175 = vcmp.eq.s32.totalorder %v2143, 1
        %vm2176 = vcmp.eq.s32.totalorder %v2144, 1
        %vm2177 = vcmp.eq.s32.totalorder %v2145, 1
        %vm2178 = vcmp.eq.s32.totalorder %v2146, 1
        %vm2179 = vcmp.eq.s32.totalorder %v2147, 1
        %vm2180 = vcmp.eq.s32.totalorder %v2148, 1
        %vm2181 = vcmp.eq.s32.totalorder %v2149, 1
        %vm2182 = vcmp.eq.s32.totalorder %v2150, 1
        %vm2183 = vcmp.eq.s32.totalorder %v2151, 1
        %vm2184 = vcmp.eq.s32.totalorder %v2152, 1
        %vm2185 = vcmp.eq.s32.totalorder %v2153, 1
        %v2186 = vsel %vm2170, 0.0, %v2054
        %v2187 = vsel %vm2171, 0.0, %v2055
        %v2188 = vsel %vm2172, 0.0, %v2056
        %v2189 = vsel %vm2173, 0.0, %v2057
        %v2190 = vsel %vm2174, 0.0, %v2058
        %v2191 = vsel %vm2175, 0.0, %v2059
        %v2192 = vsel %vm2176, 0.0, %v2060
        %v2193 = vsel %vm2177, 0.0, %v2061
        %v2194 = vsel %vm2178, 0.0, %v2062
        %v2195 = vsel %vm2179, 0.0, %v2063
        %v2196 = vsel %vm2180, 0.0, %v2064
        %v2197 = vsel %vm2181, 0.0, %v2065
        %v2198 = vsel %vm2182, 0.0, %v2066
        %v2199 = vsel %vm2183, 0.0, %v2067
        %v2200 = vsel %vm2184, 0.0, %v2068
        %v2201 = vsel %vm2185, 0.0, %v2069
        %v2202 = vsel %vm2154, %v2089, %v2186
        %v2203 = vsel %vm2155, %v2091, %v2187
        %v2204 = vsel %vm2156, %v2093, %v2188
        %v2205 = vsel %vm2157, %v2095, %v2189
        %v2206 = vsel %vm2158, %v2097, %v2190
        %v2207 = vsel %vm2159, %v2099, %v2191
        %v2208 = vsel %vm2160, %v2101, %v2192
        %v2209 = vsel %vm2161, %v2103, %v2193
        %v2210 = vsel %vm2162, %v2105, %v2194
        %v2211 = vsel %vm2163, %v2107, %v2195
        %v2212 = vsel %vm2164, %v2109, %v2196
        %v2213 = vsel %vm2165, %v2111, %v2197
        %v2214 = vsel %vm2166, %v2113, %v2198
        %v2215 = vsel %vm2167, %v2115, %v2199
        %v2216 = vsel %vm2168, %v2117, %v2200
        %v2217 = vsel %vm2169, %v2135, %v2201
        %2226 = vrot.lane.b32.xlu0 %v668, 96
        %v2227 = vpop.permute.xlu0 %2226
        %2228 = vrot.lane.b32.xlu0 %v669, 96
        %v2229 = vpop.permute.xlu0 %2228
        %2230 = vrot.lane.b32.xlu0 %v670, 96
        %v2231 = vpop.permute.xlu0 %2230
        %2232 = vrot.lane.b32.xlu0 %v671, 96
        %v2233 = vpop.permute.xlu0 %2232
        %2234 = vrot.lane.b32.xlu0 %v672, 96
        %v2235 = vpop.permute.xlu0 %2234
        %2236 = vrot.lane.b32.xlu0 %v673, 96
        %v2237 = vpop.permute.xlu0 %2236
        %2238 = vrot.lane.b32.xlu0 %v674, 96
        %v2239 = vpop.permute.xlu0 %2238
        %2240 = vrot.lane.b32.xlu0 %v675, 96
        %v2241 = vpop.permute.xlu0 %2240
        %v2243 = vsel %vm739, %v660, 0
        %v2246 = vsel %vm739, %v661, 0
        %v2249 = vsel %vm739, %v662, 0
        %v2252 = vsel %vm739, %v663, 0
        %v2255 = vsel %vm739, %v664, 0
        %v2258 = vsel %vm739, %v665, 0
        %v2261 = vsel %vm739, %v666, 0
        %v2264 = vsel %vm739, %v667, 0
        %v2267 = vsel %vm739, %v2227, 0
        %v2270 = vsel %vm739, %v2229, 0
        %v2273 = vsel %vm739, %v2231, 0
        %v2276 = vsel %vm739, %v2233, 0
        %v2279 = vsel %vm739, %v2235, 0
        %v2282 = vsel %vm739, %v2237, 0
        %v2285 = vsel %vm739, %v2239, 0
        %v2288 = vsel %vm739, %v2241, 0
        %2290 = vmatprep.subr.bf16.mxu0 0
        %2291 = vmatpush1.bf16.xpose.msra.mxu0 %v2267
        %2292 = vmatprep.subr.bf16.mxu0 0
        %2293 = vmatpush1.bf16.xpose.msra.mxu0 %v2270
        %2294 = vmatprep.subr.bf16.mxu0 0
        %2295 = vmatpush1.bf16.xpose.msra.mxu0 %v2273
        %2296 = vmatprep.subr.bf16.mxu0 0
        %2297 = vmatpush1.bf16.xpose.msra.mxu0 %v2276
        %2298 = vmatprep.subr.bf16.mxu0 0
        %2299 = vmatpush1.bf16.xpose.msra.mxu0 %v2279
        %2300 = vmatprep.subr.bf16.mxu0 0
        %2301 = vmatpush1.bf16.xpose.msra.mxu0 %v2282
        %2302 = vmatprep.subr.bf16.mxu0 0
        %2303 = vmatpush1.bf16.xpose.msra.mxu0 %v2285
        %2304 = vmatprep.subr.bf16.mxu0 0
        %2305 = vmatpush1.bf16.xpose.msra.mxu0 %v2288
        %2306 = vmatprep.subr.bf16.mxu0 0
        %2307 = vmatpush1.bf16.xpose.msra.mxu0 0
        %2308 = vmatprep.subr.bf16.mxu0 0
        %2309 = vmatpush1.bf16.xpose.msra.mxu0 0
        %2310 = vmatprep.subr.bf16.mxu0 0
        %2311 = vmatpush1.bf16.xpose.msra.mxu0 0
        %2312 = vmatprep.subr.bf16.mxu0 0
        %2313 = vmatpush1.bf16.xpose.msra.mxu0 0
        %2314 = vmatprep.subr.bf16.mxu0 0
        %2315 = vmatpush1.bf16.xpose.msra.mxu0 0
        %2316 = vmatprep.subr.bf16.mxu0 0
        %2317 = vmatpush1.bf16.xpose.msra.mxu0 0
        %2318 = vmatprep.subr.bf16.mxu0 0
        %2319 = vmatpush1.bf16.xpose.msra.mxu0 0
        %2320 = vmatprep.subr.bf16.mxu0 0
        %2321 = vmatpush1.bf16.xpose.msra.mxu0 0
        %2322 = vmatprep.mubr.bf16.mxu0 0
        %2323 = vmatmul.mubr.bf16.gmra.mrb[0].mxu0 %v2243
        %v2324 = vpop.f32.mrb[0].mxu0
        %v2325 = vadd.f32 %v2202, %v2324
        %v2326 = vpop.f32.mrb[0].mxu0
        %v2327 = vpop.f32.mrb[0].mxu0
        %v2328 = vadd.f32 %v2203, %v2327
        %v2329 = vpop.f32.mrb[0].mxu0
        %2330 = vmatprep.mubr.bf16.mxu0 0
        %2331 = vmatmul.mubr.bf16.gmra.mrb[0].mxu0 %v2246
        %v2332 = vpop.f32.mrb[0].mxu0
        %v2333 = vadd.f32 %v2204, %v2332
        %v2334 = vpop.f32.mrb[0].mxu0
        %v2335 = vpop.f32.mrb[0].mxu0
        %v2336 = vadd.f32 %v2205, %v2335
        %v2337 = vpop.f32.mrb[0].mxu0
        %2338 = vmatprep.mubr.bf16.mxu0 0
        %2339 = vmatmul.mubr.bf16.gmra.mrb[0].mxu0 %v2249
        %v2340 = vpop.f32.mrb[0].mxu0
        %v2341 = vadd.f32 %v2206, %v2340
        %v2342 = vpop.f32.mrb[0].mxu0
        %v2343 = vpop.f32.mrb[0].mxu0
        %v2344 = vadd.f32 %v2207, %v2343
        %v2345 = vpop.f32.mrb[0].mxu0
        %2346 = vmatprep.mubr.bf16.mxu0 0
        %2347 = vmatmul.mubr.bf16.gmra.mrb[0].mxu0 %v2252
        %v2348 = vpop.f32.mrb[0].mxu0
        %v2349 = vadd.f32 %v2208, %v2348
        %v2350 = vpop.f32.mrb[0].mxu0
        %v2351 = vpop.f32.mrb[0].mxu0
        %v2352 = vadd.f32 %v2209, %v2351
        %v2353 = vpop.f32.mrb[0].mxu0
        %2354 = vmatprep.mubr.bf16.mxu0 0
        %2355 = vmatmul.mubr.bf16.gmra.mrb[0].mxu0 %v2255
        %v2356 = vpop.f32.mrb[0].mxu0
        %v2357 = vadd.f32 %v2210, %v2356
        %v2358 = vpop.f32.mrb[0].mxu0
        %v2359 = vpop.f32.mrb[0].mxu0
        %v2360 = vadd.f32 %v2211, %v2359
        %v2361 = vpop.f32.mrb[0].mxu0
        %2362 = vmatprep.mubr.bf16.mxu0 0
        %2363 = vmatmul.mubr.bf16.gmra.mrb[0].mxu0 %v2258
        %v2364 = vpop.f32.mrb[0].mxu0
        %v2365 = vadd.f32 %v2212, %v2364
        %v2366 = vpop.f32.mrb[0].mxu0
        %v2367 = vpop.f32.mrb[0].mxu0
        %v2368 = vadd.f32 %v2213, %v2367
        %v2369 = vpop.f32.mrb[0].mxu0
        %2370 = vmatprep.mubr.bf16.mxu0 0
        %2371 = vmatmul.mubr.bf16.gmra.mrb[0].mxu0 %v2261
        %v2372 = vpop.f32.mrb[0].mxu0
        %v2373 = vadd.f32 %v2214, %v2372
        %v2374 = vpop.f32.mrb[0].mxu0
        %v2375 = vpop.f32.mrb[0].mxu0
        %v2376 = vadd.f32 %v2215, %v2375
        %v2377 = vpop.f32.mrb[0].mxu0
        %2378 = vmatprep.mubr.bf16.mxu0 0
        %2379 = vmatmul.mubr.bf16.gmra.mrb[0].mxu0 %v2264
        %v2380 = vpop.f32.mrb[0].mxu0
        %v2381 = vadd.f32 %v2216, %v2380
        %v2382 = vpop.f32.mrb[0].mxu0
        %v2383 = vpop.f32.mrb[0].mxu0
        %v2384 = vadd.f32 %v2217, %v2383
        %v2385 = vpop.f32.mrb[0].mxu0
        %2386 = vdwg.mxu0
        %v2387 = vmul.f32 %v2325, 0.17677669
        %v2388 = vmul.f32 %v2328, 0.17677669
        %v2389 = vmul.f32 %v2333, 0.17677669
        %v2390 = vmul.f32 %v2336, 0.17677669
        %v2391 = vmul.f32 %v2341, 0.17677669
        %v2392 = vmul.f32 %v2344, 0.17677669
        %v2393 = vmul.f32 %v2349, 0.17677669
        %v2394 = vmul.f32 %v2352, 0.17677669
        %v2395 = vmul.f32 %v2357, 0.17677669
        %v2396 = vmul.f32 %v2360, 0.17677669
        %v2397 = vmul.f32 %v2365, 0.17677669
        %v2398 = vmul.f32 %v2368, 0.17677669
        %v2399 = vmul.f32 %v2373, 0.17677669
        %v2400 = vmul.f32 %v2376, 0.17677669
        %v2401 = vmul.f32 %v2381, 0.17677669
        %v2402 = vmul.f32 %v2384, 0.17677669
        %v2403 = vld [vmem:[%s6] sm:$0xff]
        %v2404 = vld [vmem:[%s6 + $0x8] sm:$0xff]
        %v2405 = vld [vmem:[%s6 + $0x10] sm:$0xff]
        %v2406 = vld [vmem:[%s6 + $0x18] sm:$0xff]
        %v2407 = vld [vmem:[%s6 + $0x20] sm:$0xff]
        %v2408 = vld [vmem:[%s6 + $0x28] sm:$0xff]
        %v2409 = vld [vmem:[%s6 + $0x30] sm:$0xff]
        %v2410 = vld [vmem:[%s6 + $0x38] sm:$0xff]
        %v2411 = vld [vmem:[%s6 + $0x40] sm:$0xff]
        %v2412 = vld [vmem:[%s6 + $0x48] sm:$0xff]
        %v2413 = vld [vmem:[%s6 + $0x50] sm:$0xff]
        %v2414 = vld [vmem:[%s6 + $0x58] sm:$0xff]
        %v2415 = vld [vmem:[%s6 + $0x60] sm:$0xff]
        %v2416 = vld [vmem:[%s6 + $0x68] sm:$0xff]
        %v2417 = vld [vmem:[%s6 + $0x70] sm:$0xff]
        %v2418 = vld [vmem:[%s6 + $0x78] sm:$0xff]
        %v2419 = vadd.f32 %v2387, %v2403
        %v2420 = vadd.f32 %v2388, %v2404
        %v2421 = vadd.f32 %v2389, %v2405
        %v2422 = vadd.f32 %v2390, %v2406
        %v2423 = vadd.f32 %v2391, %v2407
        %v2424 = vadd.f32 %v2392, %v2408
        %v2425 = vadd.f32 %v2393, %v2409
        %v2426 = vadd.f32 %v2394, %v2410
        %v2427 = vadd.f32 %v2395, %v2411
        %v2428 = vadd.f32 %v2396, %v2412
        %v2429 = vadd.f32 %v2397, %v2413
        %v2430 = vadd.f32 %v2398, %v2414
        %v2431 = vadd.f32 %v2399, %v2415
        %v2432 = vadd.f32 %v2400, %v2416
        %v2433 = vadd.f32 %v2401, %v2417
        %v2434 = vadd.f32 %v2402, %v2418
        %2435 = vmax.xlane.f32.xlu0 %v2419
        %v2436 = vpop.xlane.xlu0 %2435
        %2437 = vmax.xlane.f32.xlu0 %v2420
        %v2438 = vpop.xlane.xlu0 %2437
        %2439 = vmax.xlane.f32.xlu0 %v2421
        %v2440 = vpop.xlane.xlu0 %2439
        %2441 = vmax.xlane.f32.xlu0 %v2422
        %v2442 = vpop.xlane.xlu0 %2441
        %2443 = vmax.xlane.f32.xlu0 %v2423
        %v2444 = vpop.xlane.xlu0 %2443
        %2445 = vmax.xlane.f32.xlu0 %v2424
        %v2446 = vpop.xlane.xlu0 %2445
        %2447 = vmax.xlane.f32.xlu0 %v2425
        %v2448 = vpop.xlane.xlu0 %2447
        %2449 = vmax.xlane.f32.xlu0 %v2426
        %v2450 = vpop.xlane.xlu0 %2449
        %2451 = vmax.xlane.f32.xlu0 %v2427
        %v2452 = vpop.xlane.xlu0 %2451
        %2453 = vmax.xlane.f32.xlu0 %v2428
        %v2454 = vpop.xlane.xlu0 %2453
        %2455 = vmax.xlane.f32.xlu0 %v2429
        %v2456 = vpop.xlane.xlu0 %2455
        %2457 = vmax.xlane.f32.xlu0 %v2430
        %v2458 = vpop.xlane.xlu0 %2457
        %2459 = vmax.xlane.f32.xlu0 %v2431
        %v2460 = vpop.xlane.xlu0 %2459
        %2461 = vmax.xlane.f32.xlu0 %v2432
        %v2462 = vpop.xlane.xlu0 %2461
        %2463 = vmax.xlane.f32.xlu0 %v2433
        %v2464 = vpop.xlane.xlu0 %2463
        %2465 = vmax.xlane.f32.xlu0 %v2434
        %v2466 = vpop.xlane.xlu0 %2465
        %v2467 = vsub.f32 %v2419, %v2436
        %v2468 = vsub.f32 %v2420, %v2438
        %v2469 = vsub.f32 %v2421, %v2440
        %v2470 = vsub.f32 %v2422, %v2442
        %v2471 = vsub.f32 %v2423, %v2444
        %v2472 = vsub.f32 %v2424, %v2446
        %v2473 = vsub.f32 %v2425, %v2448
        %v2474 = vsub.f32 %v2426, %v2450
        %v2475 = vsub.f32 %v2427, %v2452
        %v2476 = vsub.f32 %v2428, %v2454
        %v2477 = vsub.f32 %v2429, %v2456
        %v2478 = vsub.f32 %v2430, %v2458
        %v2479 = vsub.f32 %v2431, %v2460
        %v2480 = vsub.f32 %v2432, %v2462
        %v2481 = vsub.f32 %v2433, %v2464
        %v2482 = vsub.f32 %v2434, %v2466
        %v2483 = vmul.f32 %v2467, 1.442695
        %v2484 = vpow.pop %v2483
        %v2485 = vmul.f32 %v2468, 1.442695
        %v2486 = vpow.pop %v2485
        %v2487 = vmul.f32 %v2469, 1.442695
        %v2488 = vpow.pop %v2487
        %v2489 = vmul.f32 %v2470, 1.442695
        %v2490 = vpow.pop %v2489
        %v2491 = vmul.f32 %v2471, 1.442695
        %v2492 = vpow.pop %v2491
        %v2493 = vmul.f32 %v2472, 1.442695
        %v2494 = vpow.pop %v2493
        %v2495 = vmul.f32 %v2473, 1.442695
        %v2496 = vpow.pop %v2495
        %v2497 = vmul.f32 %v2474, 1.442695
        %v2498 = vpow.pop %v2497
        %v2499 = vmul.f32 %v2475, 1.442695
        %v2500 = vpow.pop %v2499
        %v2501 = vmul.f32 %v2476, 1.442695
        %v2502 = vpow.pop %v2501
        %v2503 = vmul.f32 %v2477, 1.442695
        %v2504 = vpow.pop %v2503
        %v2505 = vmul.f32 %v2478, 1.442695
        %v2506 = vpow.pop %v2505
        %v2507 = vmul.f32 %v2479, 1.442695
        %v2508 = vpow.pop %v2507
        %v2509 = vmul.f32 %v2480, 1.442695
        %v2510 = vpow.pop %v2509
        %v2511 = vmul.f32 %v2481, 1.442695
        %v2512 = vpow.pop %v2511
        %v2513 = vmul.f32 %v2482, 1.442695
        %v2514 = vpow.pop %v2513
        %2515 = vadd.xlane.f32.xlu0 %v2484
        %v2516 = vpop.xlane.xlu0 %2515
        %2517 = vadd.xlane.f32.xlu0 %v2486
        %v2518 = vpop.xlane.xlu0 %2517
        %2519 = vadd.xlane.f32.xlu0 %v2488
        %v2520 = vpop.xlane.xlu0 %2519
        %2521 = vadd.xlane.f32.xlu0 %v2490
        %v2522 = vpop.xlane.xlu0 %2521
        %2523 = vadd.xlane.f32.xlu0 %v2492
        %v2524 = vpop.xlane.xlu0 %2523
        %2525 = vadd.xlane.f32.xlu0 %v2494
        %v2526 = vpop.xlane.xlu0 %2525
        %2527 = vadd.xlane.f32.xlu0 %v2496
        %v2528 = vpop.xlane.xlu0 %2527
        %2529 = vadd.xlane.f32.xlu0 %v2498
        %v2530 = vpop.xlane.xlu0 %2529
        %2531 = vadd.xlane.f32.xlu0 %v2500
        %v2532 = vpop.xlane.xlu0 %2531
        %2533 = vadd.xlane.f32.xlu0 %v2502
        %v2534 = vpop.xlane.xlu0 %2533
        %2535 = vadd.xlane.f32.xlu0 %v2504
        %v2536 = vpop.xlane.xlu0 %2535
        %2537 = vadd.xlane.f32.xlu0 %v2506
        %v2538 = vpop.xlane.xlu0 %2537
        %2539 = vadd.xlane.f32.xlu0 %v2508
        %v2540 = vpop.xlane.xlu0 %2539
        %2541 = vadd.xlane.f32.xlu0 %v2510
        %v2542 = vpop.xlane.xlu0 %2541
        %2543 = vadd.xlane.f32.xlu0 %v2512
        %v2544 = vpop.xlane.xlu0 %2543
        %2545 = vadd.xlane.f32.xlu0 %v2514
        %v2546 = vpop.xlane.xlu0 %2545
        %v2547 = vrcp.pop %v2516
        %v2548 = vmul.f32 1.0, %v2547
        %v2549 = vrcp.pop %v2518
        %v2550 = vmul.f32 1.0, %v2549
        %v2551 = vrcp.pop %v2520
        %v2552 = vmul.f32 1.0, %v2551
        %v2553 = vrcp.pop %v2522
        %v2554 = vmul.f32 1.0, %v2553
        %v2555 = vrcp.pop %v2524
        %v2556 = vmul.f32 1.0, %v2555
        %v2557 = vrcp.pop %v2526
        %v2558 = vmul.f32 1.0, %v2557
        %v2559 = vrcp.pop %v2528
        %v2560 = vmul.f32 1.0, %v2559
        %v2561 = vrcp.pop %v2530
        %v2562 = vmul.f32 1.0, %v2561
        %v2563 = vrcp.pop %v2532
        %v2564 = vmul.f32 1.0, %v2563
        %v2565 = vrcp.pop %v2534
        %v2566 = vmul.f32 1.0, %v2565
        %v2567 = vrcp.pop %v2536
        %v2568 = vmul.f32 1.0, %v2567
        %v2569 = vrcp.pop %v2538
        %v2570 = vmul.f32 1.0, %v2569
        %v2571 = vrcp.pop %v2540
        %v2572 = vmul.f32 1.0, %v2571
        %v2573 = vrcp.pop %v2542
        %v2574 = vmul.f32 1.0, %v2573
        %v2575 = vrcp.pop %v2544
        %v2576 = vmul.f32 1.0, %v2575
        %v2577 = vrcp.pop %v2546
        %v2578 = vmul.f32 1.0, %v2577
        %v2579 = vmul.f32 %v2484, %v2548
        %v2580 = vmul.f32 %v2486, %v2550
        %v2581 = vmul.f32 %v2488, %v2552
        %v2582 = vmul.f32 %v2490, %v2554
        %v2583 = vmul.f32 %v2492, %v2556
        %v2584 = vmul.f32 %v2494, %v2558
        %v2585 = vmul.f32 %v2496, %v2560
        %v2586 = vmul.f32 %v2498, %v2562
        %v2587 = vmul.f32 %v2500, %v2564
        %v2588 = vmul.f32 %v2502, %v2566
        %v2589 = vmul.f32 %v2504, %v2568
        %v2590 = vmul.f32 %v2506, %v2570
        %v2591 = vmul.f32 %v2508, %v2572
        %v2592 = vmul.f32 %v2510, %v2574
        %v2593 = vmul.f32 %v2512, %v2576
        %v2594 = vmul.f32 %v2514, %v2578
        %v2595 = vpack.c.bf16 %v2580, %v2579
        %v2596 = vpack.c.bf16 %v2582, %v2581
        %v2597 = vpack.c.bf16 %v2584, %v2583
        %v2598 = vpack.c.bf16 %v2586, %v2585
        %v2599 = vpack.c.bf16 %v2588, %v2587
        %v2600 = vpack.c.bf16 %v2590, %v2589
        %v2601 = vpack.c.bf16 %v2592, %v2591
        %v2602 = vpack.c.bf16 %v2594, %v2593
        %2603 = vrot.lane.b32.xlu0 %v668, 64
        %v2604 = vpop.permute.xlu0 %2603
        %2605 = vrot.lane.b32.xlu0 %v669, 64
        %v2606 = vpop.permute.xlu0 %2605
        %2607 = vrot.lane.b32.xlu0 %v670, 64
        %v2608 = vpop.permute.xlu0 %2607
        %2609 = vrot.lane.b32.xlu0 %v671, 64
        %v2610 = vpop.permute.xlu0 %2609
        %2611 = vrot.lane.b32.xlu0 %v672, 64
        %v2612 = vpop.permute.xlu0 %2611
        %2613 = vrot.lane.b32.xlu0 %v673, 64
        %v2614 = vpop.permute.xlu0 %2613
        %2615 = vrot.lane.b32.xlu0 %v674, 64
        %v2616 = vpop.permute.xlu0 %2615
        %2617 = vrot.lane.b32.xlu0 %v675, 64
        %v2618 = vpop.permute.xlu0 %2617
        %2627 = vmatprep.subr.bf16.mxu0 0
        %2628 = vmatpush1.bf16.msra.mxu0 %v2604
        %2629 = vmatprep.subr.bf16.mxu0 0
        %2630 = vmatpush1.bf16.msra.mxu0 %v2606
        %2631 = vmatprep.subr.bf16.mxu0 0
        %2632 = vmatpush1.bf16.msra.mxu0 %v2608
        %2633 = vmatprep.subr.bf16.mxu0 0
        %2634 = vmatpush1.bf16.msra.mxu0 %v2610
        %2635 = vmatprep.subr.bf16.mxu0 0
        %2636 = vmatpush1.bf16.msra.mxu0 %v2612
        %2637 = vmatprep.subr.bf16.mxu0 0
        %2638 = vmatpush1.bf16.msra.mxu0 %v2614
        %2639 = vmatprep.subr.bf16.mxu0 0
        %2640 = vmatpush1.bf16.msra.mxu0 %v2616
        %2641 = vmatprep.subr.bf16.mxu0 0
        %2642 = vmatpush1.bf16.msra.mxu0 %v2618
        %2643 = vmatprep.subr.bf16.mxu0 0
        %2644 = vmatpush1.bf16.msra.mxu0 0
        %2645 = vmatprep.subr.bf16.mxu0 0
        %2646 = vmatpush1.bf16.msra.mxu0 0
        %2647 = vmatprep.subr.bf16.mxu0 0
        %2648 = vmatpush1.bf16.msra.mxu0 0
        %2649 = vmatprep.subr.bf16.mxu0 0
        %2650 = vmatpush1.bf16.msra.mxu0 0
        %2651 = vmatprep.subr.bf16.mxu0 0
        %2652 = vmatpush1.bf16.msra.mxu0 0
        %2653 = vmatprep.subr.bf16.mxu0 0
        %2654 = vmatpush1.bf16.msra.mxu0 0
        %2655 = vmatprep.subr.bf16.mxu0 0
        %2656 = vmatpush1.bf16.msra.mxu0 0
        %2657 = vmatprep.subr.bf16.mxu0 0
        %2658 = vmatpush1.bf16.msra.mxu0 0
        %2659 = vmatprep.mubr.bf16.mxu0 0
        %2660 = vmatmul.mubr.bf16.gmra.mrb[0].mxu0 %v2595
        %v2661 = vpop.f32.mrb[0].mxu0
        %v2662 = vadd.f32 0.0, %v2661
        %v2663 = vpop.f32.mrb[0].mxu0
        %v2664 = vpop.f32.mrb[0].mxu0
        %v2665 = vadd.f32 0.0, %v2664
        %v2666 = vpop.f32.mrb[0].mxu0
        %2667 = vmatprep.mubr.bf16.mxu0 0
        %2668 = vmatmul.mubr.bf16.gmra.mrb[0].mxu0 %v2596
        %v2669 = vpop.f32.mrb[0].mxu0
        %v2670 = vadd.f32 0.0, %v2669
        %v2671 = vpop.f32.mrb[0].mxu0
        %v2672 = vpop.f32.mrb[0].mxu0
        %v2673 = vadd.f32 0.0, %v2672
        %v2674 = vpop.f32.mrb[0].mxu0
        %2675 = vmatprep.mubr.bf16.mxu0 0
        %2676 = vmatmul.mubr.bf16.gmra.mrb[0].mxu0 %v2597
        %v2677 = vpop.f32.mrb[0].mxu0
        %v2678 = vadd.f32 0.0, %v2677
        %v2679 = vpop.f32.mrb[0].mxu0
        %v2680 = vpop.f32.mrb[0].mxu0
        %v2681 = vadd.f32 0.0, %v2680
        %v2682 = vpop.f32.mrb[0].mxu0
        %2683 = vmatprep.mubr.bf16.mxu0 0
        %2684 = vmatmul.mubr.bf16.gmra.mrb[0].mxu0 %v2598
        %v2685 = vpop.f32.mrb[0].mxu0
        %v2686 = vadd.f32 0.0, %v2685
        %v2687 = vpop.f32.mrb[0].mxu0
        %v2688 = vpop.f32.mrb[0].mxu0
        %v2689 = vadd.f32 0.0, %v2688
        %v2690 = vpop.f32.mrb[0].mxu0
        %2691 = vmatprep.mubr.bf16.mxu0 0
        %2692 = vmatmul.mubr.bf16.gmra.mrb[0].mxu0 %v2599
        %v2693 = vpop.f32.mrb[0].mxu0
        %v2694 = vadd.f32 0.0, %v2693
        %v2695 = vpop.f32.mrb[0].mxu0
        %v2696 = vpop.f32.mrb[0].mxu0
        %v2697 = vadd.f32 0.0, %v2696
        %v2698 = vpop.f32.mrb[0].mxu0
        %2699 = vmatprep.mubr.bf16.mxu0 0
        %2700 = vmatmul.mubr.bf16.gmra.mrb[0].mxu0 %v2600
        %v2701 = vpop.f32.mrb[0].mxu0
        %v2702 = vadd.f32 0.0, %v2701
        %v2703 = vpop.f32.mrb[0].mxu0
        %v2704 = vpop.f32.mrb[0].mxu0
        %v2705 = vadd.f32 0.0, %v2704
        %v2706 = vpop.f32.mrb[0].mxu0
        %2707 = vmatprep.mubr.bf16.mxu0 0
        %2708 = vmatmul.mubr.bf16.gmra.mrb[0].mxu0 %v2601
        %v2709 = vpop.f32.mrb[0].mxu0
        %v2710 = vadd.f32 0.0, %v2709
        %v2711 = vpop.f32.mrb[0].mxu0
        %v2712 = vpop.f32.mrb[0].mxu0
        %v2713 = vadd.f32 0.0, %v2712
        %v2714 = vpop.f32.mrb[0].mxu0
        %2715 = vmatprep.mubr.bf16.mxu0 0
        %2716 = vmatmul.mubr.bf16.gmra.mrb[0].mxu0 %v2602
        %v2717 = vpop.f32.mrb[0].mxu0
        %v2718 = vadd.f32 0.0, %v2717
        %v2719 = vpop.f32.mrb[0].mxu0
        %v2720 = vpop.f32.mrb[0].mxu0
        %v2721 = vadd.f32 0.0, %v2720
        %v2722 = vpop.f32.mrb[0].mxu0
        %2723 = vdwg.mxu0
        %v2724 = vld [vmem:[#allocation2] sm:$0xff]
        %v2725 = vld [vmem:[#allocation2 + $0x8] sm:$0xff]
        %v2726 = vld [vmem:[#allocation2 + $0x10] sm:$0xff]
        %v2727 = vld [vmem:[#allocation2 + $0x18] sm:$0xff]
        %v2728 = vld [vmem:[#allocation2 + $0x20] sm:$0xff]
        %v2729 = vld [vmem:[#allocation2 + $0x28] sm:$0xff]
        %v2730 = vld [vmem:[#allocation2 + $0x30] sm:$0xff]
        %v2731 = vld [vmem:[#allocation2 + $0x38] sm:$0xff]
        %v2732 = vld [vmem:[#allocation2 + $0x40] sm:$0xff]
        %v2733 = vld [vmem:[#allocation2 + $0x48] sm:$0xff]
        %v2734 = vld [vmem:[#allocation2 + $0x50] sm:$0xff]
        %v2735 = vld [vmem:[#allocation2 + $0x58] sm:$0xff]
        %v2736 = vld [vmem:[#allocation2 + $0x60] sm:$0xff]
        %v2737 = vld [vmem:[#allocation2 + $0x68] sm:$0xff]
        %v2738 = vld [vmem:[#allocation2 + $0x70] sm:$0xff]
        %v2739 = vld [vmem:[#allocation2 + $0x78] sm:$0xff]
        %v2740 = vpack.c.bf16 %v2665, %v2662
        %v2741 = vpack.c.bf16 %v2673, %v2670
        %v2742 = vpack.c.bf16 %v2681, %v2678
        %v2743 = vpack.c.bf16 %v2689, %v2686
        %v2744 = vpack.c.bf16 %v2697, %v2694
        %v2745 = vpack.c.bf16 %v2705, %v2702
        %v2746 = vpack.c.bf16 %v2713, %v2710
        %v2747 = vpack.c.bf16 %v2721, %v2718
        %v2748 = vld [vmem:[%s419] sm:$0xf]
        %v2749 = vld [vmem:[%s419 + $0x4] sm:$0xf]
        %v2750 = vld [vmem:[%s419 + $0x8] sm:$0xf]
        %v2751 = vld [vmem:[%s419 + $0xc] sm:$0xf]
        %v2756 = vunpack.c.l.b16 %v2748
        %v2757 = vunpack.c.l.b16 %v2749
        %v2758 = vunpack.c.l.b16 %v2750
        %v2759 = vunpack.c.l.b16 %v2751
        %v2760 = vpack.c.b16 %v2757, %v2756
        %v2761 = vpack.c.b16 %v2759, %v2758
        %v2765 = vsel %vm739, %v2740, 0
        %v2768 = vsel %vm739, %v2741, 0
        %v2771 = vsel %vm739, %v2742, 0
        %v2774 = vsel %vm739, %v2743, 0
        %v2777 = vsel %vm739, %v2744, 0
        %v2780 = vsel %vm739, %v2745, 0
        %v2783 = vsel %vm739, %v2746, 0
        %v2786 = vsel %vm739, %v2747, 0
        %2788 = vmatprep.subr.bf16.mxu0 0
        %2789 = vmatpush1.bf16.msra.mxu0 %v2760
        %2790 = vmatprep.subr.bf16.mxu0 0
        %2791 = vmatpush1.bf16.msra.mxu0 %v2761
        %2792 = vmatprep.subr.bf16.mxu0 0
        %2793 = vmatpush1.bf16.msra.mxu0 0
        %2794 = vmatprep.subr.bf16.mxu0 0
        %2795 = vmatpush1.bf16.msra.mxu0 0
        %2796 = vmatprep.subr.bf16.mxu0 0
        %2797 = vmatpush1.bf16.msra.mxu0 0
        %2798 = vmatprep.subr.bf16.mxu0 0
        %2799 = vmatpush1.bf16.msra.mxu0 0
        %2800 = vmatprep.subr.bf16.mxu0 0
        %2801 = vmatpush1.bf16.msra.mxu0 0
        %2802 = vmatprep.subr.bf16.mxu0 0
        %2803 = vmatpush1.bf16.msra.mxu0 0
        %2804 = vmatprep.subr.bf16.mxu0 0
        %2805 = vmatpush1.bf16.msra.mxu0 0
        %2806 = vmatprep.subr.bf16.mxu0 0
        %2807 = vmatpush1.bf16.msra.mxu0 0
        %2808 = vmatprep.subr.bf16.mxu0 0
        %2809 = vmatpush1.bf16.msra.mxu0 0
        %2810 = vmatprep.subr.bf16.mxu0 0
        %2811 = vmatpush1.bf16.msra.mxu0 0
        %2812 = vmatprep.subr.bf16.mxu0 0
        %2813 = vmatpush1.bf16.msra.mxu0 0
        %2814 = vmatprep.subr.bf16.mxu0 0
        %2815 = vmatpush1.bf16.msra.mxu0 0
        %2816 = vmatprep.subr.bf16.mxu0 0
        %2817 = vmatpush1.bf16.msra.mxu0 0
        %2818 = vmatprep.subr.bf16.mxu0 0
        %2819 = vmatpush1.bf16.msra.mxu0 0
        %2820 = vmatprep.mubr.bf16.mxu0 0
        %2821 = vmatmul.mubr.bf16.gmra.mrb[0].mxu0 %v2765
        %v2822 = vpop.f32.mrb[0].mxu0
        %v2823 = vadd.f32 0.0, %v2822
        %v2824 = vpop.f32.mrb[0].mxu0
        %v2825 = vpop.f32.mrb[0].mxu0
        %v2826 = vadd.f32 0.0, %v2825
        %v2827 = vpop.f32.mrb[0].mxu0
        %2828 = vmatprep.mubr.bf16.mxu0 0
        %2829 = vmatmul.mubr.bf16.gmra.mrb[0].mxu0 %v2768
        %v2830 = vpop.f32.mrb[0].mxu0
        %v2831 = vadd.f32 0.0, %v2830
        %v2832 = vpop.f32.mrb[0].mxu0
        %v2833 = vpop.f32.mrb[0].mxu0
        %v2834 = vadd.f32 0.0, %v2833
        %v2835 = vpop.f32.mrb[0].mxu0
        %2836 = vmatprep.mubr.bf16.mxu0 0
        %2837 = vmatmul.mubr.bf16.gmra.mrb[0].mxu0 %v2771
        %v2838 = vpop.f32.mrb[0].mxu0
        %v2839 = vadd.f32 0.0, %v2838
        %v2840 = vpop.f32.mrb[0].mxu0
        %v2841 = vpop.f32.mrb[0].mxu0
        %v2842 = vadd.f32 0.0, %v2841
        %v2843 = vpop.f32.mrb[0].mxu0
        %2844 = vmatprep.mubr.bf16.mxu0 0
        %2845 = vmatmul.mubr.bf16.gmra.mrb[0].mxu0 %v2774
        %v2846 = vpop.f32.mrb[0].mxu0
        %v2847 = vadd.f32 0.0, %v2846
        %v2848 = vpop.f32.mrb[0].mxu0
        %v2849 = vpop.f32.mrb[0].mxu0
        %v2850 = vadd.f32 0.0, %v2849
        %v2851 = vpop.f32.mrb[0].mxu0
        %2852 = vmatprep.mubr.bf16.mxu0 0
        %2853 = vmatmul.mubr.bf16.gmra.mrb[0].mxu0 %v2777
        %v2854 = vpop.f32.mrb[0].mxu0
        %v2855 = vadd.f32 0.0, %v2854
        %v2856 = vpop.f32.mrb[0].mxu0
        %v2857 = vpop.f32.mrb[0].mxu0
        %v2858 = vadd.f32 0.0, %v2857
        %v2859 = vpop.f32.mrb[0].mxu0
        %2860 = vmatprep.mubr.bf16.mxu0 0
        %2861 = vmatmul.mubr.bf16.gmra.mrb[0].mxu0 %v2780
        %v2862 = vpop.f32.mrb[0].mxu0
        %v2863 = vadd.f32 0.0, %v2862
        %v2864 = vpop.f32.mrb[0].mxu0
        %v2865 = vpop.f32.mrb[0].mxu0
        %v2866 = vadd.f32 0.0, %v2865
        %v2867 = vpop.f32.mrb[0].mxu0
        %2868 = vmatprep.mubr.bf16.mxu0 0
        %2869 = vmatmul.mubr.bf16.gmra.mrb[0].mxu0 %v2783
        %v2870 = vpop.f32.mrb[0].mxu0
        %v2871 = vadd.f32 0.0, %v2870
        %v2872 = vpop.f32.mrb[0].mxu0
        %v2873 = vpop.f32.mrb[0].mxu0
        %v2874 = vadd.f32 0.0, %v2873
        %v2875 = vpop.f32.mrb[0].mxu0
        %2876 = vmatprep.mubr.bf16.mxu0 0
        %2877 = vmatmul.mubr.bf16.gmra.mrb[0].mxu0 %v2786
        %v2878 = vpop.f32.mrb[0].mxu0
        %v2879 = vadd.f32 0.0, %v2878
        %v2880 = vpop.f32.mrb[0].mxu0
        %v2881 = vpop.f32.mrb[0].mxu0
        %v2882 = vadd.f32 0.0, %v2881
        %v2883 = vpop.f32.mrb[0].mxu0
        %2884 = vdwg.mxu0
        %v2885 = vadd.f32 %v2724, %v2823
        %v2886 = vadd.f32 %v2725, %v2826
        %v2887 = vadd.f32 %v2726, %v2831
        %v2888 = vadd.f32 %v2727, %v2834
        %v2889 = vadd.f32 %v2728, %v2839
        %v2890 = vadd.f32 %v2729, %v2842
        %v2891 = vadd.f32 %v2730, %v2847
        %v2892 = vadd.f32 %v2731, %v2850
        %v2893 = vadd.f32 %v2732, %v2855
        %v2894 = vadd.f32 %v2733, %v2858
        %v2895 = vadd.f32 %v2734, %v2863
        %v2896 = vadd.f32 %v2735, %v2866
        %v2897 = vadd.f32 %v2736, %v2871
        %v2898 = vadd.f32 %v2737, %v2874
        %v2899 = vadd.f32 %v2738, %v2879
        %v2900 = vadd.f32 %v2739, %v2882
        %2901 = vst [vmem:[#allocation2] sm:$0xff] %v2885
        %2902 = vst [vmem:[#allocation2 + $0x8] sm:$0xff] %v2886
        %2903 = vst [vmem:[#allocation2 + $0x10] sm:$0xff] %v2887
        %2904 = vst [vmem:[#allocation2 + $0x18] sm:$0xff] %v2888
        %2905 = vst [vmem:[#allocation2 + $0x20] sm:$0xff] %v2889
        %2906 = vst [vmem:[#allocation2 + $0x28] sm:$0xff] %v2890
        %2907 = vst [vmem:[#allocation2 + $0x30] sm:$0xff] %v2891
        %2908 = vst [vmem:[#allocation2 + $0x38] sm:$0xff] %v2892
        %2909 = vst [vmem:[#allocation2 + $0x40] sm:$0xff] %v2893
        %2910 = vst [vmem:[#allocation2 + $0x48] sm:$0xff] %v2894
        %2911 = vst [vmem:[#allocation2 + $0x50] sm:$0xff] %v2895
        %2912 = vst [vmem:[#allocation2 + $0x58] sm:$0xff] %v2896
        %2913 = vst [vmem:[#allocation2 + $0x60] sm:$0xff] %v2897
        %2914 = vst [vmem:[#allocation2 + $0x68] sm:$0xff] %v2898
        %2915 = vst [vmem:[#allocation2 + $0x70] sm:$0xff] %v2899
        %2916 = vst [vmem:[#allocation2 + $0x78] sm:$0xff] %v2900
        %p2917 = scmp.eq.s32.totalorder %s28, 3
        // Predicated region
        $region61: #{tpu_custom_call.1} parent=55 // pred_check
          %p2918 = pneg %p2917
        $region62: #{tpu_custom_call.1} parent=55 // pred_check_branch
          %2920 = sbr.rel (%p2918) target = $region64
        $region63: #{tpu_custom_call.1} parent=55 // pred_region
          %v2921 = vld [vmem:[#allocation2] sm:$0xff]
          %v2922 = vld [vmem:[#allocation2 + $0x8] sm:$0xff]
          %v2923 = vld [vmem:[#allocation2 + $0x10] sm:$0xff]
          %v2924 = vld [vmem:[#allocation2 + $0x18] sm:$0xff]
          %v2925 = vld [vmem:[#allocation2 + $0x20] sm:$0xff]
          %v2926 = vld [vmem:[#allocation2 + $0x28] sm:$0xff]
          %v2927 = vld [vmem:[#allocation2 + $0x30] sm:$0xff]
          %v2928 = vld [vmem:[#allocation2 + $0x38] sm:$0xff]
          %v2929 = vld [vmem:[#allocation2 + $0x40] sm:$0xff]
          %v2930 = vld [vmem:[#allocation2 + $0x48] sm:$0xff]
          %v2931 = vld [vmem:[#allocation2 + $0x50] sm:$0xff]
          %v2932 = vld [vmem:[#allocation2 + $0x58] sm:$0xff]
          %v2933 = vld [vmem:[#allocation2 + $0x60] sm:$0xff]
          %v2934 = vld [vmem:[#allocation2 + $0x68] sm:$0xff]
          %v2935 = vld [vmem:[#allocation2 + $0x70] sm:$0xff]
          %v2936 = vld [vmem:[#allocation2 + $0x78] sm:$0xff]
          %v2937 = vadd.f32 %v2921, %v452
          %v2938 = vadd.f32 %v2922, %v453
          %v2939 = vadd.f32 %v2923, %v454
          %v2940 = vadd.f32 %v2924, %v455
          %v2941 = vadd.f32 %v2925, %v456
          %v2942 = vadd.f32 %v2926, %v457
          %v2943 = vadd.f32 %v2927, %v458
          %v2944 = vadd.f32 %v2928, %v459
          %v2945 = vadd.f32 %v2929, %v460
          %v2946 = vadd.f32 %v2930, %v461
          %v2947 = vadd.f32 %v2931, %v462
          %v2948 = vadd.f32 %v2932, %v463
          %v2949 = vadd.f32 %v2933, %v464
          %v2950 = vadd.f32 %v2934, %v465
          %v2951 = vadd.f32 %v2935, %v466
          %v2952 = vadd.f32 %v2936, %v467
          %2953 = vadd.xlane.f32.xlu0 %v2937
          %v2954 = vpop.xlane.xlu0 %2953
          %2955 = vadd.xlane.f32.xlu0 %v2938
          %v2956 = vpop.xlane.xlu0 %2955
          %2957 = vadd.xlane.f32.xlu0 %v2939
          %v2958 = vpop.xlane.xlu0 %2957
          %2959 = vadd.xlane.f32.xlu0 %v2940
          %v2960 = vpop.xlane.xlu0 %2959
          %2961 = vadd.xlane.f32.xlu0 %v2941
          %v2962 = vpop.xlane.xlu0 %2961
          %2963 = vadd.xlane.f32.xlu0 %v2942
          %v2964 = vpop.xlane.xlu0 %2963
          %2965 = vadd.xlane.f32.xlu0 %v2943
          %v2966 = vpop.xlane.xlu0 %2965
          %2967 = vadd.xlane.f32.xlu0 %v2944
          %v2968 = vpop.xlane.xlu0 %2967
          %2969 = vadd.xlane.f32.xlu0 %v2945
          %v2970 = vpop.xlane.xlu0 %2969
          %2971 = vadd.xlane.f32.xlu0 %v2946
          %v2972 = vpop.xlane.xlu0 %2971
          %2973 = vadd.xlane.f32.xlu0 %v2947
          %v2974 = vpop.xlane.xlu0 %2973
          %2975 = vadd.xlane.f32.xlu0 %v2948
          %v2976 = vpop.xlane.xlu0 %2975
          %2977 = vadd.xlane.f32.xlu0 %v2949
          %v2978 = vpop.xlane.xlu0 %2977
          %2979 = vadd.xlane.f32.xlu0 %v2950
          %v2980 = vpop.xlane.xlu0 %2979
          %2981 = vadd.xlane.f32.xlu0 %v2951
          %v2982 = vpop.xlane.xlu0 %2981
          %2983 = vadd.xlane.f32.xlu0 %v2952
          %v2984 = vpop.xlane.xlu0 %2983
          %v2985 = vrcp.pop 128.0
          %v2986 = vmul.f32 %v2954, %v2985
          %v2987 = vmul.f32 %v2956, %v2985
          %v2988 = vmul.f32 %v2958, %v2985
          %v2989 = vmul.f32 %v2960, %v2985
          %v2990 = vmul.f32 %v2962, %v2985
          %v2991 = vmul.f32 %v2964, %v2985
          %v2992 = vmul.f32 %v2966, %v2985
          %v2993 = vmul.f32 %v2968, %v2985
          %v2994 = vmul.f32 %v2970, %v2985
          %v2995 = vmul.f32 %v2972, %v2985
          %v2996 = vmul.f32 %v2974, %v2985
          %v2997 = vmul.f32 %v2976, %v2985
          %v2998 = vmul.f32 %v2978, %v2985
          %v2999 = vmul.f32 %v2980, %v2985
          %v3000 = vmul.f32 %v2982, %v2985
          %v3001 = vmul.f32 %v2984, %v2985
          %v3002 = vsub.f32 %v2937, %v2986
          %v3003 = vsub.f32 %v2938, %v2987
          %v3004 = vsub.f32 %v2939, %v2988
          %v3005 = vsub.f32 %v2940, %v2989
          %v3006 = vsub.f32 %v2941, %v2990
          %v3007 = vsub.f32 %v2942, %v2991
          %v3008 = vsub.f32 %v2943, %v2992
          %v3009 = vsub.f32 %v2944, %v2993
          %v3010 = vsub.f32 %v2945, %v2994
          %v3011 = vsub.f32 %v2946, %v2995
          %v3012 = vsub.f32 %v2947, %v2996
          %v3013 = vsub.f32 %v2948, %v2997
          %v3014 = vsub.f32 %v2949, %v2998
          %v3015 = vsub.f32 %v2950, %v2999
          %v3016 = vsub.f32 %v2951, %v3000
          %v3017 = vsub.f32 %v2952, %v3001
          %v3018 = vmul.f32 %v3002, %v3002
          %v3019 = vmul.f32 %v3003, %v3003
          %v3020 = vmul.f32 %v3004, %v3004
          %v3021 = vmul.f32 %v3005, %v3005
          %v3022 = vmul.f32 %v3006, %v3006
          %v3023 = vmul.f32 %v3007, %v3007
          %v3024 = vmul.f32 %v3008, %v3008
          %v3025 = vmul.f32 %v3009, %v3009
          %v3026 = vmul.f32 %v3010, %v3010
          %v3027 = vmul.f32 %v3011, %v3011
          %v3028 = vmul.f32 %v3012, %v3012
          %v3029 = vmul.f32 %v3013, %v3013
          %v3030 = vmul.f32 %v3014, %v3014
          %v3031 = vmul.f32 %v3015, %v3015
          %v3032 = vmul.f32 %v3016, %v3016
          %v3033 = vmul.f32 %v3017, %v3017
          %3034 = vadd.xlane.f32.xlu0 %v3018
          %v3035 = vpop.xlane.xlu0 %3034
          %3036 = vadd.xlane.f32.xlu0 %v3019
          %v3037 = vpop.xlane.xlu0 %3036
          %3038 = vadd.xlane.f32.xlu0 %v3020
          %v3039 = vpop.xlane.xlu0 %3038
          %3040 = vadd.xlane.f32.xlu0 %v3021
          %v3041 = vpop.xlane.xlu0 %3040
          %3042 = vadd.xlane.f32.xlu0 %v3022
          %v3043 = vpop.xlane.xlu0 %3042
          %3044 = vadd.xlane.f32.xlu0 %v3023
          %v3045 = vpop.xlane.xlu0 %3044
          %3046 = vadd.xlane.f32.xlu0 %v3024
          %v3047 = vpop.xlane.xlu0 %3046
          %3048 = vadd.xlane.f32.xlu0 %v3025
          %v3049 = vpop.xlane.xlu0 %3048
          %3050 = vadd.xlane.f32.xlu0 %v3026
          %v3051 = vpop.xlane.xlu0 %3050
          %3052 = vadd.xlane.f32.xlu0 %v3027
          %v3053 = vpop.xlane.xlu0 %3052
          %3054 = vadd.xlane.f32.xlu0 %v3028
          %v3055 = vpop.xlane.xlu0 %3054
          %3056 = vadd.xlane.f32.xlu0 %v3029
          %v3057 = vpop.xlane.xlu0 %3056
          %3058 = vadd.xlane.f32.xlu0 %v3030
          %v3059 = vpop.xlane.xlu0 %3058
          %3060 = vadd.xlane.f32.xlu0 %v3031
          %v3061 = vpop.xlane.xlu0 %3060
          %3062 = vadd.xlane.f32.xlu0 %v3032
          %v3063 = vpop.xlane.xlu0 %3062
          %3064 = vadd.xlane.f32.xlu0 %v3033
          %v3065 = vpop.xlane.xlu0 %3064
          %v3066 = vmul.f32 %v3035, %v2985
          %v3067 = vmul.f32 %v3037, %v2985
          %v3068 = vmul.f32 %v3039, %v2985
          %v3069 = vmul.f32 %v3041, %v2985
          %v3070 = vmul.f32 %v3043, %v2985
          %v3071 = vmul.f32 %v3045, %v2985
          %v3072 = vmul.f32 %v3047, %v2985
          %v3073 = vmul.f32 %v3049, %v2985
          %v3074 = vmul.f32 %v3051, %v2985
          %v3075 = vmul.f32 %v3053, %v2985
          %v3076 = vmul.f32 %v3055, %v2985
          %v3077 = vmul.f32 %v3057, %v2985
          %v3078 = vmul.f32 %v3059, %v2985
          %v3079 = vmul.f32 %v3061, %v2985
          %v3080 = vmul.f32 %v3063, %v2985
          %v3081 = vmul.f32 %v3065, %v2985
          %v3082 = vadd.f32 %v3066, 1e-05
          %v3083 = vadd.f32 %v3067, 1e-05
          %v3084 = vadd.f32 %v3068, 1e-05
          %v3085 = vadd.f32 %v3069, 1e-05
          %v3086 = vadd.f32 %v3070, 1e-05
          %v3087 = vadd.f32 %v3071, 1e-05
          %v3088 = vadd.f32 %v3072, 1e-05
          %v3089 = vadd.f32 %v3073, 1e-05
          %v3090 = vadd.f32 %v3074, 1e-05
          %v3091 = vadd.f32 %v3075, 1e-05
          %v3092 = vadd.f32 %v3076, 1e-05
          %v3093 = vadd.f32 %v3077, 1e-05
          %v3094 = vadd.f32 %v3078, 1e-05
          %v3095 = vadd.f32 %v3079, 1e-05
          %v3096 = vadd.f32 %v3080, 1e-05
          %v3097 = vadd.f32 %v3081, 1e-05
          %v3098 = vrsqrt.pop %v3082
          %v3099 = vrsqrt.pop %v3083
          %v3100 = vrsqrt.pop %v3084
          %v3101 = vrsqrt.pop %v3085
          %v3102 = vrsqrt.pop %v3086
          %v3103 = vrsqrt.pop %v3087
          %v3104 = vrsqrt.pop %v3088
          %v3105 = vrsqrt.pop %v3089
          %v3106 = vrsqrt.pop %v3090
          %v3107 = vrsqrt.pop %v3091
          %v3108 = vrsqrt.pop %v3092
          %v3109 = vrsqrt.pop %v3093
          %v3110 = vrsqrt.pop %v3094
          %v3111 = vrsqrt.pop %v3095
          %v3112 = vrsqrt.pop %v3096
          %v3113 = vrsqrt.pop %v3097
          %v3114 = vmul.f32 %v3002, %v3098
          %v3115 = vmul.f32 %v3003, %v3099
          %v3116 = vmul.f32 %v3004, %v3100
          %v3117 = vmul.f32 %v3005, %v3101
          %v3118 = vmul.f32 %v3006, %v3102
          %v3119 = vmul.f32 %v3007, %v3103
          %v3120 = vmul.f32 %v3008, %v3104
          %v3121 = vmul.f32 %v3009, %v3105
          %v3122 = vmul.f32 %v3010, %v3106
          %v3123 = vmul.f32 %v3011, %v3107
          %v3124 = vmul.f32 %v3012, %v3108
          %v3125 = vmul.f32 %v3013, %v3109
          %v3126 = vmul.f32 %v3014, %v3110
          %v3127 = vmul.f32 %v3015, %v3111
          %v3128 = vmul.f32 %v3016, %v3112
          %v3129 = vmul.f32 %v3017, %v3113
          %v3130 = vld [vmem:[%s7] sm:$0x1]
          %v3132 = vlaneseq
          %v3133 = vshrl.u32 %v3132, 7
          %v3134 = vsub.s32 0, %v3133
          %v3135 = vrot.slane %v3130, %v3134
          %v3137 = vmul.f32 %v3114, %v3135
          %v3138 = vmul.f32 %v3115, %v3135
          %v3139 = vmul.f32 %v3116, %v3135
          %v3140 = vmul.f32 %v3117, %v3135
          %v3141 = vmul.f32 %v3118, %v3135
          %v3142 = vmul.f32 %v3119, %v3135
          %v3143 = vmul.f32 %v3120, %v3135
          %v3144 = vmul.f32 %v3121, %v3135
          %v3145 = vmul.f32 %v3122, %v3135
          %v3146 = vmul.f32 %v3123, %v3135
          %v3147 = vmul.f32 %v3124, %v3135
          %v3148 = vmul.f32 %v3125, %v3135
          %v3149 = vmul.f32 %v3126, %v3135
          %v3150 = vmul.f32 %v3127, %v3135
          %v3151 = vmul.f32 %v3128, %v3135
          %v3152 = vmul.f32 %v3129, %v3135
          %v3153 = vld [vmem:[%s8] sm:$0x1]
          %v3155 = vlaneseq
          %v3156 = vshrl.u32 %v3155, 7
          %v3157 = vsub.s32 0, %v3156
          %v3158 = vrot.slane %v3153, %v3157
          %v3160 = vadd.f32 %v3137, %v3158
          %v3161 = vadd.f32 %v3138, %v3158
          %v3162 = vadd.f32 %v3139, %v3158
          %v3163 = vadd.f32 %v3140, %v3158
          %v3164 = vadd.f32 %v3141, %v3158
          %v3165 = vadd.f32 %v3142, %v3158
          %v3166 = vadd.f32 %v3143, %v3158
          %v3167 = vadd.f32 %v3144, %v3158
          %v3168 = vadd.f32 %v3145, %v3158
          %v3169 = vadd.f32 %v3146, %v3158
          %v3170 = vadd.f32 %v3147, %v3158
          %v3171 = vadd.f32 %v3148, %v3158
          %v3172 = vadd.f32 %v3149, %v3158
          %v3173 = vadd.f32 %v3150, %v3158
          %v3174 = vadd.f32 %v3151, %v3158
          %v3175 = vadd.f32 %v3152, %v3158
          %3176 = vst [vmem:[%s404] sm:$0xff] %v3160
          %3177 = vst [vmem:[%s404 + $0x8] sm:$0xff] %v3161
          %3178 = vst [vmem:[%s404 + $0x10] sm:$0xff] %v3162
          %3179 = vst [vmem:[%s404 + $0x18] sm:$0xff] %v3163
          %3180 = vst [vmem:[%s404 + $0x20] sm:$0xff] %v3164
          %3181 = vst [vmem:[%s404 + $0x28] sm:$0xff] %v3165
          %3182 = vst [vmem:[%s404 + $0x30] sm:$0xff] %v3166
          %3183 = vst [vmem:[%s404 + $0x38] sm:$0xff] %v3167
          %3184 = vst [vmem:[%s404 + $0x40] sm:$0xff] %v3168
          %3185 = vst [vmem:[%s404 + $0x48] sm:$0xff] %v3169
          %3186 = vst [vmem:[%s404 + $0x50] sm:$0xff] %v3170
          %3187 = vst [vmem:[%s404 + $0x58] sm:$0xff] %v3171
          %3188 = vst [vmem:[%s404 + $0x60] sm:$0xff] %v3172
          %3189 = vst [vmem:[%s404 + $0x68] sm:$0xff] %v3173
          %3190 = vst [vmem:[%s404 + $0x70] sm:$0xff] %v3174
          %3191 = vst [vmem:[%s404 + $0x78] sm:$0xff] %v3175
        $region64: #{tpu_custom_call.1} parent=55 // pred_fallthru
          _
        %s3192 = sand.u32 %s262, 1
        %s3193 = scalar_lea.sflag [#allocation4], %s3192
        %s3194 = sand.u32 %s262, 1
        %s3195 = smul.addr %s3194, 128
        %s3196 = scalar_lea.vmem [#allocation3], %s3195
        // Predicated region
        $region65: #{tpu_custom_call.1} parent=55 // pred_check
          %p3197 = pneg %p272
        $region66: #{tpu_custom_call.1} parent=55 // pred_check_branch
          %3199 = sbr.rel (%p3197) target = $region68
        $region67: #{tpu_custom_call.1} parent=55 // pred_region
          %s3201 = ssub.s32 2048, 2048
          %3202 = vsyncadd %s3193, %s3201
          %s3203 = smul.addr %s27, 16
          %s3204 = smul.addr %s3203, 128
          %s3205 = scalar_lea.hbm %s9, %s3204
          %s3206 = sshll.u32 %s3196, 4
          %s3207 = int_to_ptr.vmem [resolvable:$true] %s3206
          %3212 = dma.vmem_to_hbm [thread:$0]  %s3207, 2048, %s3205, %s3193, 128, 128, 8
        $region68: #{tpu_custom_call.1} parent=55 // pred_fallthru
          _
      $region56: #{tpu_custom_call.1} parent=5 // pred_fallthru
        _
      %p3213 = scmp.le.s32.totalorder 2, %s18
      // Predicated region
      $region69: #{tpu_custom_call.1} parent=5 // pred_check
        %p3214 = pneg %p3213
      $region70: #{tpu_custom_call.1} parent=5 // pred_check_branch
        %3216 = sbr.rel (%p3214) target = $region72
      $region71: #{tpu_custom_call.1} parent=5 // pred_region
        %s3217 = ssub.s32 %s18, 2
        // Predicated region
        $region73: #{tpu_custom_call.1} parent=71 // pred_check
          %p3218 = pneg %p278
        $region74: #{tpu_custom_call.1} parent=71 // pred_check_branch
          %3220 = sbr.rel (%p3218) target = $region76
        $region75: #{tpu_custom_call.1} parent=71 // pred_region
          %s3221 = sand.u32 %s263, 1
          %s3222 = scalar_lea.sflag [#allocation4], %s3221
          %s3223 = sand.u32 %s263, 1
          %s3224 = smul.addr %s3223, 128
          %s3225 = scalar_lea.vmem [#allocation3], %s3224
          %3226 = dma.done %s3222, 2048
        $region76: #{tpu_custom_call.1} parent=71 // pred_fallthru
          _
      $region72: #{tpu_custom_call.1} parent=5 // pred_fallthru
        _
    $region6: #{tpu_custom_call.1} parent=1 // loop_footer
      %s22 = sadd.s32 1, %s18
    $region7: #{tpu_custom_call.1} parent=1 // loop_footer_branch
      %17 = sbr.rel target = $region3
    $region8: #{tpu_custom_call.1} parent=1 // loop_exit
      _
    %3227 = vsyncpa [#allocation4], 1
    %s3228 = scalar_lea.sflag [#allocation4], 1
    %3229 = vsyncpa %s3228, 1

</llo_original>
